<compile_context>
chip_gen: v5e
topology: v5e:2x2
jax: 0.10.0
libtpu: 0.0.40
codegen_flags: <defaults>
</compile_context>

<pallas_src>
import functools
import math

import jax
import jax.numpy as jnp
from jax import lax
from jax.experimental import pallas as pl
from jax.experimental.pallas import tpu as pltpu


MATMUL_DTYPE = jnp.bfloat16              # MXU operand dtype (f32 accumulation)
VMEM_BLOCK_BUDGET = 40 * 1024 * 1024     # block budget -> valid on v7x (64 MiB)
VMEM_LIMIT_BYTES = 48 * 1024 * 1024


def _round_up(x, m):
    return ((x + m - 1) // m) * m


def _pad_gates(m, hs, HP):
    """Pad the trailing 4*hs gate axis to 4*HP, zero-padding each gate block."""
    m = m.astype(jnp.float32)
    if HP == hs:
        return m
    pad_width = [(0, 0)] * (m.ndim - 1) + [(0, HP - hs)]
    parts = [jnp.pad(m[..., k * hs:(k + 1) * hs], pad_width) for k in range(4)]
    return jnp.concatenate(parts, axis=-1)


def _pick_t_chunk(seq, BPG, ninput, HP, budget=VMEM_BLOCK_BUDGET):
    """Largest t_chunk (divisor of seq, capped for vreg pressure) whose
    double-buffered blocks + resident weights + scratch fit the VMEM budget."""
    def est(t):
        return (2 * t * BPG * ninput * 2        # x blocks (bf16, 2 buffers)
                + 2 * t * BPG * HP * 4          # hidden-out blocks (f32, 2 buffers)
                + t * BPG * 4 * HP * 4          # per-chunk xg scratch (f32)
                + 2 * ninput * 4 * HP * 2       # W (bf16)
                + 2 * HP * 4 * HP * 2           # U (bf16, resident)
                + 2 * 4 * HP * 4                # B
                + 4 * BPG * HP * 4)             # h/c scratch (+ h0/c0)
    best = 1
    for t in range(1, min(seq, 16) + 1):        # cap unroll (vreg pressure)
        if seq % t == 0 and est(t) <= budget:
            best = t
    return best


# -----------------------------------------------------------------------------
# Recurrence kernel with fused per-chunk input projection.
# Grid = (batch_groups ["parallel"], time_chunks ["arbitrary"]).
# h/c state lives in VMEM scratch, re-initialized at chunk 0 of each group.
# -----------------------------------------------------------------------------
def _lstm_chunk_kernel(*refs, has_state):
    if has_state:
        (x_ref, w_ref, b_ref, u_ref, h0_ref, c0_ref,
         out_ref, hT_ref, cT_ref, xg_scr, h_scr, c_scr) = refs
    else:
        (x_ref, w_ref, b_ref, u_ref,
         out_ref, hT_ref, cT_ref, xg_scr, h_scr, c_scr) = refs

    ci = pl.program_id(1)                 # time-chunk index (sequential axis)

    @pl.when(ci == 0)
    def _():
        if has_state:
            h_scr[...] = h0_ref[...]
            c_scr[...] = c0_ref[...]
        else:
            h_scr[...] = jnp.zeros_like(h_scr)
            c_scr[...] = jnp.zeros_like(c_scr)

    T = x_ref.shape[0]                    # timesteps in this chunk (static)
    HP = h_scr.shape[-1]                  # padded hidden size (multiple of 128)

    # ---- Fused phase 1: this chunk's x@W + B, hoisted off the serial path ----
    # Independent per-timestep dots -> MXU can pipeline them back-to-back; the
    # result stays in VMEM scratch (no HBM round-trip for the gate activations).
    def xproj(t, carry):
        xg_scr[t] = (jnp.dot(x_ref[t], w_ref[...],
                             preferred_element_type=jnp.float32)
                     + b_ref[...])
        return carry

    lax.fori_loop(0, T, xproj, 0, unroll=True)

    # ---- Phase 2: serial recurrence (only h@U remains on the critical path) ----
    def step(t, carry):
        gates = xg_scr[t] + jnp.dot(h_scr[...].astype(MATMUL_DTYPE), u_ref[...],
                                    preferred_element_type=jnp.float32)
        # One EUP stream for the three sigmoid gates (slices stay 128-aligned).
        sig = jax.nn.sigmoid(gates[:, :3 * HP])
        i_t = sig[:, 0 * HP:1 * HP]
        f_t = sig[:, 1 * HP:2 * HP]
        o_t = sig[:, 2 * HP:3 * HP]
        g_t = jnp.tanh(gates[:, 3 * HP:4 * HP])
        c_new = f_t * c_scr[...] + i_t * g_t
        h_new = o_t * jnp.tanh(c_new)
        c_scr[...] = c_new
        h_scr[...] = h_new
        out_ref[t] = h_new
        return carry

    lax.fori_loop(0, T, step, 0, unroll=True)

    # Final-state outputs are only materialized on the last chunk of the group.
    @pl.when(ci == pl.num_programs(1) - 1)
    def _():
        hT_ref[...] = h_scr[...]
        cT_ref[...] = c_scr[...]


def lstm_forward(x, W, U, B, state=None):
    """x: (seq, batch, ninput) -> (padded hidden seq, (h_T, c_T), HP)."""
    seq, batch, ninput = x.shape
    hs = U.shape[0]
    HP = max(128, _round_up(hs, 128))
    BP = _round_up(max(batch, 8), 8)      # sublane-pad batch (denser MXU rows)

    # Per-gate zero-padding (padded hidden lanes stay exactly 0); bf16 weights.
    W_pad = _pad_gates(jnp.asarray(W, jnp.float32), hs, HP).astype(MATMUL_DTYPE)
    U_full = jnp.pad(jnp.asarray(U, jnp.float32), ((0, HP - hs), (0, 0)))
    U_pad = _pad_gates(U_full, hs, HP).astype(MATMUL_DTYPE)
    B_pad = _pad_gates(jnp.asarray(B, jnp.float32).reshape(1, 4 * hs), hs, HP)

    x_pad = jnp.pad(x.astype(MATMUL_DTYPE),
                    ((0, 0), (0, BP - batch), (0, 0)))        # (seq, BP, ninput)

    # Split the batch across 2 TensorCores (v7x) only when each group keeps a
    # bf16-dense sublane block; single group otherwise (v5e/v6e unaffected).
    n_bg = 2 if BP % 32 == 0 else 1
    BPG = BP // n_bg

    t_chunk = _pick_t_chunk(seq, BPG, ninput, HP)
    grid = (n_bg, seq // t_chunk)

    has_state = state is not None
    kernel = functools.partial(_lstm_chunk_kernel, has_state=has_state)

    in_specs = [
        pl.BlockSpec((t_chunk, BPG, ninput), lambda g, c: (c, g, 0)),
        pl.BlockSpec((ninput, 4 * HP), lambda g, c: (0, 0)),
        pl.BlockSpec((1, 4 * HP), lambda g, c: (0, 0)),
        pl.BlockSpec((HP, 4 * HP), lambda g, c: (0, 0)),
    ]
    args = [x_pad, W_pad, B_pad, U_pad]
    if has_state:
        h0 = jnp.pad(jnp.asarray(state[0], jnp.float32),
                     ((0, BP - batch), (0, HP - hs)))
        c0 = jnp.pad(jnp.asarray(state[1], jnp.float32),
                     ((0, BP - batch), (0, HP - hs)))
        in_specs += [pl.BlockSpec((BPG, HP), lambda g, c: (g, 0)),
                     pl.BlockSpec((BPG, HP), lambda g, c: (g, 0))]
        args += [h0, c0]

    hidden, h_T, c_T = pl.pallas_call(
        kernel,
        out_shape=(
            jax.ShapeDtypeStruct((seq, BP, HP), jnp.float32),
            jax.ShapeDtypeStruct((BP, HP), jnp.float32),
            jax.ShapeDtypeStruct((BP, HP), jnp.float32),
        ),
        grid_spec=pltpu.PrefetchScalarGridSpec(
            num_scalar_prefetch=0,
            grid=grid,
            in_specs=in_specs,
            out_specs=[
                pl.BlockSpec((t_chunk, BPG, HP), lambda g, c: (c, g, 0)),
                pl.BlockSpec((BPG, HP), lambda g, c: (g, 0)),
                pl.BlockSpec((BPG, HP), lambda g, c: (g, 0)),
            ],
            scratch_shapes=[
                pltpu.VMEM((t_chunk, BPG, 4 * HP), jnp.float32),  # per-chunk xg
                pltpu.VMEM((BPG, HP), jnp.float32),               # h state
                pltpu.VMEM((BPG, HP), jnp.float32),               # c state
            ],
        ),
        compiler_params=pltpu.CompilerParams(
            dimension_semantics=("parallel", "arbitrary"),
            vmem_limit_bytes=VMEM_LIMIT_BYTES),
    )(*args)
    return hidden, (h_T[:batch, :hs], c_T[:batch, :hs]), HP


# -----------------------------------------------------------------------------
# Decoder (Linear nhid -> nvoc).  Vocab axis is the OUTER grid dim so the
# (HP x NV) weight streams from HBM exactly once; rows padded to a fixed tile.
# -----------------------------------------------------------------------------
def _decoder_kernel(h_ref, w_ref, b_ref, out_ref):
    out_ref[...] = (
        jnp.dot(h_ref[...].astype(MATMUL_DTYPE), w_ref[...],
                preferred_element_type=jnp.float32)
        + b_ref[...])


def decoder_forward(h_flat, W_dec_t, b_dec, HP):
    n = h_flat.shape[0]
    nhid, nvoc = W_dec_t.shape
    NV = _round_up(nvoc, 128)
    # Zero rows for padded hidden lanes, zero columns for padded vocab.
    W_pad = jnp.pad(jnp.asarray(W_dec_t, jnp.float32),
                    ((0, HP - nhid), (0, NV - nvoc))).astype(MATMUL_DTYPE)
    b_pad = jnp.pad(jnp.asarray(b_dec, jnp.float32), (0, NV - nvoc)).reshape(1, NV)

    TN = 256 if NV % 256 == 0 else 128
    TM = 256 if n > 256 else _round_up(n, 8)
    n_pad = _round_up(n, TM)
    h_pad = jnp.pad(h_flat.astype(jnp.float32), ((0, n_pad - n), (0, 0)))

    out = pl.pallas_call(
        _decoder_kernel,
        out_shape=jax.ShapeDtypeStruct((n_pad, NV), jnp.float32),
        grid_spec=pltpu.PrefetchScalarGridSpec(
            num_scalar_prefetch=0,
            grid=(NV // TN, n_pad // TM),       # vocab OUTER -> W streamed once
            in_specs=[
                pl.BlockSpec((TM, HP), lambda j, i: (i, 0)),
                pl.BlockSpec((HP, TN), lambda j, i: (0, j)),
                pl.BlockSpec((1, TN), lambda j, i: (0, j)),
            ],
            out_specs=pl.BlockSpec((TM, TN), lambda j, i: (i, j)),
        ),
        compiler_params=pltpu.CompilerParams(
            dimension_semantics=("parallel", "parallel")),
    )(h_pad, W_pad, b_pad)
    return out[:n, :nvoc]


# -----------------------------------------------------------------------------
# Full RNN (model='lstm') forward.
# -----------------------------------------------------------------------------
def rnn_forward(tokens, state, params):
    # Embedding gather is data-dependent glue; done in plain JAX/XLA.
    # TODO(synk): for repeated eval, fold W into the embedding (nvoc x 4HP table)
    # so the input projection becomes a pure gather amortized across calls.
    embeddings = params["embed"][tokens]            # (seq, batch, ninput)
    # Dropout -> identity (eval mode).
    hidden_pad, (h_T, c_T), HP = lstm_forward(
        embeddings, params["W"], params["U"], params["B"], state)
    seq, batch = tokens.shape
    h_flat = hidden_pad[:, :batch, :].reshape(seq * batch, HP)
    decoded = decoder_forward(h_flat, params["W_dec_t"], params["b_dec"], HP)
    nvoc = decoded.shape[-1]
    return decoded.reshape(seq, batch, nvoc), (h_T, c_T)


# -----------------------------------------------------------------------------
# Deterministic parameter init (mirrors the module's init_weights).
# -----------------------------------------------------------------------------
def init_params(key, nvoc, ninput, nhid):
    ks = jax.random.split(key, 5)
    u_lstm = 1.0 / math.sqrt(nhid)
    return {
        "embed":  jax.random.uniform(ks[0], (nvoc, ninput), jnp.float32, -0.1, 0.1),
        "W":      jax.random.uniform(ks[1], (ninput, 4 * nhid), jnp.float32, -u_lstm, u_lstm),
        "U":      jax.random.uniform(ks[2], (nhid, 4 * nhid), jnp.float32, -u_lstm, u_lstm),
        "B":      jax.random.uniform(ks[3], (4 * nhid,), jnp.float32, -u_lstm, u_lstm),
        # nn.Linear stores (out, in); we keep the transposed (in, out) matrix.
        "W_dec_t": jax.random.uniform(ks[4], (nvoc, nhid), jnp.float32, -0.1, 0.1).T,
        "b_dec":   jnp.zeros((nvoc,), jnp.float32),
    }


# Pure-JAX reference (f32 math) for the correctness check.
def rnn_reference(tokens, params, state=None):
    emb = params["embed"][tokens].astype(jnp.float32)
    seq, batch, _ = emb.shape
    nhid = params["U"].shape[0]
    if state is None:
        h = jnp.zeros((batch, nhid), jnp.float32)
        c = jnp.zeros((batch, nhid), jnp.float32)
    else:
        h, c = state
    outs = []
    for t in range(seq):
        gates = emb[t] @ params["W"] + h @ params["U"] + params["B"]
        i = jax.nn.sigmoid(gates[:, :nhid])
        f = jax.nn.sigmoid(gates[:, nhid:2 * nhid])
        o = jax.nn.sigmoid(gates[:, 2 * nhid:3 * nhid])
        g = jnp.tanh(gates[:, 3 * nhid:])
        c = f * c + i * g
        h = o * jnp.tanh(c)
        outs.append(h)
    hid = jnp.stack(outs, axis=0)
    dec = hid.reshape(seq * batch, nhid) @ params["W_dec_t"] + params["b_dec"]
    return dec.reshape(seq, batch, -1), (h, c)


if __name__ == "__main__":
    nvoc, ninput, nhid = 50, 16, 32
    seq, batch = 8, 4

    key = jax.random.PRNGKey(0)
    pkey, tkey, tkey2 = jax.random.split(key, 3)
    params = init_params(pkey, nvoc, ninput, nhid)
    tokens = jax.random.randint(tkey, (seq, batch), 0, nvoc, dtype=jnp.int32)

    decoded, (h_T, c_T) = rnn_forward(tokens, None, params)
    jax.block_until_ready((decoded, h_T, c_T))

    # Reference uses the same bf16 rounding of matmul operands the kernel feeds
    # to the MXU (accumulation is f32 in both), so tolerances stay tight.
    def _q(p):
        return p.astype(jnp.bfloat16).astype(jnp.float32)

    params_q = dict(params)
    for name in ("embed", "W", "U", "W_dec_t"):
        params_q[name] = _q(params[name])

    ref_dec, (ref_h, ref_c) = rnn_reference(tokens, params_q, None)
    assert decoded.shape == (seq, batch, nvoc)
    assert h_T.shape == (batch, nhid) and c_T.shape == (batch, nhid)
    assert jnp.allclose(decoded, ref_dec, atol=1e-2, rtol=1e-2)
    assert jnp.allclose(h_T, ref_h, atol=5e-3, rtol=5e-3)
    assert jnp.allclose(c_T, ref_c, atol=5e-3, rtol=5e-3)

    # Second segment reuses the returned state (exercises the has_state path).
    tokens2 = jax.random.randint(tkey2, (seq, batch), 0, nvoc, dtype=jnp.int32)
    decoded2, state2 = rnn_forward(tokens2, (h_T, c_T), params)
    jax.block_until_ready((decoded2,) + tuple(state2))
    ref_dec2, _ = rnn_reference(tokens2, params_q, (ref_h, ref_c))
    assert jnp.allclose(decoded2, ref_dec2, atol=2e-2, rtol=2e-2)

    print("KERNEL_OK")
</pallas_src>

<mosaic_0001>
module attributes {stable_mosaic.version = 11 : i64} {
  func.func @_lstm_chunk_kernel(%arg0: i32, %arg1: i32, %arg2: memref<8x8x16xbf16, #tpu.memory_space<vmem>>, %arg3: memref<16x512xbf16, #tpu.memory_space<vmem>>, %arg4: memref<1x512xf32, #tpu.memory_space<vmem>>, %arg5: memref<128x512xbf16, #tpu.memory_space<vmem>>, %arg6: memref<8x8x128xf32, #tpu.memory_space<vmem>>, %arg7: memref<8x128xf32, #tpu.memory_space<vmem>>, %arg8: memref<8x128xf32, #tpu.memory_space<vmem>>, %arg9: memref<8x8x512xf32, #tpu.memory_space<vmem>>, %arg10: memref<8x128xf32, #tpu.memory_space<vmem>>, %arg11: memref<8x128xf32, #tpu.memory_space<vmem>>) attributes {dimension_semantics = [#tpu.dimension_semantics<parallel>, #tpu.dimension_semantics<arbitrary>], iteration_bounds = array<i64: 1, 1>, scalar_prefetch = 0 : i64, scratch_operands = 3 : i64, tpu.core_type = #tpu.core_type<tc>, window_params = [{transform_indices = @transform_0, window_bounds = array<i64: 8, 8, 16>}, {pipeline_mode = #tpu.pipeline_mode<synchronous>, transform_indices = @transform_1, window_bounds = array<i64: 16, 512>}, {pipeline_mode = #tpu.pipeline_mode<synchronous>, transform_indices = @transform_2, window_bounds = array<i64: 1, 512>}, {pipeline_mode = #tpu.pipeline_mode<synchronous>, transform_indices = @transform_3, window_bounds = array<i64: 128, 512>}, {transform_indices = @transform_4, window_bounds = array<i64: 8, 8, 128>}, {transform_indices = @transform_5, window_bounds = array<i64: 8, 128>}, {transform_indices = @transform_6, window_bounds = array<i64: 8, 128>}]} {
    %c0_i32 = arith.constant 0 : i32
    %0 = arith.cmpi eq, %arg1, %c0_i32 : i32
    %1 = arith.extui %0 : i1 to i32
    %c0_i32_0 = arith.constant 0 : i32
    %2 = arith.cmpi ne, %1, %c0_i32_0 : i32
    scf.if %2 {
      %cst_211 = arith.constant 0.000000e+00 : f32
      %350 = vector.broadcast %cst_211 : f32 to vector<8x128xf32>
      %c0_212 = arith.constant 0 : index
      %c0_213 = arith.constant 0 : index
      %351 = vector.load %arg10[%c0_212, %c0_213] : memref<8x128xf32, #tpu.memory_space<vmem>>, vector<8x128xf32>
      tpu.vector_store %arg10[%c0_212, %c0_213], %350 {strides = array<i32>} : memref<8x128xf32, #tpu.memory_space<vmem>>, vector<8x128xf32>,
      %cst_214 = arith.constant 0.000000e+00 : f32
      %352 = vector.broadcast %cst_214 : f32 to vector<8x128xf32>
      %c0_215 = arith.constant 0 : index
      %c0_216 = arith.constant 0 : index
      %353 = vector.load %arg11[%c0_215, %c0_216] : memref<8x128xf32, #tpu.memory_space<vmem>>, vector<8x128xf32>
      tpu.vector_store %arg11[%c0_215, %c0_216], %352 {strides = array<i32>} : memref<8x128xf32, #tpu.memory_space<vmem>>, vector<8x128xf32>,
    } else {
    }
    %c0_i32_1 = arith.constant 0 : i32
    %3 = arith.index_cast %c0_i32_1 : i32 to index
    %c0 = arith.constant 0 : index
    %c0_2 = arith.constant 0 : index
    %4 = vector.load %arg2[%3, %c0, %c0_2] : memref<8x8x16xbf16, #tpu.memory_space<vmem>>, vector<1x8x16xbf16>
    %5 = vector.shape_cast %4 : vector<1x8x16xbf16> to vector<8x16xbf16>
    %c0_3 = arith.constant 0 : index
    %c0_4 = arith.constant 0 : index
    %6 = vector.load %arg3[%c0_3, %c0_4] : memref<16x512xbf16, #tpu.memory_space<vmem>>, vector<16x512xbf16>
    %cst = arith.constant dense<0.000000e+00> : vector<8x512xf32>
    %7 = tpu.matmul %5, %6, %cst {dimension_numbers = #tpu.dot_dimension_numbers<[1], [0], [0], [1], [0, 0, 1, 1], [], []>} : vector<8x16xbf16>, vector<16x512xbf16>, vector<8x512xf32> -> vector<8x512xf32>
    %c0_5 = arith.constant 0 : index
    %c0_6 = arith.constant 0 : index
    %8 = vector.load %arg4[%c0_5, %c0_6] : memref<1x512xf32, #tpu.memory_space<vmem>>, vector<1x512xf32>
    %9 = vector.broadcast %8 : vector<1x512xf32> to vector<8x512xf32>
    %10 = arith.addf %7, %9 : vector<8x512xf32>
    %11 = arith.index_cast %c0_i32_1 : i32 to index
    %c0_7 = arith.constant 0 : index
    %c0_8 = arith.constant 0 : index
    %12 = vector.load %arg9[%11, %c0_7, %c0_8] : memref<8x8x512xf32, #tpu.memory_space<vmem>>, vector<1x8x512xf32>
    %13 = vector.shape_cast %12 : vector<1x8x512xf32> to vector<8x512xf32>
    %14 = vector.shape_cast %10 : vector<8x512xf32> to vector<1x8x512xf32>
    tpu.vector_store %arg9[%11, %c0_7, %c0_8], %14 {strides = array<i32>} : memref<8x8x512xf32, #tpu.memory_space<vmem>>, vector<1x8x512xf32>,
    %c1_i32 = arith.constant 1 : i32
    %15 = arith.index_cast %c1_i32 : i32 to index
    %c0_9 = arith.constant 0 : index
    %c0_10 = arith.constant 0 : index
    %16 = vector.load %arg2[%15, %c0_9, %c0_10] : memref<8x8x16xbf16, #tpu.memory_space<vmem>>, vector<1x8x16xbf16>
    %17 = vector.shape_cast %16 : vector<1x8x16xbf16> to vector<8x16xbf16>
    %c0_11 = arith.constant 0 : index
    %c0_12 = arith.constant 0 : index
    %18 = vector.load %arg3[%c0_11, %c0_12] : memref<16x512xbf16, #tpu.memory_space<vmem>>, vector<16x512xbf16>
    %cst_13 = arith.constant dense<0.000000e+00> : vector<8x512xf32>
    %19 = tpu.matmul %17, %18, %cst_13 {dimension_numbers = #tpu.dot_dimension_numbers<[1], [0], [0], [1], [0, 0, 1, 1], [], []>} : vector<8x16xbf16>, vector<16x512xbf16>, vector<8x512xf32> -> vector<8x512xf32>
    %c0_14 = arith.constant 0 : index
    %c0_15 = arith.constant 0 : index
    %20 = vector.load %arg4[%c0_14, %c0_15] : memref<1x512xf32, #tpu.memory_space<vmem>>, vector<1x512xf32>
    %21 = vector.broadcast %20 : vector<1x512xf32> to vector<8x512xf32>
    %22 = arith.addf %19, %21 : vector<8x512xf32>
    %23 = arith.index_cast %c1_i32 : i32 to index
    %c0_16 = arith.constant 0 : index
    %c0_17 = arith.constant 0 : index
    %24 = vector.load %arg9[%23, %c0_16, %c0_17] : memref<8x8x512xf32, #tpu.memory_space<vmem>>, vector<1x8x512xf32>
    %25 = vector.shape_cast %24 : vector<1x8x512xf32> to vector<8x512xf32>
    %26 = vector.shape_cast %22 : vector<8x512xf32> to vector<1x8x512xf32>
    tpu.vector_store %arg9[%23, %c0_16, %c0_17], %26 {strides = array<i32>} : memref<8x8x512xf32, #tpu.memory_space<vmem>>, vector<1x8x512xf32>,
    %c2_i32 = arith.constant 2 : i32
    %27 = arith.index_cast %c2_i32 : i32 to index
    %c0_18 = arith.constant 0 : index
    %c0_19 = arith.constant 0 : index
    %28 = vector.load %arg2[%27, %c0_18, %c0_19] : memref<8x8x16xbf16, #tpu.memory_space<vmem>>, vector<1x8x16xbf16>
    %29 = vector.shape_cast %28 : vector<1x8x16xbf16> to vector<8x16xbf16>
    %c0_20 = arith.constant 0 : index
    %c0_21 = arith.constant 0 : index
    %30 = vector.load %arg3[%c0_20, %c0_21] : memref<16x512xbf16, #tpu.memory_space<vmem>>, vector<16x512xbf16>
    %cst_22 = arith.constant dense<0.000000e+00> : vector<8x512xf32>
    %31 = tpu.matmul %29, %30, %cst_22 {dimension_numbers = #tpu.dot_dimension_numbers<[1], [0], [0], [1], [0, 0, 1, 1], [], []>} : vector<8x16xbf16>, vector<16x512xbf16>, vector<8x512xf32> -> vector<8x512xf32>
    %c0_23 = arith.constant 0 : index
    %c0_24 = arith.constant 0 : index
    %32 = vector.load %arg4[%c0_23, %c0_24] : memref<1x512xf32, #tpu.memory_space<vmem>>, vector<1x512xf32>
    %33 = vector.broadcast %32 : vector<1x512xf32> to vector<8x512xf32>
    %34 = arith.addf %31, %33 : vector<8x512xf32>
    %35 = arith.index_cast %c2_i32 : i32 to index
    %c0_25 = arith.constant 0 : index
    %c0_26 = arith.constant 0 : index
    %36 = vector.load %arg9[%35, %c0_25, %c0_26] : memref<8x8x512xf32, #tpu.memory_space<vmem>>, vector<1x8x512xf32>
    %37 = vector.shape_cast %36 : vector<1x8x512xf32> to vector<8x512xf32>
    %38 = vector.shape_cast %34 : vector<8x512xf32> to vector<1x8x512xf32>
    tpu.vector_store %arg9[%35, %c0_25, %c0_26], %38 {strides = array<i32>} : memref<8x8x512xf32, #tpu.memory_space<vmem>>, vector<1x8x512xf32>,
    %c3_i32 = arith.constant 3 : i32
    %39 = arith.index_cast %c3_i32 : i32 to index
    %c0_27 = arith.constant 0 : index
    %c0_28 = arith.constant 0 : index
    %40 = vector.load %arg2[%39, %c0_27, %c0_28] : memref<8x8x16xbf16, #tpu.memory_space<vmem>>, vector<1x8x16xbf16>
    %41 = vector.shape_cast %40 : vector<1x8x16xbf16> to vector<8x16xbf16>
    %c0_29 = arith.constant 0 : index
    %c0_30 = arith.constant 0 : index
    %42 = vector.load %arg3[%c0_29, %c0_30] : memref<16x512xbf16, #tpu.memory_space<vmem>>, vector<16x512xbf16>
    %cst_31 = arith.constant dense<0.000000e+00> : vector<8x512xf32>
    %43 = tpu.matmul %41, %42, %cst_31 {dimension_numbers = #tpu.dot_dimension_numbers<[1], [0], [0], [1], [0, 0, 1, 1], [], []>} : vector<8x16xbf16>, vector<16x512xbf16>, vector<8x512xf32> -> vector<8x512xf32>
    %c0_32 = arith.constant 0 : index
    %c0_33 = arith.constant 0 : index
    %44 = vector.load %arg4[%c0_32, %c0_33] : memref<1x512xf32, #tpu.memory_space<vmem>>, vector<1x512xf32>
    %45 = vector.broadcast %44 : vector<1x512xf32> to vector<8x512xf32>
    %46 = arith.addf %43, %45 : vector<8x512xf32>
    %47 = arith.index_cast %c3_i32 : i32 to index
    %c0_34 = arith.constant 0 : index
    %c0_35 = arith.constant 0 : index
    %48 = vector.load %arg9[%47, %c0_34, %c0_35] : memref<8x8x512xf32, #tpu.memory_space<vmem>>, vector<1x8x512xf32>
    %49 = vector.shape_cast %48 : vector<1x8x512xf32> to vector<8x512xf32>
    %50 = vector.shape_cast %46 : vector<8x512xf32> to vector<1x8x512xf32>
    tpu.vector_store %arg9[%47, %c0_34, %c0_35], %50 {strides = array<i32>} : memref<8x8x512xf32, #tpu.memory_space<vmem>>, vector<1x8x512xf32>,
    %c4_i32 = arith.constant 4 : i32
    %51 = arith.index_cast %c4_i32 : i32 to index
    %c0_36 = arith.constant 0 : index
    %c0_37 = arith.constant 0 : index
    %52 = vector.load %arg2[%51, %c0_36, %c0_37] : memref<8x8x16xbf16, #tpu.memory_space<vmem>>, vector<1x8x16xbf16>
    %53 = vector.shape_cast %52 : vector<1x8x16xbf16> to vector<8x16xbf16>
    %c0_38 = arith.constant 0 : index
    %c0_39 = arith.constant 0 : index
    %54 = vector.load %arg3[%c0_38, %c0_39] : memref<16x512xbf16, #tpu.memory_space<vmem>>, vector<16x512xbf16>
    %cst_40 = arith.constant dense<0.000000e+00> : vector<8x512xf32>
    %55 = tpu.matmul %53, %54, %cst_40 {dimension_numbers = #tpu.dot_dimension_numbers<[1], [0], [0], [1], [0, 0, 1, 1], [], []>} : vector<8x16xbf16>, vector<16x512xbf16>, vector<8x512xf32> -> vector<8x512xf32>
    %c0_41 = arith.constant 0 : index
    %c0_42 = arith.constant 0 : index
    %56 = vector.load %arg4[%c0_41, %c0_42] : memref<1x512xf32, #tpu.memory_space<vmem>>, vector<1x512xf32>
    %57 = vector.broadcast %56 : vector<1x512xf32> to vector<8x512xf32>
    %58 = arith.addf %55, %57 : vector<8x512xf32>
    %59 = arith.index_cast %c4_i32 : i32 to index
    %c0_43 = arith.constant 0 : index
    %c0_44 = arith.constant 0 : index
    %60 = vector.load %arg9[%59, %c0_43, %c0_44] : memref<8x8x512xf32, #tpu.memory_space<vmem>>, vector<1x8x512xf32>
    %61 = vector.shape_cast %60 : vector<1x8x512xf32> to vector<8x512xf32>
    %62 = vector.shape_cast %58 : vector<8x512xf32> to vector<1x8x512xf32>
    tpu.vector_store %arg9[%59, %c0_43, %c0_44], %62 {strides = array<i32>} : memref<8x8x512xf32, #tpu.memory_space<vmem>>, vector<1x8x512xf32>,
    %c5_i32 = arith.constant 5 : i32
    %63 = arith.index_cast %c5_i32 : i32 to index
    %c0_45 = arith.constant 0 : index
    %c0_46 = arith.constant 0 : index
    %64 = vector.load %arg2[%63, %c0_45, %c0_46] : memref<8x8x16xbf16, #tpu.memory_space<vmem>>, vector<1x8x16xbf16>
    %65 = vector.shape_cast %64 : vector<1x8x16xbf16> to vector<8x16xbf16>
    %c0_47 = arith.constant 0 : index
    %c0_48 = arith.constant 0 : index
    %66 = vector.load %arg3[%c0_47, %c0_48] : memref<16x512xbf16, #tpu.memory_space<vmem>>, vector<16x512xbf16>
    %cst_49 = arith.constant dense<0.000000e+00> : vector<8x512xf32>
    %67 = tpu.matmul %65, %66, %cst_49 {dimension_numbers = #tpu.dot_dimension_numbers<[1], [0], [0], [1], [0, 0, 1, 1], [], []>} : vector<8x16xbf16>, vector<16x512xbf16>, vector<8x512xf32> -> vector<8x512xf32>
    %c0_50 = arith.constant 0 : index
    %c0_51 = arith.constant 0 : index
    %68 = vector.load %arg4[%c0_50, %c0_51] : memref<1x512xf32, #tpu.memory_space<vmem>>, vector<1x512xf32>
    %69 = vector.broadcast %68 : vector<1x512xf32> to vector<8x512xf32>
    %70 = arith.addf %67, %69 : vector<8x512xf32>
    %71 = arith.index_cast %c5_i32 : i32 to index
    %c0_52 = arith.constant 0 : index
    %c0_53 = arith.constant 0 : index
    %72 = vector.load %arg9[%71, %c0_52, %c0_53] : memref<8x8x512xf32, #tpu.memory_space<vmem>>, vector<1x8x512xf32>
    %73 = vector.shape_cast %72 : vector<1x8x512xf32> to vector<8x512xf32>
    %74 = vector.shape_cast %70 : vector<8x512xf32> to vector<1x8x512xf32>
    tpu.vector_store %arg9[%71, %c0_52, %c0_53], %74 {strides = array<i32>} : memref<8x8x512xf32, #tpu.memory_space<vmem>>, vector<1x8x512xf32>,
    %c6_i32 = arith.constant 6 : i32
    %75 = arith.index_cast %c6_i32 : i32 to index
    %c0_54 = arith.constant 0 : index
    %c0_55 = arith.constant 0 : index
    %76 = vector.load %arg2[%75, %c0_54, %c0_55] : memref<8x8x16xbf16, #tpu.memory_space<vmem>>, vector<1x8x16xbf16>
    %77 = vector.shape_cast %76 : vector<1x8x16xbf16> to vector<8x16xbf16>
    %c0_56 = arith.constant 0 : index
    %c0_57 = arith.constant 0 : index
    %78 = vector.load %arg3[%c0_56, %c0_57] : memref<16x512xbf16, #tpu.memory_space<vmem>>, vector<16x512xbf16>
    %cst_58 = arith.constant dense<0.000000e+00> : vector<8x512xf32>
    %79 = tpu.matmul %77, %78, %cst_58 {dimension_numbers = #tpu.dot_dimension_numbers<[1], [0], [0], [1], [0, 0, 1, 1], [], []>} : vector<8x16xbf16>, vector<16x512xbf16>, vector<8x512xf32> -> vector<8x512xf32>
    %c0_59 = arith.constant 0 : index
    %c0_60 = arith.constant 0 : index
    %80 = vector.load %arg4[%c0_59, %c0_60] : memref<1x512xf32, #tpu.memory_space<vmem>>, vector<1x512xf32>
    %81 = vector.broadcast %80 : vector<1x512xf32> to vector<8x512xf32>
    %82 = arith.addf %79, %81 : vector<8x512xf32>
    %83 = arith.index_cast %c6_i32 : i32 to index
    %c0_61 = arith.constant 0 : index
    %c0_62 = arith.constant 0 : index
    %84 = vector.load %arg9[%83, %c0_61, %c0_62] : memref<8x8x512xf32, #tpu.memory_space<vmem>>, vector<1x8x512xf32>
    %85 = vector.shape_cast %84 : vector<1x8x512xf32> to vector<8x512xf32>
    %86 = vector.shape_cast %82 : vector<8x512xf32> to vector<1x8x512xf32>
    tpu.vector_store %arg9[%83, %c0_61, %c0_62], %86 {strides = array<i32>} : memref<8x8x512xf32, #tpu.memory_space<vmem>>, vector<1x8x512xf32>,
    %c7_i32 = arith.constant 7 : i32
    %87 = arith.index_cast %c7_i32 : i32 to index
    %c0_63 = arith.constant 0 : index
    %c0_64 = arith.constant 0 : index
    %88 = vector.load %arg2[%87, %c0_63, %c0_64] : memref<8x8x16xbf16, #tpu.memory_space<vmem>>, vector<1x8x16xbf16>
    %89 = vector.shape_cast %88 : vector<1x8x16xbf16> to vector<8x16xbf16>
    %c0_65 = arith.constant 0 : index
    %c0_66 = arith.constant 0 : index
    %90 = vector.load %arg3[%c0_65, %c0_66] : memref<16x512xbf16, #tpu.memory_space<vmem>>, vector<16x512xbf16>
    %cst_67 = arith.constant dense<0.000000e+00> : vector<8x512xf32>
    %91 = tpu.matmul %89, %90, %cst_67 {dimension_numbers = #tpu.dot_dimension_numbers<[1], [0], [0], [1], [0, 0, 1, 1], [], []>} : vector<8x16xbf16>, vector<16x512xbf16>, vector<8x512xf32> -> vector<8x512xf32>
    %c0_68 = arith.constant 0 : index
    %c0_69 = arith.constant 0 : index
    %92 = vector.load %arg4[%c0_68, %c0_69] : memref<1x512xf32, #tpu.memory_space<vmem>>, vector<1x512xf32>
    %93 = vector.broadcast %92 : vector<1x512xf32> to vector<8x512xf32>
    %94 = arith.addf %91, %93 : vector<8x512xf32>
    %95 = arith.index_cast %c7_i32 : i32 to index
    %c0_70 = arith.constant 0 : index
    %c0_71 = arith.constant 0 : index
    %96 = vector.load %arg9[%95, %c0_70, %c0_71] : memref<8x8x512xf32, #tpu.memory_space<vmem>>, vector<1x8x512xf32>
    %97 = vector.shape_cast %96 : vector<1x8x512xf32> to vector<8x512xf32>
    %98 = vector.shape_cast %94 : vector<8x512xf32> to vector<1x8x512xf32>
    tpu.vector_store %arg9[%95, %c0_70, %c0_71], %98 {strides = array<i32>} : memref<8x8x512xf32, #tpu.memory_space<vmem>>, vector<1x8x512xf32>,
    %c8_i32 = arith.constant 8 : i32
    %c0_i32_72 = arith.constant 0 : i32
    %99 = arith.index_cast %c0_i32_72 : i32 to index
    %c0_73 = arith.constant 0 : index
    %c0_74 = arith.constant 0 : index
    %100 = vector.load %arg9[%99, %c0_73, %c0_74] : memref<8x8x512xf32, #tpu.memory_space<vmem>>, vector<1x8x512xf32>
    %101 = vector.shape_cast %100 : vector<1x8x512xf32> to vector<8x512xf32>
    %c0_75 = arith.constant 0 : index
    %c0_76 = arith.constant 0 : index
    %102 = vector.load %arg10[%c0_75, %c0_76] : memref<8x128xf32, #tpu.memory_space<vmem>>, vector<8x128xf32>
    %103 = arith.truncf %102 : vector<8x128xf32> to vector<8x128xbf16>
    %c0_77 = arith.constant 0 : index
    %c0_78 = arith.constant 0 : index
    %104 = vector.load %arg5[%c0_77, %c0_78] : memref<128x512xbf16, #tpu.memory_space<vmem>>, vector<128x512xbf16>
    %cst_79 = arith.constant dense<0.000000e+00> : vector<8x512xf32>
    %105 = tpu.matmul %103, %104, %cst_79 {dimension_numbers = #tpu.dot_dimension_numbers<[1], [0], [0], [1], [0, 0, 1, 1], [], []>} : vector<8x128xbf16>, vector<128x512xbf16>, vector<8x512xf32> -> vector<8x512xf32>
    %106 = arith.addf %101, %105 : vector<8x512xf32>
    %107 = vector.extract_strided_slice %106 {offsets = [0, 0], sizes = [8, 384], strides = [1, 1]} : vector<8x512xf32> to vector<8x384xf32>
    %108 = arith.negf %107 : vector<8x384xf32>
    %109 = math.exp %108 : vector<8x384xf32>
    %cst_80 = arith.constant 1.000000e+00 : f32
    %110 = vector.broadcast %cst_80 : f32 to vector<8x384xf32>
    %111 = arith.addf %110, %109 : vector<8x384xf32>
    %112 = arith.divf %110, %111 : vector<8x384xf32>
    %113 = vector.extract_strided_slice %112 {offsets = [0, 0], sizes = [8, 128], strides = [1, 1]} : vector<8x384xf32> to vector<8x128xf32>
    %114 = vector.extract_strided_slice %112 {offsets = [0, 128], sizes = [8, 128], strides = [1, 1]} : vector<8x384xf32> to vector<8x128xf32>
    %115 = vector.extract_strided_slice %112 {offsets = [0, 256], sizes = [8, 128], strides = [1, 1]} : vector<8x384xf32> to vector<8x128xf32>
    %116 = vector.extract_strided_slice %106 {offsets = [0, 384], sizes = [8, 128], strides = [1, 1]} : vector<8x512xf32> to vector<8x128xf32>
    %117 = math.tanh %116 : vector<8x128xf32>
    %c0_81 = arith.constant 0 : index
    %c0_82 = arith.constant 0 : index
    %118 = vector.load %arg11[%c0_81, %c0_82] : memref<8x128xf32, #tpu.memory_space<vmem>>, vector<8x128xf32>
    %119 = arith.mulf %114, %118 : vector<8x128xf32>
    %120 = arith.mulf %113, %117 : vector<8x128xf32>
    %121 = arith.addf %119, %120 : vector<8x128xf32>
    %122 = math.tanh %121 : vector<8x128xf32>
    %123 = arith.mulf %115, %122 : vector<8x128xf32>
    %c0_83 = arith.constant 0 : index
    %c0_84 = arith.constant 0 : index
    %124 = vector.load %arg11[%c0_83, %c0_84] : memref<8x128xf32, #tpu.memory_space<vmem>>, vector<8x128xf32>
    tpu.vector_store %arg11[%c0_83, %c0_84], %121 {strides = array<i32>} : memref<8x128xf32, #tpu.memory_space<vmem>>, vector<8x128xf32>,
    %c0_85 = arith.constant 0 : index
    %c0_86 = arith.constant 0 : index
    %125 = vector.load %arg10[%c0_85, %c0_86] : memref<8x128xf32, #tpu.memory_space<vmem>>, vector<8x128xf32>
    tpu.vector_store %arg10[%c0_85, %c0_86], %123 {strides = array<i32>} : memref<8x128xf32, #tpu.memory_space<vmem>>, vector<8x128xf32>,
    %126 = arith.index_cast %c0_i32_72 : i32 to index
    %c0_87 = arith.constant 0 : index
    %c0_88 = arith.constant 0 : index
    %127 = vector.load %arg6[%126, %c0_87, %c0_88] : memref<8x8x128xf32, #tpu.memory_space<vmem>>, vector<1x8x128xf32>
    %128 = vector.shape_cast %127 : vector<1x8x128xf32> to vector<8x128xf32>
    %129 = vector.shape_cast %123 : vector<8x128xf32> to vector<1x8x128xf32>
    tpu.vector_store %arg6[%126, %c0_87, %c0_88], %129 {strides = array<i32>} : memref<8x8x128xf32, #tpu.memory_space<vmem>>, vector<1x8x128xf32>,
    %c1_i32_89 = arith.constant 1 : i32
    %130 = arith.index_cast %c1_i32_89 : i32 to index
    %c0_90 = arith.constant 0 : index
    %c0_91 = arith.constant 0 : index
    %131 = vector.load %arg9[%130, %c0_90, %c0_91] : memref<8x8x512xf32, #tpu.memory_space<vmem>>, vector<1x8x512xf32>
    %132 = vector.shape_cast %131 : vector<1x8x512xf32> to vector<8x512xf32>
    %c0_92 = arith.constant 0 : index
    %c0_93 = arith.constant 0 : index
    %133 = vector.load %arg10[%c0_92, %c0_93] : memref<8x128xf32, #tpu.memory_space<vmem>>, vector<8x128xf32>
    %134 = arith.truncf %133 : vector<8x128xf32> to vector<8x128xbf16>
    %c0_94 = arith.constant 0 : index
    %c0_95 = arith.constant 0 : index
    %135 = vector.load %arg5[%c0_94, %c0_95] : memref<128x512xbf16, #tpu.memory_space<vmem>>, vector<128x512xbf16>
    %cst_96 = arith.constant dense<0.000000e+00> : vector<8x512xf32>
    %136 = tpu.matmul %134, %135, %cst_96 {dimension_numbers = #tpu.dot_dimension_numbers<[1], [0], [0], [1], [0, 0, 1, 1], [], []>} : vector<8x128xbf16>, vector<128x512xbf16>, vector<8x512xf32> -> vector<8x512xf32>
    %137 = arith.addf %132, %136 : vector<8x512xf32>
    %138 = vector.extract_strided_slice %137 {offsets = [0, 0], sizes = [8, 384], strides = [1, 1]} : vector<8x512xf32> to vector<8x384xf32>
    %139 = arith.negf %138 : vector<8x384xf32>
    %140 = math.exp %139 : vector<8x384xf32>
    %cst_97 = arith.constant 1.000000e+00 : f32
    %141 = vector.broadcast %cst_97 : f32 to vector<8x384xf32>
    %142 = arith.addf %141, %140 : vector<8x384xf32>
    %143 = arith.divf %141, %142 : vector<8x384xf32>
    %144 = vector.extract_strided_slice %143 {offsets = [0, 0], sizes = [8, 128], strides = [1, 1]} : vector<8x384xf32> to vector<8x128xf32>
    %145 = vector.extract_strided_slice %143 {offsets = [0, 128], sizes = [8, 128], strides = [1, 1]} : vector<8x384xf32> to vector<8x128xf32>
    %146 = vector.extract_strided_slice %143 {offsets = [0, 256], sizes = [8, 128], strides = [1, 1]} : vector<8x384xf32> to vector<8x128xf32>
    %147 = vector.extract_strided_slice %137 {offsets = [0, 384], sizes = [8, 128], strides = [1, 1]} : vector<8x512xf32> to vector<8x128xf32>
    %148 = math.tanh %147 : vector<8x128xf32>
    %c0_98 = arith.constant 0 : index
    %c0_99 = arith.constant 0 : index
    %149 = vector.load %arg11[%c0_98, %c0_99] : memref<8x128xf32, #tpu.memory_space<vmem>>, vector<8x128xf32>
    %150 = arith.mulf %145, %149 : vector<8x128xf32>
    %151 = arith.mulf %144, %148 : vector<8x128xf32>
    %152 = arith.addf %150, %151 : vector<8x128xf32>
    %153 = math.tanh %152 : vector<8x128xf32>
    %154 = arith.mulf %146, %153 : vector<8x128xf32>
    %c0_100 = arith.constant 0 : index
    %c0_101 = arith.constant 0 : index
    %155 = vector.load %arg11[%c0_100, %c0_101] : memref<8x128xf32, #tpu.memory_space<vmem>>, vector<8x128xf32>
    tpu.vector_store %arg11[%c0_100, %c0_101], %152 {strides = array<i32>} : memref<8x128xf32, #tpu.memory_space<vmem>>, vector<8x128xf32>,
    %c0_102 = arith.constant 0 : index
    %c0_103 = arith.constant 0 : index
    %156 = vector.load %arg10[%c0_102, %c0_103] : memref<8x128xf32, #tpu.memory_space<vmem>>, vector<8x128xf32>
    tpu.vector_store %arg10[%c0_102, %c0_103], %154 {strides = array<i32>} : memref<8x128xf32, #tpu.memory_space<vmem>>, vector<8x128xf32>,
    %157 = arith.index_cast %c1_i32_89 : i32 to index
    %c0_104 = arith.constant 0 : index
    %c0_105 = arith.constant 0 : index
    %158 = vector.load %arg6[%157, %c0_104, %c0_105] : memref<8x8x128xf32, #tpu.memory_space<vmem>>, vector<1x8x128xf32>
    %159 = vector.shape_cast %158 : vector<1x8x128xf32> to vector<8x128xf32>
    %160 = vector.shape_cast %154 : vector<8x128xf32> to vector<1x8x128xf32>
    tpu.vector_store %arg6[%157, %c0_104, %c0_105], %160 {strides = array<i32>} : memref<8x8x128xf32, #tpu.memory_space<vmem>>, vector<1x8x128xf32>,
    %c2_i32_106 = arith.constant 2 : i32
    %161 = arith.index_cast %c2_i32_106 : i32 to index
    %c0_107 = arith.constant 0 : index
    %c0_108 = arith.constant 0 : index
    %162 = vector.load %arg9[%161, %c0_107, %c0_108] : memref<8x8x512xf32, #tpu.memory_space<vmem>>, vector<1x8x512xf32>
    %163 = vector.shape_cast %162 : vector<1x8x512xf32> to vector<8x512xf32>
    %c0_109 = arith.constant 0 : index
    %c0_110 = arith.constant 0 : index
    %164 = vector.load %arg10[%c0_109, %c0_110] : memref<8x128xf32, #tpu.memory_space<vmem>>, vector<8x128xf32>
    %165 = arith.truncf %164 : vector<8x128xf32> to vector<8x128xbf16>
    %c0_111 = arith.constant 0 : index
    %c0_112 = arith.constant 0 : index
    %166 = vector.load %arg5[%c0_111, %c0_112] : memref<128x512xbf16, #tpu.memory_space<vmem>>, vector<128x512xbf16>
    %cst_113 = arith.constant dense<0.000000e+00> : vector<8x512xf32>
    %167 = tpu.matmul %165, %166, %cst_113 {dimension_numbers = #tpu.dot_dimension_numbers<[1], [0], [0], [1], [0, 0, 1, 1], [], []>} : vector<8x128xbf16>, vector<128x512xbf16>, vector<8x512xf32> -> vector<8x512xf32>
    %168 = arith.addf %163, %167 : vector<8x512xf32>
    %169 = vector.extract_strided_slice %168 {offsets = [0, 0], sizes = [8, 384], strides = [1, 1]} : vector<8x512xf32> to vector<8x384xf32>
    %170 = arith.negf %169 : vector<8x384xf32>
    %171 = math.exp %170 : vector<8x384xf32>
    %cst_114 = arith.constant 1.000000e+00 : f32
    %172 = vector.broadcast %cst_114 : f32 to vector<8x384xf32>
    %173 = arith.addf %172, %171 : vector<8x384xf32>
    %174 = arith.divf %172, %173 : vector<8x384xf32>
    %175 = vector.extract_strided_slice %174 {offsets = [0, 0], sizes = [8, 128], strides = [1, 1]} : vector<8x384xf32> to vector<8x128xf32>
    %176 = vector.extract_strided_slice %174 {offsets = [0, 128], sizes = [8, 128], strides = [1, 1]} : vector<8x384xf32> to vector<8x128xf32>
    %177 = vector.extract_strided_slice %174 {offsets = [0, 256], sizes = [8, 128], strides = [1, 1]} : vector<8x384xf32> to vector<8x128xf32>
    %178 = vector.extract_strided_slice %168 {offsets = [0, 384], sizes = [8, 128], strides = [1, 1]} : vector<8x512xf32> to vector<8x128xf32>
    %179 = math.tanh %178 : vector<8x128xf32>
    %c0_115 = arith.constant 0 : index
    %c0_116 = arith.constant 0 : index
    %180 = vector.load %arg11[%c0_115, %c0_116] : memref<8x128xf32, #tpu.memory_space<vmem>>, vector<8x128xf32>
    %181 = arith.mulf %176, %180 : vector<8x128xf32>
    %182 = arith.mulf %175, %179 : vector<8x128xf32>
    %183 = arith.addf %181, %182 : vector<8x128xf32>
    %184 = math.tanh %183 : vector<8x128xf32>
    %185 = arith.mulf %177, %184 : vector<8x128xf32>
    %c0_117 = arith.constant 0 : index
    %c0_118 = arith.constant 0 : index
    %186 = vector.load %arg11[%c0_117, %c0_118] : memref<8x128xf32, #tpu.memory_space<vmem>>, vector<8x128xf32>
    tpu.vector_store %arg11[%c0_117, %c0_118], %183 {strides = array<i32>} : memref<8x128xf32, #tpu.memory_space<vmem>>, vector<8x128xf32>,
    %c0_119 = arith.constant 0 : index
    %c0_120 = arith.constant 0 : index
    %187 = vector.load %arg10[%c0_119, %c0_120] : memref<8x128xf32, #tpu.memory_space<vmem>>, vector<8x128xf32>
    tpu.vector_store %arg10[%c0_119, %c0_120], %185 {strides = array<i32>} : memref<8x128xf32, #tpu.memory_space<vmem>>, vector<8x128xf32>,
    %188 = arith.index_cast %c2_i32_106 : i32 to index
    %c0_121 = arith.constant 0 : index
    %c0_122 = arith.constant 0 : index
    %189 = vector.load %arg6[%188, %c0_121, %c0_122] : memref<8x8x128xf32, #tpu.memory_space<vmem>>, vector<1x8x128xf32>
    %190 = vector.shape_cast %189 : vector<1x8x128xf32> to vector<8x128xf32>
    %191 = vector.shape_cast %185 : vector<8x128xf32> to vector<1x8x128xf32>
    tpu.vector_store %arg6[%188, %c0_121, %c0_122], %191 {strides = array<i32>} : memref<8x8x128xf32, #tpu.memory_space<vmem>>, vector<1x8x128xf32>,
    %c3_i32_123 = arith.constant 3 : i32
    %192 = arith.index_cast %c3_i32_123 : i32 to index
    %c0_124 = arith.constant 0 : index
    %c0_125 = arith.constant 0 : index
    %193 = vector.load %arg9[%192, %c0_124, %c0_125] : memref<8x8x512xf32, #tpu.memory_space<vmem>>, vector<1x8x512xf32>
    %194 = vector.shape_cast %193 : vector<1x8x512xf32> to vector<8x512xf32>
    %c0_126 = arith.constant 0 : index
    %c0_127 = arith.constant 0 : index
    %195 = vector.load %arg10[%c0_126, %c0_127] : memref<8x128xf32, #tpu.memory_space<vmem>>, vector<8x128xf32>
    %196 = arith.truncf %195 : vector<8x128xf32> to vector<8x128xbf16>
    %c0_128 = arith.constant 0 : index
    %c0_129 = arith.constant 0 : index
    %197 = vector.load %arg5[%c0_128, %c0_129] : memref<128x512xbf16, #tpu.memory_space<vmem>>, vector<128x512xbf16>
    %cst_130 = arith.constant dense<0.000000e+00> : vector<8x512xf32>
    %198 = tpu.matmul %196, %197, %cst_130 {dimension_numbers = #tpu.dot_dimension_numbers<[1], [0], [0], [1], [0, 0, 1, 1], [], []>} : vector<8x128xbf16>, vector<128x512xbf16>, vector<8x512xf32> -> vector<8x512xf32>
    %199 = arith.addf %194, %198 : vector<8x512xf32>
    %200 = vector.extract_strided_slice %199 {offsets = [0, 0], sizes = [8, 384], strides = [1, 1]} : vector<8x512xf32> to vector<8x384xf32>
    %201 = arith.negf %200 : vector<8x384xf32>
    %202 = math.exp %201 : vector<8x384xf32>
    %cst_131 = arith.constant 1.000000e+00 : f32
    %203 = vector.broadcast %cst_131 : f32 to vector<8x384xf32>
    %204 = arith.addf %203, %202 : vector<8x384xf32>
    %205 = arith.divf %203, %204 : vector<8x384xf32>
    %206 = vector.extract_strided_slice %205 {offsets = [0, 0], sizes = [8, 128], strides = [1, 1]} : vector<8x384xf32> to vector<8x128xf32>
    %207 = vector.extract_strided_slice %205 {offsets = [0, 128], sizes = [8, 128], strides = [1, 1]} : vector<8x384xf32> to vector<8x128xf32>
    %208 = vector.extract_strided_slice %205 {offsets = [0, 256], sizes = [8, 128], strides = [1, 1]} : vector<8x384xf32> to vector<8x128xf32>
    %209 = vector.extract_strided_slice %199 {offsets = [0, 384], sizes = [8, 128], strides = [1, 1]} : vector<8x512xf32> to vector<8x128xf32>
    %210 = math.tanh %209 : vector<8x128xf32>
    %c0_132 = arith.constant 0 : index
    %c0_133 = arith.constant 0 : index
    %211 = vector.load %arg11[%c0_132, %c0_133] : memref<8x128xf32, #tpu.memory_space<vmem>>, vector<8x128xf32>
    %212 = arith.mulf %207, %211 : vector<8x128xf32>
    %213 = arith.mulf %206, %210 : vector<8x128xf32>
    %214 = arith.addf %212, %213 : vector<8x128xf32>
    %215 = math.tanh %214 : vector<8x128xf32>
    %216 = arith.mulf %208, %215 : vector<8x128xf32>
    %c0_134 = arith.constant 0 : index
    %c0_135 = arith.constant 0 : index
    %217 = vector.load %arg11[%c0_134, %c0_135] : memref<8x128xf32, #tpu.memory_space<vmem>>, vector<8x128xf32>
    tpu.vector_store %arg11[%c0_134, %c0_135], %214 {strides = array<i32>} : memref<8x128xf32, #tpu.memory_space<vmem>>, vector<8x128xf32>,
    %c0_136 = arith.constant 0 : index
    %c0_137 = arith.constant 0 : index
    %218 = vector.load %arg10[%c0_136, %c0_137] : memref<8x128xf32, #tpu.memory_space<vmem>>, vector<8x128xf32>
    tpu.vector_store %arg10[%c0_136, %c0_137], %216 {strides = array<i32>} : memref<8x128xf32, #tpu.memory_space<vmem>>, vector<8x128xf32>,
    %219 = arith.index_cast %c3_i32_123 : i32 to index
    %c0_138 = arith.constant 0 : index
    %c0_139 = arith.constant 0 : index
    %220 = vector.load %arg6[%219, %c0_138, %c0_139] : memref<8x8x128xf32, #tpu.memory_space<vmem>>, vector<1x8x128xf32>
    %221 = vector.shape_cast %220 : vector<1x8x128xf32> to vector<8x128xf32>
    %222 = vector.shape_cast %216 : vector<8x128xf32> to vector<1x8x128xf32>
    tpu.vector_store %arg6[%219, %c0_138, %c0_139], %222 {strides = array<i32>} : memref<8x8x128xf32, #tpu.memory_space<vmem>>, vector<1x8x128xf32>,
    %c4_i32_140 = arith.constant 4 : i32
    %223 = arith.index_cast %c4_i32_140 : i32 to index
    %c0_141 = arith.constant 0 : index
    %c0_142 = arith.constant 0 : index
    %224 = vector.load %arg9[%223, %c0_141, %c0_142] : memref<8x8x512xf32, #tpu.memory_space<vmem>>, vector<1x8x512xf32>
    %225 = vector.shape_cast %224 : vector<1x8x512xf32> to vector<8x512xf32>
    %c0_143 = arith.constant 0 : index
    %c0_144 = arith.constant 0 : index
    %226 = vector.load %arg10[%c0_143, %c0_144] : memref<8x128xf32, #tpu.memory_space<vmem>>, vector<8x128xf32>
    %227 = arith.truncf %226 : vector<8x128xf32> to vector<8x128xbf16>
    %c0_145 = arith.constant 0 : index
    %c0_146 = arith.constant 0 : index
    %228 = vector.load %arg5[%c0_145, %c0_146] : memref<128x512xbf16, #tpu.memory_space<vmem>>, vector<128x512xbf16>
    %cst_147 = arith.constant dense<0.000000e+00> : vector<8x512xf32>
    %229 = tpu.matmul %227, %228, %cst_147 {dimension_numbers = #tpu.dot_dimension_numbers<[1], [0], [0], [1], [0, 0, 1, 1], [], []>} : vector<8x128xbf16>, vector<128x512xbf16>, vector<8x512xf32> -> vector<8x512xf32>
    %230 = arith.addf %225, %229 : vector<8x512xf32>
    %231 = vector.extract_strided_slice %230 {offsets = [0, 0], sizes = [8, 384], strides = [1, 1]} : vector<8x512xf32> to vector<8x384xf32>
    %232 = arith.negf %231 : vector<8x384xf32>
    %233 = math.exp %232 : vector<8x384xf32>
    %cst_148 = arith.constant 1.000000e+00 : f32
    %234 = vector.broadcast %cst_148 : f32 to vector<8x384xf32>
    %235 = arith.addf %234, %233 : vector<8x384xf32>
    %236 = arith.divf %234, %235 : vector<8x384xf32>
    %237 = vector.extract_strided_slice %236 {offsets = [0, 0], sizes = [8, 128], strides = [1, 1]} : vector<8x384xf32> to vector<8x128xf32>
    %238 = vector.extract_strided_slice %236 {offsets = [0, 128], sizes = [8, 128], strides = [1, 1]} : vector<8x384xf32> to vector<8x128xf32>
    %239 = vector.extract_strided_slice %236 {offsets = [0, 256], sizes = [8, 128], strides = [1, 1]} : vector<8x384xf32> to vector<8x128xf32>
    %240 = vector.extract_strided_slice %230 {offsets = [0, 384], sizes = [8, 128], strides = [1, 1]} : vector<8x512xf32> to vector<8x128xf32>
    %241 = math.tanh %240 : vector<8x128xf32>
    %c0_149 = arith.constant 0 : index
    %c0_150 = arith.constant 0 : index
    %242 = vector.load %arg11[%c0_149, %c0_150] : memref<8x128xf32, #tpu.memory_space<vmem>>, vector<8x128xf32>
    %243 = arith.mulf %238, %242 : vector<8x128xf32>
    %244 = arith.mulf %237, %241 : vector<8x128xf32>
    %245 = arith.addf %243, %244 : vector<8x128xf32>
    %246 = math.tanh %245 : vector<8x128xf32>
    %247 = arith.mulf %239, %246 : vector<8x128xf32>
    %c0_151 = arith.constant 0 : index
    %c0_152 = arith.constant 0 : index
    %248 = vector.load %arg11[%c0_151, %c0_152] : memref<8x128xf32, #tpu.memory_space<vmem>>, vector<8x128xf32>
    tpu.vector_store %arg11[%c0_151, %c0_152], %245 {strides = array<i32>} : memref<8x128xf32, #tpu.memory_space<vmem>>, vector<8x128xf32>,
    %c0_153 = arith.constant 0 : index
    %c0_154 = arith.constant 0 : index
    %249 = vector.load %arg10[%c0_153, %c0_154] : memref<8x128xf32, #tpu.memory_space<vmem>>, vector<8x128xf32>
    tpu.vector_store %arg10[%c0_153, %c0_154], %247 {strides = array<i32>} : memref<8x128xf32, #tpu.memory_space<vmem>>, vector<8x128xf32>,
    %250 = arith.index_cast %c4_i32_140 : i32 to index
    %c0_155 = arith.constant 0 : index
    %c0_156 = arith.constant 0 : index
    %251 = vector.load %arg6[%250, %c0_155, %c0_156] : memref<8x8x128xf32, #tpu.memory_space<vmem>>, vector<1x8x128xf32>
    %252 = vector.shape_cast %251 : vector<1x8x128xf32> to vector<8x128xf32>
    %253 = vector.shape_cast %247 : vector<8x128xf32> to vector<1x8x128xf32>
    tpu.vector_store %arg6[%250, %c0_155, %c0_156], %253 {strides = array<i32>} : memref<8x8x128xf32, #tpu.memory_space<vmem>>, vector<1x8x128xf32>,
    %c5_i32_157 = arith.constant 5 : i32
    %254 = arith.index_cast %c5_i32_157 : i32 to index
    %c0_158 = arith.constant 0 : index
    %c0_159 = arith.constant 0 : index
    %255 = vector.load %arg9[%254, %c0_158, %c0_159] : memref<8x8x512xf32, #tpu.memory_space<vmem>>, vector<1x8x512xf32>
    %256 = vector.shape_cast %255 : vector<1x8x512xf32> to vector<8x512xf32>
    %c0_160 = arith.constant 0 : index
    %c0_161 = arith.constant 0 : index
    %257 = vector.load %arg10[%c0_160, %c0_161] : memref<8x128xf32, #tpu.memory_space<vmem>>, vector<8x128xf32>
    %258 = arith.truncf %257 : vector<8x128xf32> to vector<8x128xbf16>
    %c0_162 = arith.constant 0 : index
    %c0_163 = arith.constant 0 : index
    %259 = vector.load %arg5[%c0_162, %c0_163] : memref<128x512xbf16, #tpu.memory_space<vmem>>, vector<128x512xbf16>
    %cst_164 = arith.constant dense<0.000000e+00> : vector<8x512xf32>
    %260 = tpu.matmul %258, %259, %cst_164 {dimension_numbers = #tpu.dot_dimension_numbers<[1], [0], [0], [1], [0, 0, 1, 1], [], []>} : vector<8x128xbf16>, vector<128x512xbf16>, vector<8x512xf32> -> vector<8x512xf32>
    %261 = arith.addf %256, %260 : vector<8x512xf32>
    %262 = vector.extract_strided_slice %261 {offsets = [0, 0], sizes = [8, 384], strides = [1, 1]} : vector<8x512xf32> to vector<8x384xf32>
    %263 = arith.negf %262 : vector<8x384xf32>
    %264 = math.exp %263 : vector<8x384xf32>
    %cst_165 = arith.constant 1.000000e+00 : f32
    %265 = vector.broadcast %cst_165 : f32 to vector<8x384xf32>
    %266 = arith.addf %265, %264 : vector<8x384xf32>
    %267 = arith.divf %265, %266 : vector<8x384xf32>
    %268 = vector.extract_strided_slice %267 {offsets = [0, 0], sizes = [8, 128], strides = [1, 1]} : vector<8x384xf32> to vector<8x128xf32>
    %269 = vector.extract_strided_slice %267 {offsets = [0, 128], sizes = [8, 128], strides = [1, 1]} : vector<8x384xf32> to vector<8x128xf32>
    %270 = vector.extract_strided_slice %267 {offsets = [0, 256], sizes = [8, 128], strides = [1, 1]} : vector<8x384xf32> to vector<8x128xf32>
    %271 = vector.extract_strided_slice %261 {offsets = [0, 384], sizes = [8, 128], strides = [1, 1]} : vector<8x512xf32> to vector<8x128xf32>
    %272 = math.tanh %271 : vector<8x128xf32>
    %c0_166 = arith.constant 0 : index
    %c0_167 = arith.constant 0 : index
    %273 = vector.load %arg11[%c0_166, %c0_167] : memref<8x128xf32, #tpu.memory_space<vmem>>, vector<8x128xf32>
    %274 = arith.mulf %269, %273 : vector<8x128xf32>
    %275 = arith.mulf %268, %272 : vector<8x128xf32>
    %276 = arith.addf %274, %275 : vector<8x128xf32>
    %277 = math.tanh %276 : vector<8x128xf32>
    %278 = arith.mulf %270, %277 : vector<8x128xf32>
    %c0_168 = arith.constant 0 : index
    %c0_169 = arith.constant 0 : index
    %279 = vector.load %arg11[%c0_168, %c0_169] : memref<8x128xf32, #tpu.memory_space<vmem>>, vector<8x128xf32>
    tpu.vector_store %arg11[%c0_168, %c0_169], %276 {strides = array<i32>} : memref<8x128xf32, #tpu.memory_space<vmem>>, vector<8x128xf32>,
    %c0_170 = arith.constant 0 : index
    %c0_171 = arith.constant 0 : index
    %280 = vector.load %arg10[%c0_170, %c0_171] : memref<8x128xf32, #tpu.memory_space<vmem>>, vector<8x128xf32>
    tpu.vector_store %arg10[%c0_170, %c0_171], %278 {strides = array<i32>} : memref<8x128xf32, #tpu.memory_space<vmem>>, vector<8x128xf32>,
    %281 = arith.index_cast %c5_i32_157 : i32 to index
    %c0_172 = arith.constant 0 : index
    %c0_173 = arith.constant 0 : index
    %282 = vector.load %arg6[%281, %c0_172, %c0_173] : memref<8x8x128xf32, #tpu.memory_space<vmem>>, vector<1x8x128xf32>
    %283 = vector.shape_cast %282 : vector<1x8x128xf32> to vector<8x128xf32>
    %284 = vector.shape_cast %278 : vector<8x128xf32> to vector<1x8x128xf32>
    tpu.vector_store %arg6[%281, %c0_172, %c0_173], %284 {strides = array<i32>} : memref<8x8x128xf32, #tpu.memory_space<vmem>>, vector<1x8x128xf32>,
    %c6_i32_174 = arith.constant 6 : i32
    %285 = arith.index_cast %c6_i32_174 : i32 to index
    %c0_175 = arith.constant 0 : index
    %c0_176 = arith.constant 0 : index
    %286 = vector.load %arg9[%285, %c0_175, %c0_176] : memref<8x8x512xf32, #tpu.memory_space<vmem>>, vector<1x8x512xf32>
    %287 = vector.shape_cast %286 : vector<1x8x512xf32> to vector<8x512xf32>
    %c0_177 = arith.constant 0 : index
    %c0_178 = arith.constant 0 : index
    %288 = vector.load %arg10[%c0_177, %c0_178] : memref<8x128xf32, #tpu.memory_space<vmem>>, vector<8x128xf32>
    %289 = arith.truncf %288 : vector<8x128xf32> to vector<8x128xbf16>
    %c0_179 = arith.constant 0 : index
    %c0_180 = arith.constant 0 : index
    %290 = vector.load %arg5[%c0_179, %c0_180] : memref<128x512xbf16, #tpu.memory_space<vmem>>, vector<128x512xbf16>
    %cst_181 = arith.constant dense<0.000000e+00> : vector<8x512xf32>
    %291 = tpu.matmul %289, %290, %cst_181 {dimension_numbers = #tpu.dot_dimension_numbers<[1], [0], [0], [1], [0, 0, 1, 1], [], []>} : vector<8x128xbf16>, vector<128x512xbf16>, vector<8x512xf32> -> vector<8x512xf32>
    %292 = arith.addf %287, %291 : vector<8x512xf32>
    %293 = vector.extract_strided_slice %292 {offsets = [0, 0], sizes = [8, 384], strides = [1, 1]} : vector<8x512xf32> to vector<8x384xf32>
    %294 = arith.negf %293 : vector<8x384xf32>
    %295 = math.exp %294 : vector<8x384xf32>
    %cst_182 = arith.constant 1.000000e+00 : f32
    %296 = vector.broadcast %cst_182 : f32 to vector<8x384xf32>
    %297 = arith.addf %296, %295 : vector<8x384xf32>
    %298 = arith.divf %296, %297 : vector<8x384xf32>
    %299 = vector.extract_strided_slice %298 {offsets = [0, 0], sizes = [8, 128], strides = [1, 1]} : vector<8x384xf32> to vector<8x128xf32>
    %300 = vector.extract_strided_slice %298 {offsets = [0, 128], sizes = [8, 128], strides = [1, 1]} : vector<8x384xf32> to vector<8x128xf32>
    %301 = vector.extract_strided_slice %298 {offsets = [0, 256], sizes = [8, 128], strides = [1, 1]} : vector<8x384xf32> to vector<8x128xf32>
    %302 = vector.extract_strided_slice %292 {offsets = [0, 384], sizes = [8, 128], strides = [1, 1]} : vector<8x512xf32> to vector<8x128xf32>
    %303 = math.tanh %302 : vector<8x128xf32>
    %c0_183 = arith.constant 0 : index
    %c0_184 = arith.constant 0 : index
    %304 = vector.load %arg11[%c0_183, %c0_184] : memref<8x128xf32, #tpu.memory_space<vmem>>, vector<8x128xf32>
    %305 = arith.mulf %300, %304 : vector<8x128xf32>
    %306 = arith.mulf %299, %303 : vector<8x128xf32>
    %307 = arith.addf %305, %306 : vector<8x128xf32>
    %308 = math.tanh %307 : vector<8x128xf32>
    %309 = arith.mulf %301, %308 : vector<8x128xf32>
    %c0_185 = arith.constant 0 : index
    %c0_186 = arith.constant 0 : index
    %310 = vector.load %arg11[%c0_185, %c0_186] : memref<8x128xf32, #tpu.memory_space<vmem>>, vector<8x128xf32>
    tpu.vector_store %arg11[%c0_185, %c0_186], %307 {strides = array<i32>} : memref<8x128xf32, #tpu.memory_space<vmem>>, vector<8x128xf32>,
    %c0_187 = arith.constant 0 : index
    %c0_188 = arith.constant 0 : index
    %311 = vector.load %arg10[%c0_187, %c0_188] : memref<8x128xf32, #tpu.memory_space<vmem>>, vector<8x128xf32>
    tpu.vector_store %arg10[%c0_187, %c0_188], %309 {strides = array<i32>} : memref<8x128xf32, #tpu.memory_space<vmem>>, vector<8x128xf32>,
    %312 = arith.index_cast %c6_i32_174 : i32 to index
    %c0_189 = arith.constant 0 : index
    %c0_190 = arith.constant 0 : index
    %313 = vector.load %arg6[%312, %c0_189, %c0_190] : memref<8x8x128xf32, #tpu.memory_space<vmem>>, vector<1x8x128xf32>
    %314 = vector.shape_cast %313 : vector<1x8x128xf32> to vector<8x128xf32>
    %315 = vector.shape_cast %309 : vector<8x128xf32> to vector<1x8x128xf32>
    tpu.vector_store %arg6[%312, %c0_189, %c0_190], %315 {strides = array<i32>} : memref<8x8x128xf32, #tpu.memory_space<vmem>>, vector<1x8x128xf32>,
    %c7_i32_191 = arith.constant 7 : i32
    %316 = arith.index_cast %c7_i32_191 : i32 to index
    %c0_192 = arith.constant 0 : index
    %c0_193 = arith.constant 0 : index
    %317 = vector.load %arg9[%316, %c0_192, %c0_193] : memref<8x8x512xf32, #tpu.memory_space<vmem>>, vector<1x8x512xf32>
    %318 = vector.shape_cast %317 : vector<1x8x512xf32> to vector<8x512xf32>
    %c0_194 = arith.constant 0 : index
    %c0_195 = arith.constant 0 : index
    %319 = vector.load %arg10[%c0_194, %c0_195] : memref<8x128xf32, #tpu.memory_space<vmem>>, vector<8x128xf32>
    %320 = arith.truncf %319 : vector<8x128xf32> to vector<8x128xbf16>
    %c0_196 = arith.constant 0 : index
    %c0_197 = arith.constant 0 : index
    %321 = vector.load %arg5[%c0_196, %c0_197] : memref<128x512xbf16, #tpu.memory_space<vmem>>, vector<128x512xbf16>
    %cst_198 = arith.constant dense<0.000000e+00> : vector<8x512xf32>
    %322 = tpu.matmul %320, %321, %cst_198 {dimension_numbers = #tpu.dot_dimension_numbers<[1], [0], [0], [1], [0, 0, 1, 1], [], []>} : vector<8x128xbf16>, vector<128x512xbf16>, vector<8x512xf32> -> vector<8x512xf32>
    %323 = arith.addf %318, %322 : vector<8x512xf32>
    %324 = vector.extract_strided_slice %323 {offsets = [0, 0], sizes = [8, 384], strides = [1, 1]} : vector<8x512xf32> to vector<8x384xf32>
    %325 = arith.negf %324 : vector<8x384xf32>
    %326 = math.exp %325 : vector<8x384xf32>
    %cst_199 = arith.constant 1.000000e+00 : f32
    %327 = vector.broadcast %cst_199 : f32 to vector<8x384xf32>
    %328 = arith.addf %327, %326 : vector<8x384xf32>
    %329 = arith.divf %327, %328 : vector<8x384xf32>
    %330 = vector.extract_strided_slice %329 {offsets = [0, 0], sizes = [8, 128], strides = [1, 1]} : vector<8x384xf32> to vector<8x128xf32>
    %331 = vector.extract_strided_slice %329 {offsets = [0, 128], sizes = [8, 128], strides = [1, 1]} : vector<8x384xf32> to vector<8x128xf32>
    %332 = vector.extract_strided_slice %329 {offsets = [0, 256], sizes = [8, 128], strides = [1, 1]} : vector<8x384xf32> to vector<8x128xf32>
    %333 = vector.extract_strided_slice %323 {offsets = [0, 384], sizes = [8, 128], strides = [1, 1]} : vector<8x512xf32> to vector<8x128xf32>
    %334 = math.tanh %333 : vector<8x128xf32>
    %c0_200 = arith.constant 0 : index
    %c0_201 = arith.constant 0 : index
    %335 = vector.load %arg11[%c0_200, %c0_201] : memref<8x128xf32, #tpu.memory_space<vmem>>, vector<8x128xf32>
    %336 = arith.mulf %331, %335 : vector<8x128xf32>
    %337 = arith.mulf %330, %334 : vector<8x128xf32>
    %338 = arith.addf %336, %337 : vector<8x128xf32>
    %339 = math.tanh %338 : vector<8x128xf32>
    %340 = arith.mulf %332, %339 : vector<8x128xf32>
    %c0_202 = arith.constant 0 : index
    %c0_203 = arith.constant 0 : index
    %341 = vector.load %arg11[%c0_202, %c0_203] : memref<8x128xf32, #tpu.memory_space<vmem>>, vector<8x128xf32>
    tpu.vector_store %arg11[%c0_202, %c0_203], %338 {strides = array<i32>} : memref<8x128xf32, #tpu.memory_space<vmem>>, vector<8x128xf32>,
    %c0_204 = arith.constant 0 : index
    %c0_205 = arith.constant 0 : index
    %342 = vector.load %arg10[%c0_204, %c0_205] : memref<8x128xf32, #tpu.memory_space<vmem>>, vector<8x128xf32>
    tpu.vector_store %arg10[%c0_204, %c0_205], %340 {strides = array<i32>} : memref<8x128xf32, #tpu.memory_space<vmem>>, vector<8x128xf32>,
    %343 = arith.index_cast %c7_i32_191 : i32 to index
    %c0_206 = arith.constant 0 : index
    %c0_207 = arith.constant 0 : index
    %344 = vector.load %arg6[%343, %c0_206, %c0_207] : memref<8x8x128xf32, #tpu.memory_space<vmem>>, vector<1x8x128xf32>
    %345 = vector.shape_cast %344 : vector<1x8x128xf32> to vector<8x128xf32>
    %346 = vector.shape_cast %340 : vector<8x128xf32> to vector<1x8x128xf32>
    tpu.vector_store %arg6[%343, %c0_206, %c0_207], %346 {strides = array<i32>} : memref<8x8x128xf32, #tpu.memory_space<vmem>>, vector<1x8x128xf32>,
    %c8_i32_208 = arith.constant 8 : i32
    %c0_i32_209 = arith.constant 0 : i32
    %347 = arith.cmpi eq, %arg1, %c0_i32_209 : i32
    %348 = arith.extui %347 : i1 to i32
    %c0_i32_210 = arith.constant 0 : i32
    %349 = arith.cmpi ne, %348, %c0_i32_210 : i32
    scf.if %349 {
      %c0_211 = arith.constant 0 : index
      %c0_212 = arith.constant 0 : index
      %350 = vector.load %arg10[%c0_211, %c0_212] : memref<8x128xf32, #tpu.memory_space<vmem>>, vector<8x128xf32>
      %c0_213 = arith.constant 0 : index
      %c0_214 = arith.constant 0 : index
      %351 = vector.load %arg7[%c0_213, %c0_214] : memref<8x128xf32, #tpu.memory_space<vmem>>, vector<8x128xf32>
      tpu.vector_store %arg7[%c0_213, %c0_214], %350 {strides = array<i32>} : memref<8x128xf32, #tpu.memory_space<vmem>>, vector<8x128xf32>,
      %c0_215 = arith.constant 0 : index
      %c0_216 = arith.constant 0 : index
      %352 = vector.load %arg11[%c0_215, %c0_216] : memref<8x128xf32, #tpu.memory_space<vmem>>, vector<8x128xf32>
      %c0_217 = arith.constant 0 : index
      %c0_218 = arith.constant 0 : index
      %353 = vector.load %arg8[%c0_217, %c0_218] : memref<8x128xf32, #tpu.memory_space<vmem>>, vector<8x128xf32>
      tpu.vector_store %arg8[%c0_217, %c0_218], %352 {strides = array<i32>} : memref<8x128xf32, #tpu.memory_space<vmem>>, vector<8x128xf32>,
    } else {
    }
    return
  }
  func.func @transform_0(%arg0: i32, %arg1: i32) -> (i32, i32, i32) {
    %c0_i32 = arith.constant 0 : i32
    %c0_i32_0 = arith.constant 0 : i32
    return %arg1, %arg0, %c0_i32 : i32, i32, i32
  }
  func.func @transform_1(%arg0: i32, %arg1: i32) -> (i32, i32) {
    %c0_i32 = arith.constant 0 : i32
    %c0_i32_0 = arith.constant 0 : i32
    %c0_i32_1 = arith.constant 0 : i32
    return %c0_i32, %c0_i32_0 : i32, i32
  }
  func.func @transform_2(%arg0: i32, %arg1: i32) -> (i32, i32) {
    %c0_i32 = arith.constant 0 : i32
    %c0_i32_0 = arith.constant 0 : i32
    %c0_i32_1 = arith.constant 0 : i32
    return %c0_i32, %c0_i32_0 : i32, i32
  }
  func.func @transform_3(%arg0: i32, %arg1: i32) -> (i32, i32) {
    %c0_i32 = arith.constant 0 : i32
    %c0_i32_0 = arith.constant 0 : i32
    %c0_i32_1 = arith.constant 0 : i32
    return %c0_i32, %c0_i32_0 : i32, i32
  }
  func.func @transform_4(%arg0: i32, %arg1: i32) -> (i32, i32, i32) {
    %c0_i32 = arith.constant 0 : i32
    %c0_i32_0 = arith.constant 0 : i32
    return %arg1, %arg0, %c0_i32 : i32, i32, i32
  }
  func.func @transform_5(%arg0: i32, %arg1: i32) -> (i32, i32) {
    %c0_i32 = arith.constant 0 : i32
    %c0_i32_0 = arith.constant 0 : i32
    return %arg0, %c0_i32 : i32, i32
  }
  func.func @transform_6(%arg0: i32, %arg1: i32) -> (i32, i32) {
    %c0_i32 = arith.constant 0 : i32
    %c0_i32_0 = arith.constant 0 : i32
    return %arg0, %c0_i32 : i32, i32
  }
}

</mosaic_0001>

<llo_original>
// kernel: tpu_custom_call.1
$region0: #{tpu_custom_call.1}
  #allocation0 [shape = 'u32[]', space=smem, size = 0x4, offset = 0x4, fixed_abs, tag = 'smem constant byte address 0x4 - core index']
  #allocation1 [shape = 'u32[72,128]{1,0:T(1,128)}', space=vmem, size = 0x9000, scoped, tag = 'internal scratch']
  #allocation2 [shape = 'f32[8,8,512]{2,1,0:T(8,128)}', space=vmem, size = 0x20000, scoped, tag = 'scratch operand']
  #allocation3 [shape = 'f32[8,128]{1,0:T(8,128)}', space=vmem, size = 0x1000, scoped, tag = 'scratch operand']
  #allocation4 [shape = 'f32[8,128]{1,0:T(8,128)}', space=vmem, size = 0x1000, scoped, tag = 'scratch operand']
  %s0 = inlined_call_operand.hbm [shape: bf16[8,8,16], index: 0, kind: input, shape index: {}]
  %s1 = inlined_call_operand.hbm [shape: bf16[16,512], index: 1, kind: input, shape index: {}]
  %s2 = inlined_call_operand.hbm [shape: f32[1,512], index: 2, kind: input, shape index: {}]
  %s3 = inlined_call_operand.hbm [shape: bf16[128,512], index: 3, kind: input, shape index: {}]
  %s4 = inlined_call_operand.hbm [shape: f32[8,8,128], index: 4, kind: output, shape index: {0}]
  %s5 = inlined_call_operand.hbm [shape: f32[8,128], index: 5, kind: output, shape index: {1}]
  %s6 = inlined_call_operand.hbm [shape: f32[8,128], index: 6, kind: output, shape index: {2}]
  %7 = xla_tuple %s4, %s5, %s6
  %s8 = sld [smem:[#allocation0]]
  $region66: #{tpu_custom_call.1} parent=0
    _
  %s10 = ssub.s32 1, %s8
  %s11 = scalar_select 0, %s10, %s8
  $region1: #{tpu_custom_call.1} parent=0
    #allocation5 [shape = 'u8[16384]{0}', space=vmem, size = 0x4000, scoped, tag = 'input window, operand 0, single buffered']
    #allocation6 [shape = 's32[1]{0}', space=sflag, size = 0x4, scoped, tag = 'scoped memory for tpu_custom_call.1']
    #allocation7 [shape = 's32[1]{0}', space=sflag, size = 0x4, scoped, tag = 'scoped memory for tpu_custom_call.1']
    #allocation8 [shape = 'u8[16384]{0}', space=vmem, size = 0x4000, scoped, tag = 'input window, operand 1, single buffered']
    #allocation9 [shape = 's32[1]{0}', space=sflag, size = 0x4, scoped, tag = 'scoped memory for tpu_custom_call.1']
    #allocation10 [shape = 'u8[2048]{0}', space=vmem, size = 0x800, scoped, tag = 'input window, operand 2, single buffered']
    #allocation11 [shape = 'u8[131072]{0}', space=vmem, size = 0x20000, scoped, tag = 'input window, operand 3, single buffered']
    #allocation12 [shape = 's32[1]{0}', space=sflag, size = 0x4, scoped, tag = 'scoped memory for tpu_custom_call.1']
    #allocation13 [shape = 'u8[32768]{0}', space=vmem, size = 0x8000, scoped, tag = 'output window, operand 0, single buffered']
    #allocation14 [shape = 'u8[4096]{0}', space=vmem, size = 0x1000, scoped, tag = 'output window, operand 1, single buffered']
    #allocation15 [shape = 's32[1]{0}', space=sflag, size = 0x4, scoped, tag = 'scoped memory for tpu_custom_call.1']
    #allocation16 [shape = 'u8[4096]{0}', space=vmem, size = 0x1000, scoped, tag = 'output window, operand 2, single buffered']
    %12 = vsyncpa [#allocation6], 0
    %13 = vsyncpa [#allocation9], 0
    %14 = vsyncpa [#allocation12], 0
    %15 = vsyncpa [#allocation7], 0
    %16 = vsyncpa [#allocation15], 0
    // Predicated region
    $region2: #{tpu_custom_call.1} parent=1 // pred_check
      _
    $region3: #{tpu_custom_call.1} parent=1 // pred_check_branch
      %18 = sbr.rel (0) target = $region5
    $region4: #{tpu_custom_call.1} parent=1 // pred_region
      %20 = vsyncadd [#allocation6], 0
      %s21 = sshll.u32 %s0, 4
      %s22 = int_to_ptr.hbm [resolvable:$true] %s21
      %s23 = sshll.u32 [#allocation5], 4
      %s24 = int_to_ptr.vmem [resolvable:$true] %s23
      %29 = dma.hbm_to_vmem [thread:$0]  %s22, 512, %s24, [#allocation6], 64, 64, 4
    $region5: #{tpu_custom_call.1} parent=1 // pred_fallthru
      _
    // Predicated region
    $region6: #{tpu_custom_call.1} parent=1 // pred_check
      _
    $region7: #{tpu_custom_call.1} parent=1 // pred_check_branch
      %31 = sbr.rel (0) target = $region9
    $region8: #{tpu_custom_call.1} parent=1 // pred_region
      %33 = vsyncadd [#allocation9], 0
      %s34 = sshll.u32 %s1, 4
      %s35 = int_to_ptr.hbm [resolvable:$true] %s34
      %s36 = sshll.u32 [#allocation8], 4
      %s37 = int_to_ptr.vmem [resolvable:$true] %s36
      %42 = dma.hbm_to_vmem [thread:$0]  %s35, 512, %s37, [#allocation9], 256, 256, 16
    $region9: #{tpu_custom_call.1} parent=1 // pred_fallthru
      _
    // Predicated region
    $region10: #{tpu_custom_call.1} parent=1 // pred_check
      _
    $region11: #{tpu_custom_call.1} parent=1 // pred_check_branch
      %44 = sbr.rel (0) target = $region13
    $region12: #{tpu_custom_call.1} parent=1 // pred_region
      %46 = vsyncadd [#allocation9], 0
      %s48 = sshll.u32 %s2, 4
      %s49 = int_to_ptr.hbm [resolvable:$true] %s48
      %s50 = sshll.u32 [#allocation10], 4
      %s51 = int_to_ptr.vmem [resolvable:$true] %s50
      %53 = dma.hbm_to_vmem [thread:$0]  %s49, 64, %s51, [#allocation9]
    $region13: #{tpu_custom_call.1} parent=1 // pred_fallthru
      _
    // Predicated region
    $region14: #{tpu_custom_call.1} parent=1 // pred_check
      _
    $region15: #{tpu_custom_call.1} parent=1 // pred_check_branch
      %55 = sbr.rel (0) target = $region17
    $region16: #{tpu_custom_call.1} parent=1 // pred_region
      %57 = vsyncadd [#allocation12], 0
      %s58 = sshll.u32 %s3, 4
      %s59 = int_to_ptr.hbm [resolvable:$true] %s58
      %s60 = sshll.u32 [#allocation11], 4
      %s61 = int_to_ptr.vmem [resolvable:$true] %s60
      %66 = dma.hbm_to_vmem [thread:$0]  %s59, 4096, %s61, [#allocation12], 256, 256, 16
    $region17: #{tpu_custom_call.1} parent=1 // pred_fallthru
      _
    // Predicated region
    $region18: #{tpu_custom_call.1} parent=1 // pred_check
      _
    $region19: #{tpu_custom_call.1} parent=1 // pred_check_branch
      %68 = sbr.rel (0) target = $region21
    $region20: #{tpu_custom_call.1} parent=1 // pred_region
      %70 = dma.done [#allocation6], 512
    $region21: #{tpu_custom_call.1} parent=1 // pred_fallthru
      _
    // Predicated region
    $region22: #{tpu_custom_call.1} parent=1 // pred_check
      _
    $region23: #{tpu_custom_call.1} parent=1 // pred_check_branch
      %72 = sbr.rel (0) target = $region25
    $region24: #{tpu_custom_call.1} parent=1 // pred_region
      %74 = dma.done [#allocation9], 512
    $region25: #{tpu_custom_call.1} parent=1 // pred_fallthru
      _
    // Predicated region
    $region26: #{tpu_custom_call.1} parent=1 // pred_check
      _
    $region27: #{tpu_custom_call.1} parent=1 // pred_check_branch
      %76 = sbr.rel (0) target = $region29
    $region28: #{tpu_custom_call.1} parent=1 // pred_region
      %78 = dma.done [#allocation9], 64
    $region29: #{tpu_custom_call.1} parent=1 // pred_fallthru
      _
    // Predicated region
    $region30: #{tpu_custom_call.1} parent=1 // pred_check
      _
    $region31: #{tpu_custom_call.1} parent=1 // pred_check_branch
      %80 = sbr.rel (0) target = $region33
    $region32: #{tpu_custom_call.1} parent=1 // pred_region
      %82 = dma.done [#allocation12], 4096
    $region33: #{tpu_custom_call.1} parent=1 // pred_fallthru
      _
    %p84 = scmp.eq.s32.totalorder 0, 0
    // Predicated region
    $region34: #{tpu_custom_call.1} parent=1 // pred_check
      %p85 = pneg %p84
    $region35: #{tpu_custom_call.1} parent=1 // pred_check_branch
      %87 = sbr.rel (%p85) target = $region37
    $region36: #{tpu_custom_call.1} parent=1 // pred_region
      %88 = vst [vmem:[#allocation3] sm:$0xff] 0.0
      %89 = vst [vmem:[#allocation4] sm:$0xff] 0.0
    $region37: #{tpu_custom_call.1} parent=1 // pred_fallthru
      _
    %v90 = vld [vmem:[#allocation5] sm:$0xf]
    %v91 = vld [vmem:[#allocation8] sm:$0xff]
    %v92 = vld [vmem:[#allocation8 + $0x8] sm:$0xff]
    %v93 = vld [vmem:[#allocation8 + $0x10] sm:$0xff]
    %v94 = vld [vmem:[#allocation8 + $0x18] sm:$0xff]
    %v95 = vld [vmem:[#allocation10] sm:$0xf]
    %v97 = vperm.slane %v95, 0
    %v98 = vperm.slane %v95, 1
    %v99 = vperm.slane %v95, 2
    %v100 = vperm.slane %v95, 3
    %v109 = vunpack.c.l.b16 %v91
    %v110 = vunpack.c.h.b16 %v91
    %v111 = vunpack.c.l.b16 %v92
    %v112 = vunpack.c.h.b16 %v92
    %v113 = vunpack.c.l.b16 %v93
    %v114 = vunpack.c.h.b16 %v93
    %v115 = vunpack.c.l.b16 %v94
    %v116 = vunpack.c.h.b16 %v94
    %v117 = vpack.c.b16 %v113, %v109
    %v118 = vpack.c.b16 %v114, %v110
    %v119 = vpack.c.b16 %v115, %v111
    %v120 = vpack.c.b16 %v116, %v112
    %vm125 = vcmask 130048
    %v127 = vsel %vm125, %v90, 0
    %129 = vmatpush.bf16.msra.mxu0 0
    %130 = vmatpush.bf16.msra.mxu0 0
    %131 = vmatpush.bf16.msra.mxu0 0
    %132 = vmatpush.bf16.msra.mxu0 0
    %133 = vmatpush.bf16.msra.mxu0 0
    %134 = vmatpush.bf16.msra.mxu0 0
    %135 = vmatpush.bf16.msra.mxu0 0
    %136 = vmatpush.bf16.msra.mxu0 %v117
    %137 = vmatmul.bf16.gmra.mxu0 %v127
    %v138 = vpop.f32.mrf.mxu0
    %v139 = vadd.f32 %v97, %v138
    %v140 = vpop.f32.mrf.mxu0
    %141 = vdwg.mxu0
    %142 = vmatpush.bf16.msra.mxu0 0
    %143 = vmatpush.bf16.msra.mxu0 0
    %144 = vmatpush.bf16.msra.mxu0 0
    %145 = vmatpush.bf16.msra.mxu0 0
    %146 = vmatpush.bf16.msra.mxu0 0
    %147 = vmatpush.bf16.msra.mxu0 0
    %148 = vmatpush.bf16.msra.mxu0 0
    %149 = vmatpush.bf16.msra.mxu0 %v118
    %150 = vmatmul.bf16.gmra.mxu0 %v127
    %v151 = vpop.f32.mrf.mxu0
    %v152 = vadd.f32 %v98, %v151
    %v153 = vpop.f32.mrf.mxu0
    %154 = vdwg.mxu0
    %155 = vmatpush.bf16.msra.mxu0 0
    %156 = vmatpush.bf16.msra.mxu0 0
    %157 = vmatpush.bf16.msra.mxu0 0
    %158 = vmatpush.bf16.msra.mxu0 0
    %159 = vmatpush.bf16.msra.mxu0 0
    %160 = vmatpush.bf16.msra.mxu0 0
    %161 = vmatpush.bf16.msra.mxu0 0
    %162 = vmatpush.bf16.msra.mxu0 %v119
    %163 = vmatmul.bf16.gmra.mxu0 %v127
    %v164 = vpop.f32.mrf.mxu0
    %v165 = vadd.f32 %v99, %v164
    %v166 = vpop.f32.mrf.mxu0
    %167 = vdwg.mxu0
    %168 = vmatpush.bf16.msra.mxu0 0
    %169 = vmatpush.bf16.msra.mxu0 0
    %170 = vmatpush.bf16.msra.mxu0 0
    %171 = vmatpush.bf16.msra.mxu0 0
    %172 = vmatpush.bf16.msra.mxu0 0
    %173 = vmatpush.bf16.msra.mxu0 0
    %174 = vmatpush.bf16.msra.mxu0 0
    %175 = vmatpush.bf16.msra.mxu0 %v120
    %176 = vmatmul.bf16.gmra.mxu0 %v127
    %v177 = vpop.f32.mrf.mxu0
    %v178 = vadd.f32 %v100, %v177
    %v179 = vpop.f32.mrf.mxu0
    %180 = vdwg.mxu0
    %181 = vst [vmem:[#allocation2] sm:$0xff] %v139
    %182 = vst [vmem:[#allocation2 + $0x8] sm:$0xff] %v152
    %183 = vst [vmem:[#allocation2 + $0x10] sm:$0xff] %v165
    %184 = vst [vmem:[#allocation2 + $0x18] sm:$0xff] %v178
    %s185 = scalar_lea.vmem [#allocation5], 4
    %v186 = vld [vmem:[%s185] sm:$0xf]
    %v187 = vld [vmem:[#allocation8] sm:$0xff]
    %v188 = vld [vmem:[#allocation8 + $0x8] sm:$0xff]
    %v189 = vld [vmem:[#allocation8 + $0x10] sm:$0xff]
    %v190 = vld [vmem:[#allocation8 + $0x18] sm:$0xff]
    %v191 = vld [vmem:[#allocation10] sm:$0xf]
    %v193 = vperm.slane %v191, 0
    %v194 = vperm.slane %v191, 1
    %v195 = vperm.slane %v191, 2
    %v196 = vperm.slane %v191, 3
    %v205 = vunpack.c.l.b16 %v187
    %v206 = vunpack.c.h.b16 %v187
    %v207 = vunpack.c.l.b16 %v188
    %v208 = vunpack.c.h.b16 %v188
    %v209 = vunpack.c.l.b16 %v189
    %v210 = vunpack.c.h.b16 %v189
    %v211 = vunpack.c.l.b16 %v190
    %v212 = vunpack.c.h.b16 %v190
    %v213 = vpack.c.b16 %v209, %v205
    %v214 = vpack.c.b16 %v210, %v206
    %v215 = vpack.c.b16 %v211, %v207
    %v216 = vpack.c.b16 %v212, %v208
    %v222 = vsel %vm125, %v186, 0
    %224 = vmatpush.bf16.msra.mxu0 0
    %225 = vmatpush.bf16.msra.mxu0 0
    %226 = vmatpush.bf16.msra.mxu0 0
    %227 = vmatpush.bf16.msra.mxu0 0
    %228 = vmatpush.bf16.msra.mxu0 0
    %229 = vmatpush.bf16.msra.mxu0 0
    %230 = vmatpush.bf16.msra.mxu0 0
    %231 = vmatpush.bf16.msra.mxu0 %v213
    %232 = vmatmul.bf16.gmra.mxu0 %v222
    %v233 = vpop.f32.mrf.mxu0
    %v234 = vadd.f32 %v193, %v233
    %v235 = vpop.f32.mrf.mxu0
    %236 = vdwg.mxu0
    %237 = vmatpush.bf16.msra.mxu0 0
    %238 = vmatpush.bf16.msra.mxu0 0
    %239 = vmatpush.bf16.msra.mxu0 0
    %240 = vmatpush.bf16.msra.mxu0 0
    %241 = vmatpush.bf16.msra.mxu0 0
    %242 = vmatpush.bf16.msra.mxu0 0
    %243 = vmatpush.bf16.msra.mxu0 0
    %244 = vmatpush.bf16.msra.mxu0 %v214
    %245 = vmatmul.bf16.gmra.mxu0 %v222
    %v246 = vpop.f32.mrf.mxu0
    %v247 = vadd.f32 %v194, %v246
    %v248 = vpop.f32.mrf.mxu0
    %249 = vdwg.mxu0
    %250 = vmatpush.bf16.msra.mxu0 0
    %251 = vmatpush.bf16.msra.mxu0 0
    %252 = vmatpush.bf16.msra.mxu0 0
    %253 = vmatpush.bf16.msra.mxu0 0
    %254 = vmatpush.bf16.msra.mxu0 0
    %255 = vmatpush.bf16.msra.mxu0 0
    %256 = vmatpush.bf16.msra.mxu0 0
    %257 = vmatpush.bf16.msra.mxu0 %v215
    %258 = vmatmul.bf16.gmra.mxu0 %v222
    %v259 = vpop.f32.mrf.mxu0
    %v260 = vadd.f32 %v195, %v259
    %v261 = vpop.f32.mrf.mxu0
    %262 = vdwg.mxu0
    %263 = vmatpush.bf16.msra.mxu0 0
    %264 = vmatpush.bf16.msra.mxu0 0
    %265 = vmatpush.bf16.msra.mxu0 0
    %266 = vmatpush.bf16.msra.mxu0 0
    %267 = vmatpush.bf16.msra.mxu0 0
    %268 = vmatpush.bf16.msra.mxu0 0
    %269 = vmatpush.bf16.msra.mxu0 0
    %270 = vmatpush.bf16.msra.mxu0 %v216
    %271 = vmatmul.bf16.gmra.mxu0 %v222
    %v272 = vpop.f32.mrf.mxu0
    %v273 = vadd.f32 %v196, %v272
    %v274 = vpop.f32.mrf.mxu0
    %275 = vdwg.mxu0
    %s276 = scalar_lea.vmem [#allocation2], 32
    %277 = vst [vmem:[%s276] sm:$0xff] %v234
    %278 = vst [vmem:[%s276 + $0x8] sm:$0xff] %v247
    %279 = vst [vmem:[%s276 + $0x10] sm:$0xff] %v260
    %280 = vst [vmem:[%s276 + $0x18] sm:$0xff] %v273
    %s281 = scalar_lea.vmem [#allocation5], 8
    %v282 = vld [vmem:[%s281] sm:$0xf]
    %v283 = vld [vmem:[#allocation8] sm:$0xff]
    %v284 = vld [vmem:[#allocation8 + $0x8] sm:$0xff]
    %v285 = vld [vmem:[#allocation8 + $0x10] sm:$0xff]
    %v286 = vld [vmem:[#allocation8 + $0x18] sm:$0xff]
    %v287 = vld [vmem:[#allocation10] sm:$0xf]
    %v289 = vperm.slane %v287, 0
    %v290 = vperm.slane %v287, 1
    %v291 = vperm.slane %v287, 2
    %v292 = vperm.slane %v287, 3
    %v301 = vunpack.c.l.b16 %v283
    %v302 = vunpack.c.h.b16 %v283
    %v303 = vunpack.c.l.b16 %v284
    %v304 = vunpack.c.h.b16 %v284
    %v305 = vunpack.c.l.b16 %v285
    %v306 = vunpack.c.h.b16 %v285
    %v307 = vunpack.c.l.b16 %v286
    %v308 = vunpack.c.h.b16 %v286
    %v309 = vpack.c.b16 %v305, %v301
    %v310 = vpack.c.b16 %v306, %v302
    %v311 = vpack.c.b16 %v307, %v303
    %v312 = vpack.c.b16 %v308, %v304
    %v318 = vsel %vm125, %v282, 0
    %320 = vmatpush.bf16.msra.mxu0 0
    %321 = vmatpush.bf16.msra.mxu0 0
    %322 = vmatpush.bf16.msra.mxu0 0
    %323 = vmatpush.bf16.msra.mxu0 0
    %324 = vmatpush.bf16.msra.mxu0 0
    %325 = vmatpush.bf16.msra.mxu0 0
    %326 = vmatpush.bf16.msra.mxu0 0
    %327 = vmatpush.bf16.msra.mxu0 %v309
    %328 = vmatmul.bf16.gmra.mxu0 %v318
    %v329 = vpop.f32.mrf.mxu0
    %v330 = vadd.f32 %v289, %v329
    %v331 = vpop.f32.mrf.mxu0
    %332 = vdwg.mxu0
    %333 = vmatpush.bf16.msra.mxu0 0
    %334 = vmatpush.bf16.msra.mxu0 0
    %335 = vmatpush.bf16.msra.mxu0 0
    %336 = vmatpush.bf16.msra.mxu0 0
    %337 = vmatpush.bf16.msra.mxu0 0
    %338 = vmatpush.bf16.msra.mxu0 0
    %339 = vmatpush.bf16.msra.mxu0 0
    %340 = vmatpush.bf16.msra.mxu0 %v310
    %341 = vmatmul.bf16.gmra.mxu0 %v318
    %v342 = vpop.f32.mrf.mxu0
    %v343 = vadd.f32 %v290, %v342
    %v344 = vpop.f32.mrf.mxu0
    %345 = vdwg.mxu0
    %346 = vmatpush.bf16.msra.mxu0 0
    %347 = vmatpush.bf16.msra.mxu0 0
    %348 = vmatpush.bf16.msra.mxu0 0
    %349 = vmatpush.bf16.msra.mxu0 0
    %350 = vmatpush.bf16.msra.mxu0 0
    %351 = vmatpush.bf16.msra.mxu0 0
    %352 = vmatpush.bf16.msra.mxu0 0
    %353 = vmatpush.bf16.msra.mxu0 %v311
    %354 = vmatmul.bf16.gmra.mxu0 %v318
    %v355 = vpop.f32.mrf.mxu0
    %v356 = vadd.f32 %v291, %v355
    %v357 = vpop.f32.mrf.mxu0
    %358 = vdwg.mxu0
    %359 = vmatpush.bf16.msra.mxu0 0
    %360 = vmatpush.bf16.msra.mxu0 0
    %361 = vmatpush.bf16.msra.mxu0 0
    %362 = vmatpush.bf16.msra.mxu0 0
    %363 = vmatpush.bf16.msra.mxu0 0
    %364 = vmatpush.bf16.msra.mxu0 0
    %365 = vmatpush.bf16.msra.mxu0 0
    %366 = vmatpush.bf16.msra.mxu0 %v312
    %367 = vmatmul.bf16.gmra.mxu0 %v318
    %v368 = vpop.f32.mrf.mxu0
    %v369 = vadd.f32 %v292, %v368
    %v370 = vpop.f32.mrf.mxu0
    %371 = vdwg.mxu0
    %s372 = scalar_lea.vmem [#allocation2], 64
    %373 = vst [vmem:[%s372] sm:$0xff] %v330
    %374 = vst [vmem:[%s372 + $0x8] sm:$0xff] %v343
    %375 = vst [vmem:[%s372 + $0x10] sm:$0xff] %v356
    %376 = vst [vmem:[%s372 + $0x18] sm:$0xff] %v369
    %s377 = scalar_lea.vmem [#allocation5], 12
    %v378 = vld [vmem:[%s377] sm:$0xf]
    %v379 = vld [vmem:[#allocation8] sm:$0xff]
    %v380 = vld [vmem:[#allocation8 + $0x8] sm:$0xff]
    %v381 = vld [vmem:[#allocation8 + $0x10] sm:$0xff]
    %v382 = vld [vmem:[#allocation8 + $0x18] sm:$0xff]
    %v383 = vld [vmem:[#allocation10] sm:$0xf]
    %v385 = vperm.slane %v383, 0
    %v386 = vperm.slane %v383, 1
    %v387 = vperm.slane %v383, 2
    %v388 = vperm.slane %v383, 3
    %v397 = vunpack.c.l.b16 %v379
    %v398 = vunpack.c.h.b16 %v379
    %v399 = vunpack.c.l.b16 %v380
    %v400 = vunpack.c.h.b16 %v380
    %v401 = vunpack.c.l.b16 %v381
    %v402 = vunpack.c.h.b16 %v381
    %v403 = vunpack.c.l.b16 %v382
    %v404 = vunpack.c.h.b16 %v382
    %v405 = vpack.c.b16 %v401, %v397
    %v406 = vpack.c.b16 %v402, %v398
    %v407 = vpack.c.b16 %v403, %v399
    %v408 = vpack.c.b16 %v404, %v400
    %v414 = vsel %vm125, %v378, 0
    %416 = vmatpush.bf16.msra.mxu0 0
    %417 = vmatpush.bf16.msra.mxu0 0
    %418 = vmatpush.bf16.msra.mxu0 0
    %419 = vmatpush.bf16.msra.mxu0 0
    %420 = vmatpush.bf16.msra.mxu0 0
    %421 = vmatpush.bf16.msra.mxu0 0
    %422 = vmatpush.bf16.msra.mxu0 0
    %423 = vmatpush.bf16.msra.mxu0 %v405
    %424 = vmatmul.bf16.gmra.mxu0 %v414
    %v425 = vpop.f32.mrf.mxu0
    %v426 = vadd.f32 %v385, %v425
    %v427 = vpop.f32.mrf.mxu0
    %428 = vdwg.mxu0
    %429 = vmatpush.bf16.msra.mxu0 0
    %430 = vmatpush.bf16.msra.mxu0 0
    %431 = vmatpush.bf16.msra.mxu0 0
    %432 = vmatpush.bf16.msra.mxu0 0
    %433 = vmatpush.bf16.msra.mxu0 0
    %434 = vmatpush.bf16.msra.mxu0 0
    %435 = vmatpush.bf16.msra.mxu0 0
    %436 = vmatpush.bf16.msra.mxu0 %v406
    %437 = vmatmul.bf16.gmra.mxu0 %v414
    %v438 = vpop.f32.mrf.mxu0
    %v439 = vadd.f32 %v386, %v438
    %v440 = vpop.f32.mrf.mxu0
    %441 = vdwg.mxu0
    %442 = vmatpush.bf16.msra.mxu0 0
    %443 = vmatpush.bf16.msra.mxu0 0
    %444 = vmatpush.bf16.msra.mxu0 0
    %445 = vmatpush.bf16.msra.mxu0 0
    %446 = vmatpush.bf16.msra.mxu0 0
    %447 = vmatpush.bf16.msra.mxu0 0
    %448 = vmatpush.bf16.msra.mxu0 0
    %449 = vmatpush.bf16.msra.mxu0 %v407
    %450 = vmatmul.bf16.gmra.mxu0 %v414
    %v451 = vpop.f32.mrf.mxu0
    %v452 = vadd.f32 %v387, %v451
    %v453 = vpop.f32.mrf.mxu0
    %454 = vdwg.mxu0
    %455 = vmatpush.bf16.msra.mxu0 0
    %456 = vmatpush.bf16.msra.mxu0 0
    %457 = vmatpush.bf16.msra.mxu0 0
    %458 = vmatpush.bf16.msra.mxu0 0
    %459 = vmatpush.bf16.msra.mxu0 0
    %460 = vmatpush.bf16.msra.mxu0 0
    %461 = vmatpush.bf16.msra.mxu0 0
    %462 = vmatpush.bf16.msra.mxu0 %v408
    %463 = vmatmul.bf16.gmra.mxu0 %v414
    %v464 = vpop.f32.mrf.mxu0
    %v465 = vadd.f32 %v388, %v464
    %v466 = vpop.f32.mrf.mxu0
    %467 = vdwg.mxu0
    %s468 = scalar_lea.vmem [#allocation2], 96
    %469 = vst [vmem:[%s468] sm:$0xff] %v426
    %470 = vst [vmem:[%s468 + $0x8] sm:$0xff] %v439
    %471 = vst [vmem:[%s468 + $0x10] sm:$0xff] %v452
    %472 = vst [vmem:[%s468 + $0x18] sm:$0xff] %v465
    %s473 = scalar_lea.vmem [#allocation5], 16
    %v474 = vld [vmem:[%s473] sm:$0xf]
    %v475 = vld [vmem:[#allocation8] sm:$0xff]
    %v476 = vld [vmem:[#allocation8 + $0x8] sm:$0xff]
    %v477 = vld [vmem:[#allocation8 + $0x10] sm:$0xff]
    %v478 = vld [vmem:[#allocation8 + $0x18] sm:$0xff]
    %v479 = vld [vmem:[#allocation10] sm:$0xf]
    %v481 = vperm.slane %v479, 0
    %v482 = vperm.slane %v479, 1
    %v483 = vperm.slane %v479, 2
    %v484 = vperm.slane %v479, 3
    %v493 = vunpack.c.l.b16 %v475
    %v494 = vunpack.c.h.b16 %v475
    %v495 = vunpack.c.l.b16 %v476
    %v496 = vunpack.c.h.b16 %v476
    %v497 = vunpack.c.l.b16 %v477
    %v498 = vunpack.c.h.b16 %v477
    %v499 = vunpack.c.l.b16 %v478
    %v500 = vunpack.c.h.b16 %v478
    %v501 = vpack.c.b16 %v497, %v493
    %v502 = vpack.c.b16 %v498, %v494
    %v503 = vpack.c.b16 %v499, %v495
    %v504 = vpack.c.b16 %v500, %v496
    %v510 = vsel %vm125, %v474, 0
    %512 = vmatpush.bf16.msra.mxu0 0
    %513 = vmatpush.bf16.msra.mxu0 0
    %514 = vmatpush.bf16.msra.mxu0 0
    %515 = vmatpush.bf16.msra.mxu0 0
    %516 = vmatpush.bf16.msra.mxu0 0
    %517 = vmatpush.bf16.msra.mxu0 0
    %518 = vmatpush.bf16.msra.mxu0 0
    %519 = vmatpush.bf16.msra.mxu0 %v501
    %520 = vmatmul.bf16.gmra.mxu0 %v510
    %v521 = vpop.f32.mrf.mxu0
    %v522 = vadd.f32 %v481, %v521
    %v523 = vpop.f32.mrf.mxu0
    %524 = vdwg.mxu0
    %525 = vmatpush.bf16.msra.mxu0 0
    %526 = vmatpush.bf16.msra.mxu0 0
    %527 = vmatpush.bf16.msra.mxu0 0
    %528 = vmatpush.bf16.msra.mxu0 0
    %529 = vmatpush.bf16.msra.mxu0 0
    %530 = vmatpush.bf16.msra.mxu0 0
    %531 = vmatpush.bf16.msra.mxu0 0
    %532 = vmatpush.bf16.msra.mxu0 %v502
    %533 = vmatmul.bf16.gmra.mxu0 %v510
    %v534 = vpop.f32.mrf.mxu0
    %v535 = vadd.f32 %v482, %v534
    %v536 = vpop.f32.mrf.mxu0
    %537 = vdwg.mxu0
    %538 = vmatpush.bf16.msra.mxu0 0
    %539 = vmatpush.bf16.msra.mxu0 0
    %540 = vmatpush.bf16.msra.mxu0 0
    %541 = vmatpush.bf16.msra.mxu0 0
    %542 = vmatpush.bf16.msra.mxu0 0
    %543 = vmatpush.bf16.msra.mxu0 0
    %544 = vmatpush.bf16.msra.mxu0 0
    %545 = vmatpush.bf16.msra.mxu0 %v503
    %546 = vmatmul.bf16.gmra.mxu0 %v510
    %v547 = vpop.f32.mrf.mxu0
    %v548 = vadd.f32 %v483, %v547
    %v549 = vpop.f32.mrf.mxu0
    %550 = vdwg.mxu0
    %551 = vmatpush.bf16.msra.mxu0 0
    %552 = vmatpush.bf16.msra.mxu0 0
    %553 = vmatpush.bf16.msra.mxu0 0
    %554 = vmatpush.bf16.msra.mxu0 0
    %555 = vmatpush.bf16.msra.mxu0 0
    %556 = vmatpush.bf16.msra.mxu0 0
    %557 = vmatpush.bf16.msra.mxu0 0
    %558 = vmatpush.bf16.msra.mxu0 %v504
    %559 = vmatmul.bf16.gmra.mxu0 %v510
    %v560 = vpop.f32.mrf.mxu0
    %v561 = vadd.f32 %v484, %v560
    %v562 = vpop.f32.mrf.mxu0
    %563 = vdwg.mxu0
    %s564 = scalar_lea.vmem [#allocation2], 128
    %565 = vst [vmem:[%s564] sm:$0xff] %v522
    %566 = vst [vmem:[%s564 + $0x8] sm:$0xff] %v535
    %567 = vst [vmem:[%s564 + $0x10] sm:$0xff] %v548
    %568 = vst [vmem:[%s564 + $0x18] sm:$0xff] %v561
    %s569 = scalar_lea.vmem [#allocation5], 20
    %v570 = vld [vmem:[%s569] sm:$0xf]
    %v571 = vld [vmem:[#allocation8] sm:$0xff]
    %v572 = vld [vmem:[#allocation8 + $0x8] sm:$0xff]
    %v573 = vld [vmem:[#allocation8 + $0x10] sm:$0xff]
    %v574 = vld [vmem:[#allocation8 + $0x18] sm:$0xff]
    %v575 = vld [vmem:[#allocation10] sm:$0xf]
    %v577 = vperm.slane %v575, 0
    %v578 = vperm.slane %v575, 1
    %v579 = vperm.slane %v575, 2
    %v580 = vperm.slane %v575, 3
    %v589 = vunpack.c.l.b16 %v571
    %v590 = vunpack.c.h.b16 %v571
    %v591 = vunpack.c.l.b16 %v572
    %v592 = vunpack.c.h.b16 %v572
    %v593 = vunpack.c.l.b16 %v573
    %v594 = vunpack.c.h.b16 %v573
    %v595 = vunpack.c.l.b16 %v574
    %v596 = vunpack.c.h.b16 %v574
    %v597 = vpack.c.b16 %v593, %v589
    %v598 = vpack.c.b16 %v594, %v590
    %v599 = vpack.c.b16 %v595, %v591
    %v600 = vpack.c.b16 %v596, %v592
    %v606 = vsel %vm125, %v570, 0
    %608 = vmatpush.bf16.msra.mxu0 0
    %609 = vmatpush.bf16.msra.mxu0 0
    %610 = vmatpush.bf16.msra.mxu0 0
    %611 = vmatpush.bf16.msra.mxu0 0
    %612 = vmatpush.bf16.msra.mxu0 0
    %613 = vmatpush.bf16.msra.mxu0 0
    %614 = vmatpush.bf16.msra.mxu0 0
    %615 = vmatpush.bf16.msra.mxu0 %v597
    %616 = vmatmul.bf16.gmra.mxu0 %v606
    %v617 = vpop.f32.mrf.mxu0
    %v618 = vadd.f32 %v577, %v617
    %v619 = vpop.f32.mrf.mxu0
    %620 = vdwg.mxu0
    %621 = vmatpush.bf16.msra.mxu0 0
    %622 = vmatpush.bf16.msra.mxu0 0
    %623 = vmatpush.bf16.msra.mxu0 0
    %624 = vmatpush.bf16.msra.mxu0 0
    %625 = vmatpush.bf16.msra.mxu0 0
    %626 = vmatpush.bf16.msra.mxu0 0
    %627 = vmatpush.bf16.msra.mxu0 0
    %628 = vmatpush.bf16.msra.mxu0 %v598
    %629 = vmatmul.bf16.gmra.mxu0 %v606
    %v630 = vpop.f32.mrf.mxu0
    %v631 = vadd.f32 %v578, %v630
    %v632 = vpop.f32.mrf.mxu0
    %633 = vdwg.mxu0
    %634 = vmatpush.bf16.msra.mxu0 0
    %635 = vmatpush.bf16.msra.mxu0 0
    %636 = vmatpush.bf16.msra.mxu0 0
    %637 = vmatpush.bf16.msra.mxu0 0
    %638 = vmatpush.bf16.msra.mxu0 0
    %639 = vmatpush.bf16.msra.mxu0 0
    %640 = vmatpush.bf16.msra.mxu0 0
    %641 = vmatpush.bf16.msra.mxu0 %v599
    %642 = vmatmul.bf16.gmra.mxu0 %v606
    %v643 = vpop.f32.mrf.mxu0
    %v644 = vadd.f32 %v579, %v643
    %v645 = vpop.f32.mrf.mxu0
    %646 = vdwg.mxu0
    %647 = vmatpush.bf16.msra.mxu0 0
    %648 = vmatpush.bf16.msra.mxu0 0
    %649 = vmatpush.bf16.msra.mxu0 0
    %650 = vmatpush.bf16.msra.mxu0 0
    %651 = vmatpush.bf16.msra.mxu0 0
    %652 = vmatpush.bf16.msra.mxu0 0
    %653 = vmatpush.bf16.msra.mxu0 0
    %654 = vmatpush.bf16.msra.mxu0 %v600
    %655 = vmatmul.bf16.gmra.mxu0 %v606
    %v656 = vpop.f32.mrf.mxu0
    %v657 = vadd.f32 %v580, %v656
    %v658 = vpop.f32.mrf.mxu0
    %659 = vdwg.mxu0
    %s660 = scalar_lea.vmem [#allocation2], 160
    %661 = vst [vmem:[%s660] sm:$0xff] %v618
    %662 = vst [vmem:[%s660 + $0x8] sm:$0xff] %v631
    %663 = vst [vmem:[%s660 + $0x10] sm:$0xff] %v644
    %664 = vst [vmem:[%s660 + $0x18] sm:$0xff] %v657
    %s665 = scalar_lea.vmem [#allocation5], 24
    %v666 = vld [vmem:[%s665] sm:$0xf]
    %v667 = vld [vmem:[#allocation8] sm:$0xff]
    %v668 = vld [vmem:[#allocation8 + $0x8] sm:$0xff]
    %v669 = vld [vmem:[#allocation8 + $0x10] sm:$0xff]
    %v670 = vld [vmem:[#allocation8 + $0x18] sm:$0xff]
    %v671 = vld [vmem:[#allocation10] sm:$0xf]
    %v673 = vperm.slane %v671, 0
    %v674 = vperm.slane %v671, 1
    %v675 = vperm.slane %v671, 2
    %v676 = vperm.slane %v671, 3
    %v685 = vunpack.c.l.b16 %v667
    %v686 = vunpack.c.h.b16 %v667
    %v687 = vunpack.c.l.b16 %v668
    %v688 = vunpack.c.h.b16 %v668
    %v689 = vunpack.c.l.b16 %v669
    %v690 = vunpack.c.h.b16 %v669
    %v691 = vunpack.c.l.b16 %v670
    %v692 = vunpack.c.h.b16 %v670
    %v693 = vpack.c.b16 %v689, %v685
    %v694 = vpack.c.b16 %v690, %v686
    %v695 = vpack.c.b16 %v691, %v687
    %v696 = vpack.c.b16 %v692, %v688
    %v702 = vsel %vm125, %v666, 0
    %704 = vmatpush.bf16.msra.mxu0 0
    %705 = vmatpush.bf16.msra.mxu0 0
    %706 = vmatpush.bf16.msra.mxu0 0
    %707 = vmatpush.bf16.msra.mxu0 0
    %708 = vmatpush.bf16.msra.mxu0 0
    %709 = vmatpush.bf16.msra.mxu0 0
    %710 = vmatpush.bf16.msra.mxu0 0
    %711 = vmatpush.bf16.msra.mxu0 %v693
    %712 = vmatmul.bf16.gmra.mxu0 %v702
    %v713 = vpop.f32.mrf.mxu0
    %v714 = vadd.f32 %v673, %v713
    %v715 = vpop.f32.mrf.mxu0
    %716 = vdwg.mxu0
    %717 = vmatpush.bf16.msra.mxu0 0
    %718 = vmatpush.bf16.msra.mxu0 0
    %719 = vmatpush.bf16.msra.mxu0 0
    %720 = vmatpush.bf16.msra.mxu0 0
    %721 = vmatpush.bf16.msra.mxu0 0
    %722 = vmatpush.bf16.msra.mxu0 0
    %723 = vmatpush.bf16.msra.mxu0 0
    %724 = vmatpush.bf16.msra.mxu0 %v694
    %725 = vmatmul.bf16.gmra.mxu0 %v702
    %v726 = vpop.f32.mrf.mxu0
    %v727 = vadd.f32 %v674, %v726
    %v728 = vpop.f32.mrf.mxu0
    %729 = vdwg.mxu0
    %730 = vmatpush.bf16.msra.mxu0 0
    %731 = vmatpush.bf16.msra.mxu0 0
    %732 = vmatpush.bf16.msra.mxu0 0
    %733 = vmatpush.bf16.msra.mxu0 0
    %734 = vmatpush.bf16.msra.mxu0 0
    %735 = vmatpush.bf16.msra.mxu0 0
    %736 = vmatpush.bf16.msra.mxu0 0
    %737 = vmatpush.bf16.msra.mxu0 %v695
    %738 = vmatmul.bf16.gmra.mxu0 %v702
    %v739 = vpop.f32.mrf.mxu0
    %v740 = vadd.f32 %v675, %v739
    %v741 = vpop.f32.mrf.mxu0
    %742 = vdwg.mxu0
    %743 = vmatpush.bf16.msra.mxu0 0
    %744 = vmatpush.bf16.msra.mxu0 0
    %745 = vmatpush.bf16.msra.mxu0 0
    %746 = vmatpush.bf16.msra.mxu0 0
    %747 = vmatpush.bf16.msra.mxu0 0
    %748 = vmatpush.bf16.msra.mxu0 0
    %749 = vmatpush.bf16.msra.mxu0 0
    %750 = vmatpush.bf16.msra.mxu0 %v696
    %751 = vmatmul.bf16.gmra.mxu0 %v702
    %v752 = vpop.f32.mrf.mxu0
    %v753 = vadd.f32 %v676, %v752
    %v754 = vpop.f32.mrf.mxu0
    %755 = vdwg.mxu0
    %s756 = scalar_lea.vmem [#allocation2], 192
    %757 = vst [vmem:[%s756] sm:$0xff] %v714
    %758 = vst [vmem:[%s756 + $0x8] sm:$0xff] %v727
    %759 = vst [vmem:[%s756 + $0x10] sm:$0xff] %v740
    %760 = vst [vmem:[%s756 + $0x18] sm:$0xff] %v753
    %s761 = scalar_lea.vmem [#allocation5], 28
    %v762 = vld [vmem:[%s761] sm:$0xf]
    %v763 = vld [vmem:[#allocation8] sm:$0xff]
    %v764 = vld [vmem:[#allocation8 + $0x8] sm:$0xff]
    %v765 = vld [vmem:[#allocation8 + $0x10] sm:$0xff]
    %v766 = vld [vmem:[#allocation8 + $0x18] sm:$0xff]
    %v767 = vld [vmem:[#allocation10] sm:$0xf]
    %v769 = vperm.slane %v767, 0
    %v770 = vperm.slane %v767, 1
    %v771 = vperm.slane %v767, 2
    %v772 = vperm.slane %v767, 3
    %v781 = vunpack.c.l.b16 %v763
    %v782 = vunpack.c.h.b16 %v763
    %v783 = vunpack.c.l.b16 %v764
    %v784 = vunpack.c.h.b16 %v764
    %v785 = vunpack.c.l.b16 %v765
    %v786 = vunpack.c.h.b16 %v765
    %v787 = vunpack.c.l.b16 %v766
    %v788 = vunpack.c.h.b16 %v766
    %v789 = vpack.c.b16 %v785, %v781
    %v790 = vpack.c.b16 %v786, %v782
    %v791 = vpack.c.b16 %v787, %v783
    %v792 = vpack.c.b16 %v788, %v784
    %v798 = vsel %vm125, %v762, 0
    %800 = vmatpush.bf16.msra.mxu0 0
    %801 = vmatpush.bf16.msra.mxu0 0
    %802 = vmatpush.bf16.msra.mxu0 0
    %803 = vmatpush.bf16.msra.mxu0 0
    %804 = vmatpush.bf16.msra.mxu0 0
    %805 = vmatpush.bf16.msra.mxu0 0
    %806 = vmatpush.bf16.msra.mxu0 0
    %807 = vmatpush.bf16.msra.mxu0 %v789
    %808 = vmatmul.bf16.gmra.mxu0 %v798
    %v809 = vpop.f32.mrf.mxu0
    %v810 = vadd.f32 %v769, %v809
    %v811 = vpop.f32.mrf.mxu0
    %812 = vdwg.mxu0
    %813 = vmatpush.bf16.msra.mxu0 0
    %814 = vmatpush.bf16.msra.mxu0 0
    %815 = vmatpush.bf16.msra.mxu0 0
    %816 = vmatpush.bf16.msra.mxu0 0
    %817 = vmatpush.bf16.msra.mxu0 0
    %818 = vmatpush.bf16.msra.mxu0 0
    %819 = vmatpush.bf16.msra.mxu0 0
    %820 = vmatpush.bf16.msra.mxu0 %v790
    %821 = vmatmul.bf16.gmra.mxu0 %v798
    %v822 = vpop.f32.mrf.mxu0
    %v823 = vadd.f32 %v770, %v822
    %v824 = vpop.f32.mrf.mxu0
    %825 = vdwg.mxu0
    %826 = vmatpush.bf16.msra.mxu0 0
    %827 = vmatpush.bf16.msra.mxu0 0
    %828 = vmatpush.bf16.msra.mxu0 0
    %829 = vmatpush.bf16.msra.mxu0 0
    %830 = vmatpush.bf16.msra.mxu0 0
    %831 = vmatpush.bf16.msra.mxu0 0
    %832 = vmatpush.bf16.msra.mxu0 0
    %833 = vmatpush.bf16.msra.mxu0 %v791
    %834 = vmatmul.bf16.gmra.mxu0 %v798
    %v835 = vpop.f32.mrf.mxu0
    %v836 = vadd.f32 %v771, %v835
    %v837 = vpop.f32.mrf.mxu0
    %838 = vdwg.mxu0
    %839 = vmatpush.bf16.msra.mxu0 0
    %840 = vmatpush.bf16.msra.mxu0 0
    %841 = vmatpush.bf16.msra.mxu0 0
    %842 = vmatpush.bf16.msra.mxu0 0
    %843 = vmatpush.bf16.msra.mxu0 0
    %844 = vmatpush.bf16.msra.mxu0 0
    %845 = vmatpush.bf16.msra.mxu0 0
    %846 = vmatpush.bf16.msra.mxu0 %v792
    %847 = vmatmul.bf16.gmra.mxu0 %v798
    %v848 = vpop.f32.mrf.mxu0
    %v849 = vadd.f32 %v772, %v848
    %v850 = vpop.f32.mrf.mxu0
    %851 = vdwg.mxu0
    %s852 = scalar_lea.vmem [#allocation2], 224
    %853 = vst [vmem:[%s852] sm:$0xff] %v810
    %854 = vst [vmem:[%s852 + $0x8] sm:$0xff] %v823
    %855 = vst [vmem:[%s852 + $0x10] sm:$0xff] %v836
    %856 = vst [vmem:[%s852 + $0x18] sm:$0xff] %v849
    %v857 = vld [vmem:[#allocation2] sm:$0xff]
    %v858 = vld [vmem:[#allocation2 + $0x8] sm:$0xff]
    %v859 = vld [vmem:[#allocation2 + $0x10] sm:$0xff]
    %v860 = vld [vmem:[#allocation2 + $0x18] sm:$0xff]
    %v861 = vld [vmem:[#allocation3] sm:$0xff]
    %v862 = vpack.c.bf16 %v861, %v861
    %v863 = vld [vmem:[#allocation11] sm:$0xff]
    %v864 = vld [vmem:[#allocation11 + $0x8] sm:$0xff]
    %v865 = vld [vmem:[#allocation11 + $0x10] sm:$0xff]
    %v866 = vld [vmem:[#allocation11 + $0x18] sm:$0xff]
    %v867 = vld [vmem:[#allocation11 + $0x20] sm:$0xff]
    %v868 = vld [vmem:[#allocation11 + $0x28] sm:$0xff]
    %v869 = vld [vmem:[#allocation11 + $0x30] sm:$0xff]
    %v870 = vld [vmem:[#allocation11 + $0x38] sm:$0xff]
    %v871 = vld [vmem:[#allocation11 + $0x40] sm:$0xff]
    %v872 = vld [vmem:[#allocation11 + $0x48] sm:$0xff]
    %v873 = vld [vmem:[#allocation11 + $0x50] sm:$0xff]
    %v874 = vld [vmem:[#allocation11 + $0x58] sm:$0xff]
    %v875 = vld [vmem:[#allocation11 + $0x60] sm:$0xff]
    %v876 = vld [vmem:[#allocation11 + $0x68] sm:$0xff]
    %v877 = vld [vmem:[#allocation11 + $0x70] sm:$0xff]
    %v878 = vld [vmem:[#allocation11 + $0x78] sm:$0xff]
    %v879 = vld [vmem:[#allocation11 + $0x80] sm:$0xff]
    %v880 = vld [vmem:[#allocation11 + $0x88] sm:$0xff]
    %v881 = vld [vmem:[#allocation11 + $0x90] sm:$0xff]
    %v882 = vld [vmem:[#allocation11 + $0x98] sm:$0xff]
    %v883 = vld [vmem:[#allocation11 + $0xa0] sm:$0xff]
    %v884 = vld [vmem:[#allocation11 + $0xa8] sm:$0xff]
    %v885 = vld [vmem:[#allocation11 + $0xb0] sm:$0xff]
    %v886 = vld [vmem:[#allocation11 + $0xb8] sm:$0xff]
    %v887 = vld [vmem:[#allocation11 + $0xc0] sm:$0xff]
    %v888 = vld [vmem:[#allocation11 + $0xc8] sm:$0xff]
    %v889 = vld [vmem:[#allocation11 + $0xd0] sm:$0xff]
    %v890 = vld [vmem:[#allocation11 + $0xd8] sm:$0xff]
    %v891 = vld [vmem:[#allocation11 + $0xe0] sm:$0xff]
    %v892 = vld [vmem:[#allocation11 + $0xe8] sm:$0xff]
    %v893 = vld [vmem:[#allocation11 + $0xf0] sm:$0xff]
    %v894 = vld [vmem:[#allocation11 + $0xf8] sm:$0xff]
    %v927 = vunpack.c.l.b16 %v863
    %v928 = vunpack.c.h.b16 %v863
    %v929 = vunpack.c.l.b16 %v864
    %v930 = vunpack.c.h.b16 %v864
    %v931 = vunpack.c.l.b16 %v865
    %v932 = vunpack.c.h.b16 %v865
    %v933 = vunpack.c.l.b16 %v866
    %v934 = vunpack.c.h.b16 %v866
    %v935 = vunpack.c.l.b16 %v867
    %v936 = vunpack.c.h.b16 %v867
    %v937 = vunpack.c.l.b16 %v868
    %v938 = vunpack.c.h.b16 %v868
    %v939 = vunpack.c.l.b16 %v869
    %v940 = vunpack.c.h.b16 %v869
    %v941 = vunpack.c.l.b16 %v870
    %v942 = vunpack.c.h.b16 %v870
    %v943 = vunpack.c.l.b16 %v871
    %v944 = vunpack.c.h.b16 %v871
    %v945 = vunpack.c.l.b16 %v872
    %v946 = vunpack.c.h.b16 %v872
    %v947 = vunpack.c.l.b16 %v873
    %v948 = vunpack.c.h.b16 %v873
    %v949 = vunpack.c.l.b16 %v874
    %v950 = vunpack.c.h.b16 %v874
    %v951 = vunpack.c.l.b16 %v875
    %v952 = vunpack.c.h.b16 %v875
    %v953 = vunpack.c.l.b16 %v876
    %v954 = vunpack.c.h.b16 %v876
    %v955 = vunpack.c.l.b16 %v877
    %v956 = vunpack.c.h.b16 %v877
    %v957 = vunpack.c.l.b16 %v878
    %v958 = vunpack.c.h.b16 %v878
    %v959 = vunpack.c.l.b16 %v879
    %v960 = vunpack.c.h.b16 %v879
    %v961 = vunpack.c.l.b16 %v880
    %v962 = vunpack.c.h.b16 %v880
    %v963 = vunpack.c.l.b16 %v881
    %v964 = vunpack.c.h.b16 %v881
    %v965 = vunpack.c.l.b16 %v882
    %v966 = vunpack.c.h.b16 %v882
    %v967 = vunpack.c.l.b16 %v883
    %v968 = vunpack.c.h.b16 %v883
    %v969 = vunpack.c.l.b16 %v884
    %v970 = vunpack.c.h.b16 %v884
    %v971 = vunpack.c.l.b16 %v885
    %v972 = vunpack.c.h.b16 %v885
    %v973 = vunpack.c.l.b16 %v886
    %v974 = vunpack.c.h.b16 %v886
    %v975 = vunpack.c.l.b16 %v887
    %v976 = vunpack.c.h.b16 %v887
    %v977 = vunpack.c.l.b16 %v888
    %v978 = vunpack.c.h.b16 %v888
    %v979 = vunpack.c.l.b16 %v889
    %v980 = vunpack.c.h.b16 %v889
    %v981 = vunpack.c.l.b16 %v890
    %v982 = vunpack.c.h.b16 %v890
    %v983 = vunpack.c.l.b16 %v891
    %v984 = vunpack.c.h.b16 %v891
    %v985 = vunpack.c.l.b16 %v892
    %v986 = vunpack.c.h.b16 %v892
    %v987 = vunpack.c.l.b16 %v893
    %v988 = vunpack.c.h.b16 %v893
    %v989 = vunpack.c.l.b16 %v894
    %v990 = vunpack.c.h.b16 %v894
    %v991 = vpack.c.b16 %v931, %v927
    %v992 = vpack.c.b16 %v932, %v928
    %v993 = vpack.c.b16 %v933, %v929
    %v994 = vpack.c.b16 %v934, %v930
    %v995 = vpack.c.b16 %v939, %v935
    %v996 = vpack.c.b16 %v940, %v936
    %v997 = vpack.c.b16 %v941, %v937
    %v998 = vpack.c.b16 %v942, %v938
    %v999 = vpack.c.b16 %v947, %v943
    %v1000 = vpack.c.b16 %v948, %v944
    %v1001 = vpack.c.b16 %v949, %v945
    %v1002 = vpack.c.b16 %v950, %v946
    %v1003 = vpack.c.b16 %v955, %v951
    %v1004 = vpack.c.b16 %v956, %v952
    %v1005 = vpack.c.b16 %v957, %v953
    %v1006 = vpack.c.b16 %v958, %v954
    %v1007 = vpack.c.b16 %v963, %v959
    %v1008 = vpack.c.b16 %v964, %v960
    %v1009 = vpack.c.b16 %v965, %v961
    %v1010 = vpack.c.b16 %v966, %v962
    %v1011 = vpack.c.b16 %v971, %v967
    %v1012 = vpack.c.b16 %v972, %v968
    %v1013 = vpack.c.b16 %v973, %v969
    %v1014 = vpack.c.b16 %v974, %v970
    %v1015 = vpack.c.b16 %v979, %v975
    %v1016 = vpack.c.b16 %v980, %v976
    %v1017 = vpack.c.b16 %v981, %v977
    %v1018 = vpack.c.b16 %v982, %v978
    %v1019 = vpack.c.b16 %v987, %v983
    %v1020 = vpack.c.b16 %v988, %v984
    %v1021 = vpack.c.b16 %v989, %v985
    %v1022 = vpack.c.b16 %v990, %v986
    %1055 = vmatpush.bf16.msra.mxu0 %v1019
    %1056 = vmatpush.bf16.msra.mxu0 %v1015
    %1057 = vmatpush.bf16.msra.mxu0 %v1011
    %1058 = vmatpush.bf16.msra.mxu0 %v1007
    %1059 = vmatpush.bf16.msra.mxu0 %v1003
    %1060 = vmatpush.bf16.msra.mxu0 %v999
    %1061 = vmatpush.bf16.msra.mxu0 %v995
    %1062 = vmatpush.bf16.msra.mxu0 %v991
    %1063 = vmatmul.bf16.gmra.mxu0 %v862
    %v1064 = vpop.f32.mrf.mxu0
    %v1065 = vadd.f32 0.0, %v1064
    %v1066 = vpop.f32.mrf.mxu0
    %1067 = vdwg.mxu0
    %1068 = vmatpush.bf16.msra.mxu0 %v1020
    %1069 = vmatpush.bf16.msra.mxu0 %v1016
    %1070 = vmatpush.bf16.msra.mxu0 %v1012
    %1071 = vmatpush.bf16.msra.mxu0 %v1008
    %1072 = vmatpush.bf16.msra.mxu0 %v1004
    %1073 = vmatpush.bf16.msra.mxu0 %v1000
    %1074 = vmatpush.bf16.msra.mxu0 %v996
    %1075 = vmatpush.bf16.msra.mxu0 %v992
    %1076 = vmatmul.bf16.gmra.mxu0 %v862
    %v1077 = vpop.f32.mrf.mxu0
    %v1078 = vadd.f32 0.0, %v1077
    %v1079 = vpop.f32.mrf.mxu0
    %1080 = vdwg.mxu0
    %1081 = vmatpush.bf16.msra.mxu0 %v1021
    %1082 = vmatpush.bf16.msra.mxu0 %v1017
    %1083 = vmatpush.bf16.msra.mxu0 %v1013
    %1084 = vmatpush.bf16.msra.mxu0 %v1009
    %1085 = vmatpush.bf16.msra.mxu0 %v1005
    %1086 = vmatpush.bf16.msra.mxu0 %v1001
    %1087 = vmatpush.bf16.msra.mxu0 %v997
    %1088 = vmatpush.bf16.msra.mxu0 %v993
    %1089 = vmatmul.bf16.gmra.mxu0 %v862
    %v1090 = vpop.f32.mrf.mxu0
    %v1091 = vadd.f32 0.0, %v1090
    %v1092 = vpop.f32.mrf.mxu0
    %1093 = vdwg.mxu0
    %1094 = vmatpush.bf16.msra.mxu0 %v1022
    %1095 = vmatpush.bf16.msra.mxu0 %v1018
    %1096 = vmatpush.bf16.msra.mxu0 %v1014
    %1097 = vmatpush.bf16.msra.mxu0 %v1010
    %1098 = vmatpush.bf16.msra.mxu0 %v1006
    %1099 = vmatpush.bf16.msra.mxu0 %v1002
    %1100 = vmatpush.bf16.msra.mxu0 %v998
    %1101 = vmatpush.bf16.msra.mxu0 %v994
    %1102 = vmatmul.bf16.gmra.mxu0 %v862
    %v1103 = vpop.f32.mrf.mxu0
    %v1104 = vadd.f32 0.0, %v1103
    %v1105 = vpop.f32.mrf.mxu0
    %1106 = vdwg.mxu0
    %v1107 = vadd.f32 %v857, %v1065
    %v1108 = vadd.f32 %v858, %v1078
    %v1109 = vadd.f32 %v859, %v1091
    %v1110 = vadd.f32 %v860, %v1104
    %v1111 = vxor.u32 %v1107, 2147483648
    %v1112 = vxor.u32 %v1108, 2147483648
    %v1113 = vxor.u32 %v1109, 2147483648
    %v1114 = vmul.f32 %v1111, 1.442695
    %v1115 = vpow.pop %v1114
    %v1116 = vmul.f32 %v1112, 1.442695
    %v1117 = vpow.pop %v1116
    %v1118 = vmul.f32 %v1113, 1.442695
    %v1119 = vpow.pop %v1118
    %v1120 = vadd.f32 %v1115, 1.0
    %v1121 = vadd.f32 %v1117, 1.0
    %v1122 = vadd.f32 %v1119, 1.0
    %v1123 = vrcp.pop %v1120
    %v1124 = vmul.f32 %v1120, %v1123
    %v1125 = vsub.f32 1.0, %v1124
    %v1126 = vmul.f32 %v1123, %v1125
    %v1127 = vadd.f32 %v1123, %v1126
    %vm1128 = vweird.f32 %v1120
    %vm1129 = vweird.f32 %v1123
    %vm1130 = vmor %vm1128, %vm1129
    %v1131 = vsel %vm1130, %v1123, %v1127
    %v1132 = vand.u32 2147483647, %v1120
    %vm1133 = vcmp.eq.f32.partialorder %v1132, 8.507059e+37
    %v1134 = vand.u32 %v1120, 2147483648
    %v1135 = vor.u32 1.1754944e-38, %v1134
    %v1136 = vsel %vm1133, %v1135, %v1131
    %v1137 = vmul.f32 1.0, %v1136
    %v1138 = vrcp.pop %v1121
    %v1139 = vmul.f32 %v1121, %v1138
    %v1140 = vsub.f32 1.0, %v1139
    %v1141 = vmul.f32 %v1138, %v1140
    %v1142 = vadd.f32 %v1138, %v1141
    %vm1143 = vweird.f32 %v1121
    %vm1144 = vweird.f32 %v1138
    %vm1145 = vmor %vm1143, %vm1144
    %v1146 = vsel %vm1145, %v1138, %v1142
    %v1147 = vand.u32 2147483647, %v1121
    %vm1148 = vcmp.eq.f32.partialorder %v1147, 8.507059e+37
    %v1149 = vand.u32 %v1121, 2147483648
    %v1150 = vor.u32 1.1754944e-38, %v1149
    %v1151 = vsel %vm1148, %v1150, %v1146
    %v1152 = vmul.f32 1.0, %v1151
    %v1153 = vrcp.pop %v1122
    %v1154 = vmul.f32 %v1122, %v1153
    %v1155 = vsub.f32 1.0, %v1154
    %v1156 = vmul.f32 %v1153, %v1155
    %v1157 = vadd.f32 %v1153, %v1156
    %vm1158 = vweird.f32 %v1122
    %vm1159 = vweird.f32 %v1153
    %vm1160 = vmor %vm1158, %vm1159
    %v1161 = vsel %vm1160, %v1153, %v1157
    %v1162 = vand.u32 2147483647, %v1122
    %vm1163 = vcmp.eq.f32.partialorder %v1162, 8.507059e+37
    %v1164 = vand.u32 %v1122, 2147483648
    %v1165 = vor.u32 1.1754944e-38, %v1164
    %v1166 = vsel %vm1163, %v1165, %v1161
    %v1167 = vmul.f32 1.0, %v1166
    %v1168 = vtanh.pop %v1110
    %v1169 = vld [vmem:[#allocation4] sm:$0xff]
    %v1170 = vmul.f32 %v1152, %v1169
    %v1171 = vmul.f32 %v1137, %v1168
    %v1172 = vadd.f32 %v1170, %v1171
    %v1173 = vtanh.pop %v1172
    %v1174 = vmul.f32 %v1167, %v1173
    %1175 = vst [vmem:[#allocation4] sm:$0xff] %v1172
    %1176 = vst [vmem:[#allocation3] sm:$0xff] %v1174
    %1177 = vst [vmem:[#allocation13] sm:$0xff] %v1174
    %v1178 = vld [vmem:[%s276] sm:$0xff]
    %v1179 = vld [vmem:[%s276 + $0x8] sm:$0xff]
    %v1180 = vld [vmem:[%s276 + $0x10] sm:$0xff]
    %v1181 = vld [vmem:[%s276 + $0x18] sm:$0xff]
    %v1182 = vld [vmem:[#allocation3] sm:$0xff]
    %v1183 = vpack.c.bf16 %v1182, %v1182
    %v1184 = vld [vmem:[#allocation11] sm:$0xff]
    %v1185 = vld [vmem:[#allocation11 + $0x8] sm:$0xff]
    %v1186 = vld [vmem:[#allocation11 + $0x10] sm:$0xff]
    %v1187 = vld [vmem:[#allocation11 + $0x18] sm:$0xff]
    %v1188 = vld [vmem:[#allocation11 + $0x20] sm:$0xff]
    %v1189 = vld [vmem:[#allocation11 + $0x28] sm:$0xff]
    %v1190 = vld [vmem:[#allocation11 + $0x30] sm:$0xff]
    %v1191 = vld [vmem:[#allocation11 + $0x38] sm:$0xff]
    %v1192 = vld [vmem:[#allocation11 + $0x40] sm:$0xff]
    %v1193 = vld [vmem:[#allocation11 + $0x48] sm:$0xff]
    %v1194 = vld [vmem:[#allocation11 + $0x50] sm:$0xff]
    %v1195 = vld [vmem:[#allocation11 + $0x58] sm:$0xff]
    %v1196 = vld [vmem:[#allocation11 + $0x60] sm:$0xff]
    %v1197 = vld [vmem:[#allocation11 + $0x68] sm:$0xff]
    %v1198 = vld [vmem:[#allocation11 + $0x70] sm:$0xff]
    %v1199 = vld [vmem:[#allocation11 + $0x78] sm:$0xff]
    %v1200 = vld [vmem:[#allocation11 + $0x80] sm:$0xff]
    %v1201 = vld [vmem:[#allocation11 + $0x88] sm:$0xff]
    %v1202 = vld [vmem:[#allocation11 + $0x90] sm:$0xff]
    %v1203 = vld [vmem:[#allocation11 + $0x98] sm:$0xff]
    %v1204 = vld [vmem:[#allocation11 + $0xa0] sm:$0xff]
    %v1205 = vld [vmem:[#allocation11 + $0xa8] sm:$0xff]
    %v1206 = vld [vmem:[#allocation11 + $0xb0] sm:$0xff]
    %v1207 = vld [vmem:[#allocation11 + $0xb8] sm:$0xff]
    %v1208 = vld [vmem:[#allocation11 + $0xc0] sm:$0xff]
    %v1209 = vld [vmem:[#allocation11 + $0xc8] sm:$0xff]
    %v1210 = vld [vmem:[#allocation11 + $0xd0] sm:$0xff]
    %v1211 = vld [vmem:[#allocation11 + $0xd8] sm:$0xff]
    %v1212 = vld [vmem:[#allocation11 + $0xe0] sm:$0xff]
    %v1213 = vld [vmem:[#allocation11 + $0xe8] sm:$0xff]
    %v1214 = vld [vmem:[#allocation11 + $0xf0] sm:$0xff]
    %v1215 = vld [vmem:[#allocation11 + $0xf8] sm:$0xff]
    %v1248 = vunpack.c.l.b16 %v1184
    %v1249 = vunpack.c.h.b16 %v1184
    %v1250 = vunpack.c.l.b16 %v1185
    %v1251 = vunpack.c.h.b16 %v1185
    %v1252 = vunpack.c.l.b16 %v1186
    %v1253 = vunpack.c.h.b16 %v1186
    %v1254 = vunpack.c.l.b16 %v1187
    %v1255 = vunpack.c.h.b16 %v1187
    %v1256 = vunpack.c.l.b16 %v1188
    %v1257 = vunpack.c.h.b16 %v1188
    %v1258 = vunpack.c.l.b16 %v1189
    %v1259 = vunpack.c.h.b16 %v1189
    %v1260 = vunpack.c.l.b16 %v1190
    %v1261 = vunpack.c.h.b16 %v1190
    %v1262 = vunpack.c.l.b16 %v1191
    %v1263 = vunpack.c.h.b16 %v1191
    %v1264 = vunpack.c.l.b16 %v1192
    %v1265 = vunpack.c.h.b16 %v1192
    %v1266 = vunpack.c.l.b16 %v1193
    %v1267 = vunpack.c.h.b16 %v1193
    %v1268 = vunpack.c.l.b16 %v1194
    %v1269 = vunpack.c.h.b16 %v1194
    %v1270 = vunpack.c.l.b16 %v1195
    %v1271 = vunpack.c.h.b16 %v1195
    %v1272 = vunpack.c.l.b16 %v1196
    %v1273 = vunpack.c.h.b16 %v1196
    %v1274 = vunpack.c.l.b16 %v1197
    %v1275 = vunpack.c.h.b16 %v1197
    %v1276 = vunpack.c.l.b16 %v1198
    %v1277 = vunpack.c.h.b16 %v1198
    %v1278 = vunpack.c.l.b16 %v1199
    %v1279 = vunpack.c.h.b16 %v1199
    %v1280 = vunpack.c.l.b16 %v1200
    %v1281 = vunpack.c.h.b16 %v1200
    %v1282 = vunpack.c.l.b16 %v1201
    %v1283 = vunpack.c.h.b16 %v1201
    %v1284 = vunpack.c.l.b16 %v1202
    %v1285 = vunpack.c.h.b16 %v1202
    %v1286 = vunpack.c.l.b16 %v1203
    %v1287 = vunpack.c.h.b16 %v1203
    %v1288 = vunpack.c.l.b16 %v1204
    %v1289 = vunpack.c.h.b16 %v1204
    %v1290 = vunpack.c.l.b16 %v1205
    %v1291 = vunpack.c.h.b16 %v1205
    %v1292 = vunpack.c.l.b16 %v1206
    %v1293 = vunpack.c.h.b16 %v1206
    %v1294 = vunpack.c.l.b16 %v1207
    %v1295 = vunpack.c.h.b16 %v1207
    %v1296 = vunpack.c.l.b16 %v1208
    %v1297 = vunpack.c.h.b16 %v1208
    %v1298 = vunpack.c.l.b16 %v1209
    %v1299 = vunpack.c.h.b16 %v1209
    %v1300 = vunpack.c.l.b16 %v1210
    %v1301 = vunpack.c.h.b16 %v1210
    %v1302 = vunpack.c.l.b16 %v1211
    %v1303 = vunpack.c.h.b16 %v1211
    %v1304 = vunpack.c.l.b16 %v1212
    %v1305 = vunpack.c.h.b16 %v1212
    %v1306 = vunpack.c.l.b16 %v1213
    %v1307 = vunpack.c.h.b16 %v1213
    %v1308 = vunpack.c.l.b16 %v1214
    %v1309 = vunpack.c.h.b16 %v1214
    %v1310 = vunpack.c.l.b16 %v1215
    %v1311 = vunpack.c.h.b16 %v1215
    %v1312 = vpack.c.b16 %v1252, %v1248
    %v1313 = vpack.c.b16 %v1253, %v1249
    %v1314 = vpack.c.b16 %v1254, %v1250
    %v1315 = vpack.c.b16 %v1255, %v1251
    %v1316 = vpack.c.b16 %v1260, %v1256
    %v1317 = vpack.c.b16 %v1261, %v1257
    %v1318 = vpack.c.b16 %v1262, %v1258
    %v1319 = vpack.c.b16 %v1263, %v1259
    %v1320 = vpack.c.b16 %v1268, %v1264
    %v1321 = vpack.c.b16 %v1269, %v1265
    %v1322 = vpack.c.b16 %v1270, %v1266
    %v1323 = vpack.c.b16 %v1271, %v1267
    %v1324 = vpack.c.b16 %v1276, %v1272
    %v1325 = vpack.c.b16 %v1277, %v1273
    %v1326 = vpack.c.b16 %v1278, %v1274
    %v1327 = vpack.c.b16 %v1279, %v1275
    %v1328 = vpack.c.b16 %v1284, %v1280
    %v1329 = vpack.c.b16 %v1285, %v1281
    %v1330 = vpack.c.b16 %v1286, %v1282
    %v1331 = vpack.c.b16 %v1287, %v1283
    %v1332 = vpack.c.b16 %v1292, %v1288
    %v1333 = vpack.c.b16 %v1293, %v1289
    %v1334 = vpack.c.b16 %v1294, %v1290
    %v1335 = vpack.c.b16 %v1295, %v1291
    %v1336 = vpack.c.b16 %v1300, %v1296
    %v1337 = vpack.c.b16 %v1301, %v1297
    %v1338 = vpack.c.b16 %v1302, %v1298
    %v1339 = vpack.c.b16 %v1303, %v1299
    %v1340 = vpack.c.b16 %v1308, %v1304
    %v1341 = vpack.c.b16 %v1309, %v1305
    %v1342 = vpack.c.b16 %v1310, %v1306
    %v1343 = vpack.c.b16 %v1311, %v1307
    %1376 = vmatpush.bf16.msra.mxu0 %v1340
    %1377 = vmatpush.bf16.msra.mxu0 %v1336
    %1378 = vmatpush.bf16.msra.mxu0 %v1332
    %1379 = vmatpush.bf16.msra.mxu0 %v1328
    %1380 = vmatpush.bf16.msra.mxu0 %v1324
    %1381 = vmatpush.bf16.msra.mxu0 %v1320
    %1382 = vmatpush.bf16.msra.mxu0 %v1316
    %1383 = vmatpush.bf16.msra.mxu0 %v1312
    %1384 = vmatmul.bf16.gmra.mxu0 %v1183
    %v1385 = vpop.f32.mrf.mxu0
    %v1386 = vadd.f32 0.0, %v1385
    %v1387 = vpop.f32.mrf.mxu0
    %1388 = vdwg.mxu0
    %1389 = vmatpush.bf16.msra.mxu0 %v1341
    %1390 = vmatpush.bf16.msra.mxu0 %v1337
    %1391 = vmatpush.bf16.msra.mxu0 %v1333
    %1392 = vmatpush.bf16.msra.mxu0 %v1329
    %1393 = vmatpush.bf16.msra.mxu0 %v1325
    %1394 = vmatpush.bf16.msra.mxu0 %v1321
    %1395 = vmatpush.bf16.msra.mxu0 %v1317
    %1396 = vmatpush.bf16.msra.mxu0 %v1313
    %1397 = vmatmul.bf16.gmra.mxu0 %v1183
    %v1398 = vpop.f32.mrf.mxu0
    %v1399 = vadd.f32 0.0, %v1398
    %v1400 = vpop.f32.mrf.mxu0
    %1401 = vdwg.mxu0
    %1402 = vmatpush.bf16.msra.mxu0 %v1342
    %1403 = vmatpush.bf16.msra.mxu0 %v1338
    %1404 = vmatpush.bf16.msra.mxu0 %v1334
    %1405 = vmatpush.bf16.msra.mxu0 %v1330
    %1406 = vmatpush.bf16.msra.mxu0 %v1326
    %1407 = vmatpush.bf16.msra.mxu0 %v1322
    %1408 = vmatpush.bf16.msra.mxu0 %v1318
    %1409 = vmatpush.bf16.msra.mxu0 %v1314
    %1410 = vmatmul.bf16.gmra.mxu0 %v1183
    %v1411 = vpop.f32.mrf.mxu0
    %v1412 = vadd.f32 0.0, %v1411
    %v1413 = vpop.f32.mrf.mxu0
    %1414 = vdwg.mxu0
    %1415 = vmatpush.bf16.msra.mxu0 %v1343
    %1416 = vmatpush.bf16.msra.mxu0 %v1339
    %1417 = vmatpush.bf16.msra.mxu0 %v1335
    %1418 = vmatpush.bf16.msra.mxu0 %v1331
    %1419 = vmatpush.bf16.msra.mxu0 %v1327
    %1420 = vmatpush.bf16.msra.mxu0 %v1323
    %1421 = vmatpush.bf16.msra.mxu0 %v1319
    %1422 = vmatpush.bf16.msra.mxu0 %v1315
    %1423 = vmatmul.bf16.gmra.mxu0 %v1183
    %v1424 = vpop.f32.mrf.mxu0
    %v1425 = vadd.f32 0.0, %v1424
    %v1426 = vpop.f32.mrf.mxu0
    %1427 = vdwg.mxu0
    %v1428 = vadd.f32 %v1178, %v1386
    %v1429 = vadd.f32 %v1179, %v1399
    %v1430 = vadd.f32 %v1180, %v1412
    %v1431 = vadd.f32 %v1181, %v1425
    %v1432 = vxor.u32 %v1428, 2147483648
    %v1433 = vxor.u32 %v1429, 2147483648
    %v1434 = vxor.u32 %v1430, 2147483648
    %v1435 = vmul.f32 %v1432, 1.442695
    %v1436 = vpow.pop %v1435
    %v1437 = vmul.f32 %v1433, 1.442695
    %v1438 = vpow.pop %v1437
    %v1439 = vmul.f32 %v1434, 1.442695
    %v1440 = vpow.pop %v1439
    %v1441 = vadd.f32 %v1436, 1.0
    %v1442 = vadd.f32 %v1438, 1.0
    %v1443 = vadd.f32 %v1440, 1.0
    %v1444 = vrcp.pop %v1441
    %v1445 = vmul.f32 %v1441, %v1444
    %v1446 = vsub.f32 1.0, %v1445
    %v1447 = vmul.f32 %v1444, %v1446
    %v1448 = vadd.f32 %v1444, %v1447
    %vm1449 = vweird.f32 %v1441
    %vm1450 = vweird.f32 %v1444
    %vm1451 = vmor %vm1449, %vm1450
    %v1452 = vsel %vm1451, %v1444, %v1448
    %v1453 = vand.u32 2147483647, %v1441
    %vm1454 = vcmp.eq.f32.partialorder %v1453, 8.507059e+37
    %v1455 = vand.u32 %v1441, 2147483648
    %v1456 = vor.u32 1.1754944e-38, %v1455
    %v1457 = vsel %vm1454, %v1456, %v1452
    %v1458 = vmul.f32 1.0, %v1457
    %v1459 = vrcp.pop %v1442
    %v1460 = vmul.f32 %v1442, %v1459
    %v1461 = vsub.f32 1.0, %v1460
    %v1462 = vmul.f32 %v1459, %v1461
    %v1463 = vadd.f32 %v1459, %v1462
    %vm1464 = vweird.f32 %v1442
    %vm1465 = vweird.f32 %v1459
    %vm1466 = vmor %vm1464, %vm1465
    %v1467 = vsel %vm1466, %v1459, %v1463
    %v1468 = vand.u32 2147483647, %v1442
    %vm1469 = vcmp.eq.f32.partialorder %v1468, 8.507059e+37
    %v1470 = vand.u32 %v1442, 2147483648
    %v1471 = vor.u32 1.1754944e-38, %v1470
    %v1472 = vsel %vm1469, %v1471, %v1467
    %v1473 = vmul.f32 1.0, %v1472
    %v1474 = vrcp.pop %v1443
    %v1475 = vmul.f32 %v1443, %v1474
    %v1476 = vsub.f32 1.0, %v1475
    %v1477 = vmul.f32 %v1474, %v1476
    %v1478 = vadd.f32 %v1474, %v1477
    %vm1479 = vweird.f32 %v1443
    %vm1480 = vweird.f32 %v1474
    %vm1481 = vmor %vm1479, %vm1480
    %v1482 = vsel %vm1481, %v1474, %v1478
    %v1483 = vand.u32 2147483647, %v1443
    %vm1484 = vcmp.eq.f32.partialorder %v1483, 8.507059e+37
    %v1485 = vand.u32 %v1443, 2147483648
    %v1486 = vor.u32 1.1754944e-38, %v1485
    %v1487 = vsel %vm1484, %v1486, %v1482
    %v1488 = vmul.f32 1.0, %v1487
    %v1489 = vtanh.pop %v1431
    %v1490 = vld [vmem:[#allocation4] sm:$0xff]
    %v1491 = vmul.f32 %v1473, %v1490
    %v1492 = vmul.f32 %v1458, %v1489
    %v1493 = vadd.f32 %v1491, %v1492
    %v1494 = vtanh.pop %v1493
    %v1495 = vmul.f32 %v1488, %v1494
    %1496 = vst [vmem:[#allocation4] sm:$0xff] %v1493
    %1497 = vst [vmem:[#allocation3] sm:$0xff] %v1495
    %s1498 = scalar_lea.vmem [#allocation13], 8
    %1499 = vst [vmem:[%s1498] sm:$0xff] %v1495
    %v1500 = vld [vmem:[%s372] sm:$0xff]
    %v1501 = vld [vmem:[%s372 + $0x8] sm:$0xff]
    %v1502 = vld [vmem:[%s372 + $0x10] sm:$0xff]
    %v1503 = vld [vmem:[%s372 + $0x18] sm:$0xff]
    %v1504 = vld [vmem:[#allocation3] sm:$0xff]
    %v1505 = vpack.c.bf16 %v1504, %v1504
    %v1506 = vld [vmem:[#allocation11] sm:$0xff]
    %v1507 = vld [vmem:[#allocation11 + $0x8] sm:$0xff]
    %v1508 = vld [vmem:[#allocation11 + $0x10] sm:$0xff]
    %v1509 = vld [vmem:[#allocation11 + $0x18] sm:$0xff]
    %v1510 = vld [vmem:[#allocation11 + $0x20] sm:$0xff]
    %v1511 = vld [vmem:[#allocation11 + $0x28] sm:$0xff]
    %v1512 = vld [vmem:[#allocation11 + $0x30] sm:$0xff]
    %v1513 = vld [vmem:[#allocation11 + $0x38] sm:$0xff]
    %v1514 = vld [vmem:[#allocation11 + $0x40] sm:$0xff]
    %v1515 = vld [vmem:[#allocation11 + $0x48] sm:$0xff]
    %v1516 = vld [vmem:[#allocation11 + $0x50] sm:$0xff]
    %v1517 = vld [vmem:[#allocation11 + $0x58] sm:$0xff]
    %v1518 = vld [vmem:[#allocation11 + $0x60] sm:$0xff]
    %v1519 = vld [vmem:[#allocation11 + $0x68] sm:$0xff]
    %v1520 = vld [vmem:[#allocation11 + $0x70] sm:$0xff]
    %v1521 = vld [vmem:[#allocation11 + $0x78] sm:$0xff]
    %v1522 = vld [vmem:[#allocation11 + $0x80] sm:$0xff]
    %v1523 = vld [vmem:[#allocation11 + $0x88] sm:$0xff]
    %v1524 = vld [vmem:[#allocation11 + $0x90] sm:$0xff]
    %v1525 = vld [vmem:[#allocation11 + $0x98] sm:$0xff]
    %v1526 = vld [vmem:[#allocation11 + $0xa0] sm:$0xff]
    %v1527 = vld [vmem:[#allocation11 + $0xa8] sm:$0xff]
    %v1528 = vld [vmem:[#allocation11 + $0xb0] sm:$0xff]
    %v1529 = vld [vmem:[#allocation11 + $0xb8] sm:$0xff]
    %v1530 = vld [vmem:[#allocation11 + $0xc0] sm:$0xff]
    %v1531 = vld [vmem:[#allocation11 + $0xc8] sm:$0xff]
    %v1532 = vld [vmem:[#allocation11 + $0xd0] sm:$0xff]
    %v1533 = vld [vmem:[#allocation11 + $0xd8] sm:$0xff]
    %v1534 = vld [vmem:[#allocation11 + $0xe0] sm:$0xff]
    %v1535 = vld [vmem:[#allocation11 + $0xe8] sm:$0xff]
    %v1536 = vld [vmem:[#allocation11 + $0xf0] sm:$0xff]
    %v1537 = vld [vmem:[#allocation11 + $0xf8] sm:$0xff]
    %v1570 = vunpack.c.l.b16 %v1506
    %v1571 = vunpack.c.h.b16 %v1506
    %v1572 = vunpack.c.l.b16 %v1507
    %v1573 = vunpack.c.h.b16 %v1507
    %v1574 = vunpack.c.l.b16 %v1508
    %v1575 = vunpack.c.h.b16 %v1508
    %v1576 = vunpack.c.l.b16 %v1509
    %v1577 = vunpack.c.h.b16 %v1509
    %v1578 = vunpack.c.l.b16 %v1510
    %v1579 = vunpack.c.h.b16 %v1510
    %v1580 = vunpack.c.l.b16 %v1511
    %v1581 = vunpack.c.h.b16 %v1511
    %v1582 = vunpack.c.l.b16 %v1512
    %v1583 = vunpack.c.h.b16 %v1512
    %v1584 = vunpack.c.l.b16 %v1513
    %v1585 = vunpack.c.h.b16 %v1513
    %v1586 = vunpack.c.l.b16 %v1514
    %v1587 = vunpack.c.h.b16 %v1514
    %v1588 = vunpack.c.l.b16 %v1515
    %v1589 = vunpack.c.h.b16 %v1515
    %v1590 = vunpack.c.l.b16 %v1516
    %v1591 = vunpack.c.h.b16 %v1516
    %v1592 = vunpack.c.l.b16 %v1517
    %v1593 = vunpack.c.h.b16 %v1517
    %v1594 = vunpack.c.l.b16 %v1518
    %v1595 = vunpack.c.h.b16 %v1518
    %v1596 = vunpack.c.l.b16 %v1519
    %v1597 = vunpack.c.h.b16 %v1519
    %v1598 = vunpack.c.l.b16 %v1520
    %v1599 = vunpack.c.h.b16 %v1520
    %v1600 = vunpack.c.l.b16 %v1521
    %v1601 = vunpack.c.h.b16 %v1521
    %v1602 = vunpack.c.l.b16 %v1522
    %v1603 = vunpack.c.h.b16 %v1522
    %v1604 = vunpack.c.l.b16 %v1523
    %v1605 = vunpack.c.h.b16 %v1523
    %v1606 = vunpack.c.l.b16 %v1524
    %v1607 = vunpack.c.h.b16 %v1524
    %v1608 = vunpack.c.l.b16 %v1525
    %v1609 = vunpack.c.h.b16 %v1525
    %v1610 = vunpack.c.l.b16 %v1526
    %v1611 = vunpack.c.h.b16 %v1526
    %v1612 = vunpack.c.l.b16 %v1527
    %v1613 = vunpack.c.h.b16 %v1527
    %v1614 = vunpack.c.l.b16 %v1528
    %v1615 = vunpack.c.h.b16 %v1528
    %v1616 = vunpack.c.l.b16 %v1529
    %v1617 = vunpack.c.h.b16 %v1529
    %v1618 = vunpack.c.l.b16 %v1530
    %v1619 = vunpack.c.h.b16 %v1530
    %v1620 = vunpack.c.l.b16 %v1531
    %v1621 = vunpack.c.h.b16 %v1531
    %v1622 = vunpack.c.l.b16 %v1532
    %v1623 = vunpack.c.h.b16 %v1532
    %v1624 = vunpack.c.l.b16 %v1533
    %v1625 = vunpack.c.h.b16 %v1533
    %v1626 = vunpack.c.l.b16 %v1534
    %v1627 = vunpack.c.h.b16 %v1534
    %v1628 = vunpack.c.l.b16 %v1535
    %v1629 = vunpack.c.h.b16 %v1535
    %v1630 = vunpack.c.l.b16 %v1536
    %v1631 = vunpack.c.h.b16 %v1536
    %v1632 = vunpack.c.l.b16 %v1537
    %v1633 = vunpack.c.h.b16 %v1537
    %v1634 = vpack.c.b16 %v1574, %v1570
    %v1635 = vpack.c.b16 %v1575, %v1571
    %v1636 = vpack.c.b16 %v1576, %v1572
    %v1637 = vpack.c.b16 %v1577, %v1573
    %v1638 = vpack.c.b16 %v1582, %v1578
    %v1639 = vpack.c.b16 %v1583, %v1579
    %v1640 = vpack.c.b16 %v1584, %v1580
    %v1641 = vpack.c.b16 %v1585, %v1581
    %v1642 = vpack.c.b16 %v1590, %v1586
    %v1643 = vpack.c.b16 %v1591, %v1587
    %v1644 = vpack.c.b16 %v1592, %v1588
    %v1645 = vpack.c.b16 %v1593, %v1589
    %v1646 = vpack.c.b16 %v1598, %v1594
    %v1647 = vpack.c.b16 %v1599, %v1595
    %v1648 = vpack.c.b16 %v1600, %v1596
    %v1649 = vpack.c.b16 %v1601, %v1597
    %v1650 = vpack.c.b16 %v1606, %v1602
    %v1651 = vpack.c.b16 %v1607, %v1603
    %v1652 = vpack.c.b16 %v1608, %v1604
    %v1653 = vpack.c.b16 %v1609, %v1605
    %v1654 = vpack.c.b16 %v1614, %v1610
    %v1655 = vpack.c.b16 %v1615, %v1611
    %v1656 = vpack.c.b16 %v1616, %v1612
    %v1657 = vpack.c.b16 %v1617, %v1613
    %v1658 = vpack.c.b16 %v1622, %v1618
    %v1659 = vpack.c.b16 %v1623, %v1619
    %v1660 = vpack.c.b16 %v1624, %v1620
    %v1661 = vpack.c.b16 %v1625, %v1621
    %v1662 = vpack.c.b16 %v1630, %v1626
    %v1663 = vpack.c.b16 %v1631, %v1627
    %v1664 = vpack.c.b16 %v1632, %v1628
    %v1665 = vpack.c.b16 %v1633, %v1629
    %1698 = vmatpush.bf16.msra.mxu0 %v1662
    %1699 = vmatpush.bf16.msra.mxu0 %v1658
    %1700 = vmatpush.bf16.msra.mxu0 %v1654
    %1701 = vmatpush.bf16.msra.mxu0 %v1650
    %1702 = vmatpush.bf16.msra.mxu0 %v1646
    %1703 = vmatpush.bf16.msra.mxu0 %v1642
    %1704 = vmatpush.bf16.msra.mxu0 %v1638
    %1705 = vmatpush.bf16.msra.mxu0 %v1634
    %1706 = vmatmul.bf16.gmra.mxu0 %v1505
    %v1707 = vpop.f32.mrf.mxu0
    %v1708 = vadd.f32 0.0, %v1707
    %v1709 = vpop.f32.mrf.mxu0
    %1710 = vdwg.mxu0
    %1711 = vmatpush.bf16.msra.mxu0 %v1663
    %1712 = vmatpush.bf16.msra.mxu0 %v1659
    %1713 = vmatpush.bf16.msra.mxu0 %v1655
    %1714 = vmatpush.bf16.msra.mxu0 %v1651
    %1715 = vmatpush.bf16.msra.mxu0 %v1647
    %1716 = vmatpush.bf16.msra.mxu0 %v1643
    %1717 = vmatpush.bf16.msra.mxu0 %v1639
    %1718 = vmatpush.bf16.msra.mxu0 %v1635
    %1719 = vmatmul.bf16.gmra.mxu0 %v1505
    %v1720 = vpop.f32.mrf.mxu0
    %v1721 = vadd.f32 0.0, %v1720
    %v1722 = vpop.f32.mrf.mxu0
    %1723 = vdwg.mxu0
    %1724 = vmatpush.bf16.msra.mxu0 %v1664
    %1725 = vmatpush.bf16.msra.mxu0 %v1660
    %1726 = vmatpush.bf16.msra.mxu0 %v1656
    %1727 = vmatpush.bf16.msra.mxu0 %v1652
    %1728 = vmatpush.bf16.msra.mxu0 %v1648
    %1729 = vmatpush.bf16.msra.mxu0 %v1644
    %1730 = vmatpush.bf16.msra.mxu0 %v1640
    %1731 = vmatpush.bf16.msra.mxu0 %v1636
    %1732 = vmatmul.bf16.gmra.mxu0 %v1505
    %v1733 = vpop.f32.mrf.mxu0
    %v1734 = vadd.f32 0.0, %v1733
    %v1735 = vpop.f32.mrf.mxu0
    %1736 = vdwg.mxu0
    %1737 = vmatpush.bf16.msra.mxu0 %v1665
    %1738 = vmatpush.bf16.msra.mxu0 %v1661
    %1739 = vmatpush.bf16.msra.mxu0 %v1657
    %1740 = vmatpush.bf16.msra.mxu0 %v1653
    %1741 = vmatpush.bf16.msra.mxu0 %v1649
    %1742 = vmatpush.bf16.msra.mxu0 %v1645
    %1743 = vmatpush.bf16.msra.mxu0 %v1641
    %1744 = vmatpush.bf16.msra.mxu0 %v1637
    %1745 = vmatmul.bf16.gmra.mxu0 %v1505
    %v1746 = vpop.f32.mrf.mxu0
    %v1747 = vadd.f32 0.0, %v1746
    %v1748 = vpop.f32.mrf.mxu0
    %1749 = vdwg.mxu0
    %v1750 = vadd.f32 %v1500, %v1708
    %v1751 = vadd.f32 %v1501, %v1721
    %v1752 = vadd.f32 %v1502, %v1734
    %v1753 = vadd.f32 %v1503, %v1747
    %v1754 = vxor.u32 %v1750, 2147483648
    %v1755 = vxor.u32 %v1751, 2147483648
    %v1756 = vxor.u32 %v1752, 2147483648
    %v1757 = vmul.f32 %v1754, 1.442695
    %v1758 = vpow.pop %v1757
    %v1759 = vmul.f32 %v1755, 1.442695
    %v1760 = vpow.pop %v1759
    %v1761 = vmul.f32 %v1756, 1.442695
    %v1762 = vpow.pop %v1761
    %v1763 = vadd.f32 %v1758, 1.0
    %v1764 = vadd.f32 %v1760, 1.0
    %v1765 = vadd.f32 %v1762, 1.0
    %v1766 = vrcp.pop %v1763
    %v1767 = vmul.f32 %v1763, %v1766
    %v1768 = vsub.f32 1.0, %v1767
    %v1769 = vmul.f32 %v1766, %v1768
    %v1770 = vadd.f32 %v1766, %v1769
    %vm1771 = vweird.f32 %v1763
    %vm1772 = vweird.f32 %v1766
    %vm1773 = vmor %vm1771, %vm1772
    %v1774 = vsel %vm1773, %v1766, %v1770
    %v1775 = vand.u32 2147483647, %v1763
    %vm1776 = vcmp.eq.f32.partialorder %v1775, 8.507059e+37
    %v1777 = vand.u32 %v1763, 2147483648
    %v1778 = vor.u32 1.1754944e-38, %v1777
    %v1779 = vsel %vm1776, %v1778, %v1774
    %v1780 = vmul.f32 1.0, %v1779
    %v1781 = vrcp.pop %v1764
    %v1782 = vmul.f32 %v1764, %v1781
    %v1783 = vsub.f32 1.0, %v1782
    %v1784 = vmul.f32 %v1781, %v1783
    %v1785 = vadd.f32 %v1781, %v1784
    %vm1786 = vweird.f32 %v1764
    %vm1787 = vweird.f32 %v1781
    %vm1788 = vmor %vm1786, %vm1787
    %v1789 = vsel %vm1788, %v1781, %v1785
    %v1790 = vand.u32 2147483647, %v1764
    %vm1791 = vcmp.eq.f32.partialorder %v1790, 8.507059e+37
    %v1792 = vand.u32 %v1764, 2147483648
    %v1793 = vor.u32 1.1754944e-38, %v1792
    %v1794 = vsel %vm1791, %v1793, %v1789
    %v1795 = vmul.f32 1.0, %v1794
    %v1796 = vrcp.pop %v1765
    %v1797 = vmul.f32 %v1765, %v1796
    %v1798 = vsub.f32 1.0, %v1797
    %v1799 = vmul.f32 %v1796, %v1798
    %v1800 = vadd.f32 %v1796, %v1799
    %vm1801 = vweird.f32 %v1765
    %vm1802 = vweird.f32 %v1796
    %vm1803 = vmor %vm1801, %vm1802
    %v1804 = vsel %vm1803, %v1796, %v1800
    %v1805 = vand.u32 2147483647, %v1765
    %vm1806 = vcmp.eq.f32.partialorder %v1805, 8.507059e+37
    %v1807 = vand.u32 %v1765, 2147483648
    %v1808 = vor.u32 1.1754944e-38, %v1807
    %v1809 = vsel %vm1806, %v1808, %v1804
    %v1810 = vmul.f32 1.0, %v1809
    %v1811 = vtanh.pop %v1753
    %v1812 = vld [vmem:[#allocation4] sm:$0xff]
    %v1813 = vmul.f32 %v1795, %v1812
    %v1814 = vmul.f32 %v1780, %v1811
    %v1815 = vadd.f32 %v1813, %v1814
    %v1816 = vtanh.pop %v1815
    %v1817 = vmul.f32 %v1810, %v1816
    %1818 = vst [vmem:[#allocation4] sm:$0xff] %v1815
    %1819 = vst [vmem:[#allocation3] sm:$0xff] %v1817
    %s1820 = scalar_lea.vmem [#allocation13], 16
    %1821 = vst [vmem:[%s1820] sm:$0xff] %v1817
    %v1822 = vld [vmem:[%s468] sm:$0xff]
    %v1823 = vld [vmem:[%s468 + $0x8] sm:$0xff]
    %v1824 = vld [vmem:[%s468 + $0x10] sm:$0xff]
    %v1825 = vld [vmem:[%s468 + $0x18] sm:$0xff]
    %v1826 = vld [vmem:[#allocation3] sm:$0xff]
    %v1827 = vpack.c.bf16 %v1826, %v1826
    %v1828 = vld [vmem:[#allocation11] sm:$0xff]
    %v1829 = vld [vmem:[#allocation11 + $0x8] sm:$0xff]
    %v1830 = vld [vmem:[#allocation11 + $0x10] sm:$0xff]
    %v1831 = vld [vmem:[#allocation11 + $0x18] sm:$0xff]
    %v1832 = vld [vmem:[#allocation11 + $0x20] sm:$0xff]
    %v1833 = vld [vmem:[#allocation11 + $0x28] sm:$0xff]
    %v1834 = vld [vmem:[#allocation11 + $0x30] sm:$0xff]
    %v1835 = vld [vmem:[#allocation11 + $0x38] sm:$0xff]
    %v1836 = vld [vmem:[#allocation11 + $0x40] sm:$0xff]
    %v1837 = vld [vmem:[#allocation11 + $0x48] sm:$0xff]
    %v1838 = vld [vmem:[#allocation11 + $0x50] sm:$0xff]
    %v1839 = vld [vmem:[#allocation11 + $0x58] sm:$0xff]
    %v1840 = vld [vmem:[#allocation11 + $0x60] sm:$0xff]
    %v1841 = vld [vmem:[#allocation11 + $0x68] sm:$0xff]
    %v1842 = vld [vmem:[#allocation11 + $0x70] sm:$0xff]
    %v1843 = vld [vmem:[#allocation11 + $0x78] sm:$0xff]
    %v1844 = vld [vmem:[#allocation11 + $0x80] sm:$0xff]
    %v1845 = vld [vmem:[#allocation11 + $0x88] sm:$0xff]
    %v1846 = vld [vmem:[#allocation11 + $0x90] sm:$0xff]
    %v1847 = vld [vmem:[#allocation11 + $0x98] sm:$0xff]
    %v1848 = vld [vmem:[#allocation11 + $0xa0] sm:$0xff]
    %v1849 = vld [vmem:[#allocation11 + $0xa8] sm:$0xff]
    %v1850 = vld [vmem:[#allocation11 + $0xb0] sm:$0xff]
    %v1851 = vld [vmem:[#allocation11 + $0xb8] sm:$0xff]
    %v1852 = vld [vmem:[#allocation11 + $0xc0] sm:$0xff]
    %v1853 = vld [vmem:[#allocation11 + $0xc8] sm:$0xff]
    %v1854 = vld [vmem:[#allocation11 + $0xd0] sm:$0xff]
    %v1855 = vld [vmem:[#allocation11 + $0xd8] sm:$0xff]
    %v1856 = vld [vmem:[#allocation11 + $0xe0] sm:$0xff]
    %v1857 = vld [vmem:[#allocation11 + $0xe8] sm:$0xff]
    %v1858 = vld [vmem:[#allocation11 + $0xf0] sm:$0xff]
    %v1859 = vld [vmem:[#allocation11 + $0xf8] sm:$0xff]
    %v1892 = vunpack.c.l.b16 %v1828
    %v1893 = vunpack.c.h.b16 %v1828
    %v1894 = vunpack.c.l.b16 %v1829
    %v1895 = vunpack.c.h.b16 %v1829
    %v1896 = vunpack.c.l.b16 %v1830
    %v1897 = vunpack.c.h.b16 %v1830
    %v1898 = vunpack.c.l.b16 %v1831
    %v1899 = vunpack.c.h.b16 %v1831
    %v1900 = vunpack.c.l.b16 %v1832
    %v1901 = vunpack.c.h.b16 %v1832
    %v1902 = vunpack.c.l.b16 %v1833
    %v1903 = vunpack.c.h.b16 %v1833
    %v1904 = vunpack.c.l.b16 %v1834
    %v1905 = vunpack.c.h.b16 %v1834
    %v1906 = vunpack.c.l.b16 %v1835
    %v1907 = vunpack.c.h.b16 %v1835
    %v1908 = vunpack.c.l.b16 %v1836
    %v1909 = vunpack.c.h.b16 %v1836
    %v1910 = vunpack.c.l.b16 %v1837
    %v1911 = vunpack.c.h.b16 %v1837
    %v1912 = vunpack.c.l.b16 %v1838
    %v1913 = vunpack.c.h.b16 %v1838
    %v1914 = vunpack.c.l.b16 %v1839
    %v1915 = vunpack.c.h.b16 %v1839
    %v1916 = vunpack.c.l.b16 %v1840
    %v1917 = vunpack.c.h.b16 %v1840
    %v1918 = vunpack.c.l.b16 %v1841
    %v1919 = vunpack.c.h.b16 %v1841
    %v1920 = vunpack.c.l.b16 %v1842
    %v1921 = vunpack.c.h.b16 %v1842
    %v1922 = vunpack.c.l.b16 %v1843
    %v1923 = vunpack.c.h.b16 %v1843
    %v1924 = vunpack.c.l.b16 %v1844
    %v1925 = vunpack.c.h.b16 %v1844
    %v1926 = vunpack.c.l.b16 %v1845
    %v1927 = vunpack.c.h.b16 %v1845
    %v1928 = vunpack.c.l.b16 %v1846
    %v1929 = vunpack.c.h.b16 %v1846
    %v1930 = vunpack.c.l.b16 %v1847
    %v1931 = vunpack.c.h.b16 %v1847
    %v1932 = vunpack.c.l.b16 %v1848
    %v1933 = vunpack.c.h.b16 %v1848
    %v1934 = vunpack.c.l.b16 %v1849
    %v1935 = vunpack.c.h.b16 %v1849
    %v1936 = vunpack.c.l.b16 %v1850
    %v1937 = vunpack.c.h.b16 %v1850
    %v1938 = vunpack.c.l.b16 %v1851
    %v1939 = vunpack.c.h.b16 %v1851
    %v1940 = vunpack.c.l.b16 %v1852
    %v1941 = vunpack.c.h.b16 %v1852
    %v1942 = vunpack.c.l.b16 %v1853
    %v1943 = vunpack.c.h.b16 %v1853
    %v1944 = vunpack.c.l.b16 %v1854
    %v1945 = vunpack.c.h.b16 %v1854
    %v1946 = vunpack.c.l.b16 %v1855
    %v1947 = vunpack.c.h.b16 %v1855
    %v1948 = vunpack.c.l.b16 %v1856
    %v1949 = vunpack.c.h.b16 %v1856
    %v1950 = vunpack.c.l.b16 %v1857
    %v1951 = vunpack.c.h.b16 %v1857
    %v1952 = vunpack.c.l.b16 %v1858
    %v1953 = vunpack.c.h.b16 %v1858
    %v1954 = vunpack.c.l.b16 %v1859
    %v1955 = vunpack.c.h.b16 %v1859
    %v1956 = vpack.c.b16 %v1896, %v1892
    %v1957 = vpack.c.b16 %v1897, %v1893
    %v1958 = vpack.c.b16 %v1898, %v1894
    %v1959 = vpack.c.b16 %v1899, %v1895
    %v1960 = vpack.c.b16 %v1904, %v1900
    %v1961 = vpack.c.b16 %v1905, %v1901
    %v1962 = vpack.c.b16 %v1906, %v1902
    %v1963 = vpack.c.b16 %v1907, %v1903
    %v1964 = vpack.c.b16 %v1912, %v1908
    %v1965 = vpack.c.b16 %v1913, %v1909
    %v1966 = vpack.c.b16 %v1914, %v1910
    %v1967 = vpack.c.b16 %v1915, %v1911
    %v1968 = vpack.c.b16 %v1920, %v1916
    %v1969 = vpack.c.b16 %v1921, %v1917
    %v1970 = vpack.c.b16 %v1922, %v1918
    %v1971 = vpack.c.b16 %v1923, %v1919
    %v1972 = vpack.c.b16 %v1928, %v1924
    %v1973 = vpack.c.b16 %v1929, %v1925
    %v1974 = vpack.c.b16 %v1930, %v1926
    %v1975 = vpack.c.b16 %v1931, %v1927
    %v1976 = vpack.c.b16 %v1936, %v1932
    %v1977 = vpack.c.b16 %v1937, %v1933
    %v1978 = vpack.c.b16 %v1938, %v1934
    %v1979 = vpack.c.b16 %v1939, %v1935
    %v1980 = vpack.c.b16 %v1944, %v1940
    %v1981 = vpack.c.b16 %v1945, %v1941
    %v1982 = vpack.c.b16 %v1946, %v1942
    %v1983 = vpack.c.b16 %v1947, %v1943
    %v1984 = vpack.c.b16 %v1952, %v1948
    %v1985 = vpack.c.b16 %v1953, %v1949
    %v1986 = vpack.c.b16 %v1954, %v1950
    %v1987 = vpack.c.b16 %v1955, %v1951
    %2020 = vmatpush.bf16.msra.mxu0 %v1984
    %2021 = vmatpush.bf16.msra.mxu0 %v1980
    %2022 = vmatpush.bf16.msra.mxu0 %v1976
    %2023 = vmatpush.bf16.msra.mxu0 %v1972
    %2024 = vmatpush.bf16.msra.mxu0 %v1968
    %2025 = vmatpush.bf16.msra.mxu0 %v1964
    %2026 = vmatpush.bf16.msra.mxu0 %v1960
    %2027 = vmatpush.bf16.msra.mxu0 %v1956
    %2028 = vmatmul.bf16.gmra.mxu0 %v1827
    %v2029 = vpop.f32.mrf.mxu0
    %v2030 = vadd.f32 0.0, %v2029
    %v2031 = vpop.f32.mrf.mxu0
    %2032 = vdwg.mxu0
    %2033 = vmatpush.bf16.msra.mxu0 %v1985
    %2034 = vmatpush.bf16.msra.mxu0 %v1981
    %2035 = vmatpush.bf16.msra.mxu0 %v1977
    %2036 = vmatpush.bf16.msra.mxu0 %v1973
    %2037 = vmatpush.bf16.msra.mxu0 %v1969
    %2038 = vmatpush.bf16.msra.mxu0 %v1965
    %2039 = vmatpush.bf16.msra.mxu0 %v1961
    %2040 = vmatpush.bf16.msra.mxu0 %v1957
    %2041 = vmatmul.bf16.gmra.mxu0 %v1827
    %v2042 = vpop.f32.mrf.mxu0
    %v2043 = vadd.f32 0.0, %v2042
    %v2044 = vpop.f32.mrf.mxu0
    %2045 = vdwg.mxu0
    %2046 = vmatpush.bf16.msra.mxu0 %v1986
    %2047 = vmatpush.bf16.msra.mxu0 %v1982
    %2048 = vmatpush.bf16.msra.mxu0 %v1978
    %2049 = vmatpush.bf16.msra.mxu0 %v1974
    %2050 = vmatpush.bf16.msra.mxu0 %v1970
    %2051 = vmatpush.bf16.msra.mxu0 %v1966
    %2052 = vmatpush.bf16.msra.mxu0 %v1962
    %2053 = vmatpush.bf16.msra.mxu0 %v1958
    %2054 = vmatmul.bf16.gmra.mxu0 %v1827
    %v2055 = vpop.f32.mrf.mxu0
    %v2056 = vadd.f32 0.0, %v2055
    %v2057 = vpop.f32.mrf.mxu0
    %2058 = vdwg.mxu0
    %2059 = vmatpush.bf16.msra.mxu0 %v1987
    %2060 = vmatpush.bf16.msra.mxu0 %v1983
    %2061 = vmatpush.bf16.msra.mxu0 %v1979
    %2062 = vmatpush.bf16.msra.mxu0 %v1975
    %2063 = vmatpush.bf16.msra.mxu0 %v1971
    %2064 = vmatpush.bf16.msra.mxu0 %v1967
    %2065 = vmatpush.bf16.msra.mxu0 %v1963
    %2066 = vmatpush.bf16.msra.mxu0 %v1959
    %2067 = vmatmul.bf16.gmra.mxu0 %v1827
    %v2068 = vpop.f32.mrf.mxu0
    %v2069 = vadd.f32 0.0, %v2068
    %v2070 = vpop.f32.mrf.mxu0
    %2071 = vdwg.mxu0
    %v2072 = vadd.f32 %v1822, %v2030
    %v2073 = vadd.f32 %v1823, %v2043
    %v2074 = vadd.f32 %v1824, %v2056
    %v2075 = vadd.f32 %v1825, %v2069
    %v2076 = vxor.u32 %v2072, 2147483648
    %v2077 = vxor.u32 %v2073, 2147483648
    %v2078 = vxor.u32 %v2074, 2147483648
    %v2079 = vmul.f32 %v2076, 1.442695
    %v2080 = vpow.pop %v2079
    %v2081 = vmul.f32 %v2077, 1.442695
    %v2082 = vpow.pop %v2081
    %v2083 = vmul.f32 %v2078, 1.442695
    %v2084 = vpow.pop %v2083
    %v2085 = vadd.f32 %v2080, 1.0
    %v2086 = vadd.f32 %v2082, 1.0
    %v2087 = vadd.f32 %v2084, 1.0
    %v2088 = vrcp.pop %v2085
    %v2089 = vmul.f32 %v2085, %v2088
    %v2090 = vsub.f32 1.0, %v2089
    %v2091 = vmul.f32 %v2088, %v2090
    %v2092 = vadd.f32 %v2088, %v2091
    %vm2093 = vweird.f32 %v2085
    %vm2094 = vweird.f32 %v2088
    %vm2095 = vmor %vm2093, %vm2094
    %v2096 = vsel %vm2095, %v2088, %v2092
    %v2097 = vand.u32 2147483647, %v2085
    %vm2098 = vcmp.eq.f32.partialorder %v2097, 8.507059e+37
    %v2099 = vand.u32 %v2085, 2147483648
    %v2100 = vor.u32 1.1754944e-38, %v2099
    %v2101 = vsel %vm2098, %v2100, %v2096
    %v2102 = vmul.f32 1.0, %v2101
    %v2103 = vrcp.pop %v2086
    %v2104 = vmul.f32 %v2086, %v2103
    %v2105 = vsub.f32 1.0, %v2104
    %v2106 = vmul.f32 %v2103, %v2105
    %v2107 = vadd.f32 %v2103, %v2106
    %vm2108 = vweird.f32 %v2086
    %vm2109 = vweird.f32 %v2103
    %vm2110 = vmor %vm2108, %vm2109
    %v2111 = vsel %vm2110, %v2103, %v2107
    %v2112 = vand.u32 2147483647, %v2086
    %vm2113 = vcmp.eq.f32.partialorder %v2112, 8.507059e+37
    %v2114 = vand.u32 %v2086, 2147483648
    %v2115 = vor.u32 1.1754944e-38, %v2114
    %v2116 = vsel %vm2113, %v2115, %v2111
    %v2117 = vmul.f32 1.0, %v2116
    %v2118 = vrcp.pop %v2087
    %v2119 = vmul.f32 %v2087, %v2118
    %v2120 = vsub.f32 1.0, %v2119
    %v2121 = vmul.f32 %v2118, %v2120
    %v2122 = vadd.f32 %v2118, %v2121
    %vm2123 = vweird.f32 %v2087
    %vm2124 = vweird.f32 %v2118
    %vm2125 = vmor %vm2123, %vm2124
    %v2126 = vsel %vm2125, %v2118, %v2122
    %v2127 = vand.u32 2147483647, %v2087
    %vm2128 = vcmp.eq.f32.partialorder %v2127, 8.507059e+37
    %v2129 = vand.u32 %v2087, 2147483648
    %v2130 = vor.u32 1.1754944e-38, %v2129
    %v2131 = vsel %vm2128, %v2130, %v2126
    %v2132 = vmul.f32 1.0, %v2131
    %v2133 = vtanh.pop %v2075
    %v2134 = vld [vmem:[#allocation4] sm:$0xff]
    %v2135 = vmul.f32 %v2117, %v2134
    %v2136 = vmul.f32 %v2102, %v2133
    %v2137 = vadd.f32 %v2135, %v2136
    %v2138 = vtanh.pop %v2137
    %v2139 = vmul.f32 %v2132, %v2138
    %2140 = vst [vmem:[#allocation4] sm:$0xff] %v2137
    %2141 = vst [vmem:[#allocation3] sm:$0xff] %v2139
    %s2142 = scalar_lea.vmem [#allocation13], 24
    %2143 = vst [vmem:[%s2142] sm:$0xff] %v2139
    %v2144 = vld [vmem:[%s564] sm:$0xff]
    %v2145 = vld [vmem:[%s564 + $0x8] sm:$0xff]
    %v2146 = vld [vmem:[%s564 + $0x10] sm:$0xff]
    %v2147 = vld [vmem:[%s564 + $0x18] sm:$0xff]
    %v2148 = vld [vmem:[#allocation3] sm:$0xff]
    %v2149 = vpack.c.bf16 %v2148, %v2148
    %v2150 = vld [vmem:[#allocation11] sm:$0xff]
    %v2151 = vld [vmem:[#allocation11 + $0x8] sm:$0xff]
    %v2152 = vld [vmem:[#allocation11 + $0x10] sm:$0xff]
    %v2153 = vld [vmem:[#allocation11 + $0x18] sm:$0xff]
    %v2154 = vld [vmem:[#allocation11 + $0x20] sm:$0xff]
    %v2155 = vld [vmem:[#allocation11 + $0x28] sm:$0xff]
    %v2156 = vld [vmem:[#allocation11 + $0x30] sm:$0xff]
    %v2157 = vld [vmem:[#allocation11 + $0x38] sm:$0xff]
    %v2158 = vld [vmem:[#allocation11 + $0x40] sm:$0xff]
    %v2159 = vld [vmem:[#allocation11 + $0x48] sm:$0xff]
    %v2160 = vld [vmem:[#allocation11 + $0x50] sm:$0xff]
    %v2161 = vld [vmem:[#allocation11 + $0x58] sm:$0xff]
    %v2162 = vld [vmem:[#allocation11 + $0x60] sm:$0xff]
    %v2163 = vld [vmem:[#allocation11 + $0x68] sm:$0xff]
    %v2164 = vld [vmem:[#allocation11 + $0x70] sm:$0xff]
    %v2165 = vld [vmem:[#allocation11 + $0x78] sm:$0xff]
    %v2166 = vld [vmem:[#allocation11 + $0x80] sm:$0xff]
    %v2167 = vld [vmem:[#allocation11 + $0x88] sm:$0xff]
    %v2168 = vld [vmem:[#allocation11 + $0x90] sm:$0xff]
    %v2169 = vld [vmem:[#allocation11 + $0x98] sm:$0xff]
    %v2170 = vld [vmem:[#allocation11 + $0xa0] sm:$0xff]
    %v2171 = vld [vmem:[#allocation11 + $0xa8] sm:$0xff]
    %v2172 = vld [vmem:[#allocation11 + $0xb0] sm:$0xff]
    %v2173 = vld [vmem:[#allocation11 + $0xb8] sm:$0xff]
    %v2174 = vld [vmem:[#allocation11 + $0xc0] sm:$0xff]
    %v2175 = vld [vmem:[#allocation11 + $0xc8] sm:$0xff]
    %v2176 = vld [vmem:[#allocation11 + $0xd0] sm:$0xff]
    %v2177 = vld [vmem:[#allocation11 + $0xd8] sm:$0xff]
    %v2178 = vld [vmem:[#allocation11 + $0xe0] sm:$0xff]
    %v2179 = vld [vmem:[#allocation11 + $0xe8] sm:$0xff]
    %v2180 = vld [vmem:[#allocation11 + $0xf0] sm:$0xff]
    %v2181 = vld [vmem:[#allocation11 + $0xf8] sm:$0xff]
    %v2214 = vunpack.c.l.b16 %v2150
    %v2215 = vunpack.c.h.b16 %v2150
    %v2216 = vunpack.c.l.b16 %v2151
    %v2217 = vunpack.c.h.b16 %v2151
    %v2218 = vunpack.c.l.b16 %v2152
    %v2219 = vunpack.c.h.b16 %v2152
    %v2220 = vunpack.c.l.b16 %v2153
    %v2221 = vunpack.c.h.b16 %v2153
    %v2222 = vunpack.c.l.b16 %v2154
    %v2223 = vunpack.c.h.b16 %v2154
    %v2224 = vunpack.c.l.b16 %v2155
    %v2225 = vunpack.c.h.b16 %v2155
    %v2226 = vunpack.c.l.b16 %v2156
    %v2227 = vunpack.c.h.b16 %v2156
    %v2228 = vunpack.c.l.b16 %v2157
    %v2229 = vunpack.c.h.b16 %v2157
    %v2230 = vunpack.c.l.b16 %v2158
    %v2231 = vunpack.c.h.b16 %v2158
    %v2232 = vunpack.c.l.b16 %v2159
    %v2233 = vunpack.c.h.b16 %v2159
    %v2234 = vunpack.c.l.b16 %v2160
    %v2235 = vunpack.c.h.b16 %v2160
    %v2236 = vunpack.c.l.b16 %v2161
    %v2237 = vunpack.c.h.b16 %v2161
    %v2238 = vunpack.c.l.b16 %v2162
    %v2239 = vunpack.c.h.b16 %v2162
    %v2240 = vunpack.c.l.b16 %v2163
    %v2241 = vunpack.c.h.b16 %v2163
    %v2242 = vunpack.c.l.b16 %v2164
    %v2243 = vunpack.c.h.b16 %v2164
    %v2244 = vunpack.c.l.b16 %v2165
    %v2245 = vunpack.c.h.b16 %v2165
    %v2246 = vunpack.c.l.b16 %v2166
    %v2247 = vunpack.c.h.b16 %v2166
    %v2248 = vunpack.c.l.b16 %v2167
    %v2249 = vunpack.c.h.b16 %v2167
    %v2250 = vunpack.c.l.b16 %v2168
    %v2251 = vunpack.c.h.b16 %v2168
    %v2252 = vunpack.c.l.b16 %v2169
    %v2253 = vunpack.c.h.b16 %v2169
    %v2254 = vunpack.c.l.b16 %v2170
    %v2255 = vunpack.c.h.b16 %v2170
    %v2256 = vunpack.c.l.b16 %v2171
    %v2257 = vunpack.c.h.b16 %v2171
    %v2258 = vunpack.c.l.b16 %v2172
    %v2259 = vunpack.c.h.b16 %v2172
    %v2260 = vunpack.c.l.b16 %v2173
    %v2261 = vunpack.c.h.b16 %v2173
    %v2262 = vunpack.c.l.b16 %v2174
    %v2263 = vunpack.c.h.b16 %v2174
    %v2264 = vunpack.c.l.b16 %v2175
    %v2265 = vunpack.c.h.b16 %v2175
    %v2266 = vunpack.c.l.b16 %v2176
    %v2267 = vunpack.c.h.b16 %v2176
    %v2268 = vunpack.c.l.b16 %v2177
    %v2269 = vunpack.c.h.b16 %v2177
    %v2270 = vunpack.c.l.b16 %v2178
    %v2271 = vunpack.c.h.b16 %v2178
    %v2272 = vunpack.c.l.b16 %v2179
    %v2273 = vunpack.c.h.b16 %v2179
    %v2274 = vunpack.c.l.b16 %v2180
    %v2275 = vunpack.c.h.b16 %v2180
    %v2276 = vunpack.c.l.b16 %v2181
    %v2277 = vunpack.c.h.b16 %v2181
    %v2278 = vpack.c.b16 %v2218, %v2214
    %v2279 = vpack.c.b16 %v2219, %v2215
    %v2280 = vpack.c.b16 %v2220, %v2216
    %v2281 = vpack.c.b16 %v2221, %v2217
    %v2282 = vpack.c.b16 %v2226, %v2222
    %v2283 = vpack.c.b16 %v2227, %v2223
    %v2284 = vpack.c.b16 %v2228, %v2224
    %v2285 = vpack.c.b16 %v2229, %v2225
    %v2286 = vpack.c.b16 %v2234, %v2230
    %v2287 = vpack.c.b16 %v2235, %v2231
    %v2288 = vpack.c.b16 %v2236, %v2232
    %v2289 = vpack.c.b16 %v2237, %v2233
    %v2290 = vpack.c.b16 %v2242, %v2238
    %v2291 = vpack.c.b16 %v2243, %v2239
    %v2292 = vpack.c.b16 %v2244, %v2240
    %v2293 = vpack.c.b16 %v2245, %v2241
    %v2294 = vpack.c.b16 %v2250, %v2246
    %v2295 = vpack.c.b16 %v2251, %v2247
    %v2296 = vpack.c.b16 %v2252, %v2248
    %v2297 = vpack.c.b16 %v2253, %v2249
    %v2298 = vpack.c.b16 %v2258, %v2254
    %v2299 = vpack.c.b16 %v2259, %v2255
    %v2300 = vpack.c.b16 %v2260, %v2256
    %v2301 = vpack.c.b16 %v2261, %v2257
    %v2302 = vpack.c.b16 %v2266, %v2262
    %v2303 = vpack.c.b16 %v2267, %v2263
    %v2304 = vpack.c.b16 %v2268, %v2264
    %v2305 = vpack.c.b16 %v2269, %v2265
    %v2306 = vpack.c.b16 %v2274, %v2270
    %v2307 = vpack.c.b16 %v2275, %v2271
    %v2308 = vpack.c.b16 %v2276, %v2272
    %v2309 = vpack.c.b16 %v2277, %v2273
    %2342 = vmatpush.bf16.msra.mxu0 %v2306
    %2343 = vmatpush.bf16.msra.mxu0 %v2302
    %2344 = vmatpush.bf16.msra.mxu0 %v2298
    %2345 = vmatpush.bf16.msra.mxu0 %v2294
    %2346 = vmatpush.bf16.msra.mxu0 %v2290
    %2347 = vmatpush.bf16.msra.mxu0 %v2286
    %2348 = vmatpush.bf16.msra.mxu0 %v2282
    %2349 = vmatpush.bf16.msra.mxu0 %v2278
    %2350 = vmatmul.bf16.gmra.mxu0 %v2149
    %v2351 = vpop.f32.mrf.mxu0
    %v2352 = vadd.f32 0.0, %v2351
    %v2353 = vpop.f32.mrf.mxu0
    %2354 = vdwg.mxu0
    %2355 = vmatpush.bf16.msra.mxu0 %v2307
    %2356 = vmatpush.bf16.msra.mxu0 %v2303
    %2357 = vmatpush.bf16.msra.mxu0 %v2299
    %2358 = vmatpush.bf16.msra.mxu0 %v2295
    %2359 = vmatpush.bf16.msra.mxu0 %v2291
    %2360 = vmatpush.bf16.msra.mxu0 %v2287
    %2361 = vmatpush.bf16.msra.mxu0 %v2283
    %2362 = vmatpush.bf16.msra.mxu0 %v2279
    %2363 = vmatmul.bf16.gmra.mxu0 %v2149
    %v2364 = vpop.f32.mrf.mxu0
    %v2365 = vadd.f32 0.0, %v2364
    %v2366 = vpop.f32.mrf.mxu0
    %2367 = vdwg.mxu0
    %2368 = vmatpush.bf16.msra.mxu0 %v2308
    %2369 = vmatpush.bf16.msra.mxu0 %v2304
    %2370 = vmatpush.bf16.msra.mxu0 %v2300
    %2371 = vmatpush.bf16.msra.mxu0 %v2296
    %2372 = vmatpush.bf16.msra.mxu0 %v2292
    %2373 = vmatpush.bf16.msra.mxu0 %v2288
    %2374 = vmatpush.bf16.msra.mxu0 %v2284
    %2375 = vmatpush.bf16.msra.mxu0 %v2280
    %2376 = vmatmul.bf16.gmra.mxu0 %v2149
    %v2377 = vpop.f32.mrf.mxu0
    %v2378 = vadd.f32 0.0, %v2377
    %v2379 = vpop.f32.mrf.mxu0
    %2380 = vdwg.mxu0
    %2381 = vmatpush.bf16.msra.mxu0 %v2309
    %2382 = vmatpush.bf16.msra.mxu0 %v2305
    %2383 = vmatpush.bf16.msra.mxu0 %v2301
    %2384 = vmatpush.bf16.msra.mxu0 %v2297
    %2385 = vmatpush.bf16.msra.mxu0 %v2293
    %2386 = vmatpush.bf16.msra.mxu0 %v2289
    %2387 = vmatpush.bf16.msra.mxu0 %v2285
    %2388 = vmatpush.bf16.msra.mxu0 %v2281
    %2389 = vmatmul.bf16.gmra.mxu0 %v2149
    %v2390 = vpop.f32.mrf.mxu0
    %v2391 = vadd.f32 0.0, %v2390
    %v2392 = vpop.f32.mrf.mxu0
    %2393 = vdwg.mxu0
    %v2394 = vadd.f32 %v2144, %v2352
    %v2395 = vadd.f32 %v2145, %v2365
    %v2396 = vadd.f32 %v2146, %v2378
    %v2397 = vadd.f32 %v2147, %v2391
    %v2398 = vxor.u32 %v2394, 2147483648
    %v2399 = vxor.u32 %v2395, 2147483648
    %v2400 = vxor.u32 %v2396, 2147483648
    %v2401 = vmul.f32 %v2398, 1.442695
    %v2402 = vpow.pop %v2401
    %v2403 = vmul.f32 %v2399, 1.442695
    %v2404 = vpow.pop %v2403
    %v2405 = vmul.f32 %v2400, 1.442695
    %v2406 = vpow.pop %v2405
    %v2407 = vadd.f32 %v2402, 1.0
    %v2408 = vadd.f32 %v2404, 1.0
    %v2409 = vadd.f32 %v2406, 1.0
    %v2410 = vrcp.pop %v2407
    %v2411 = vmul.f32 %v2407, %v2410
    %v2412 = vsub.f32 1.0, %v2411
    %v2413 = vmul.f32 %v2410, %v2412
    %v2414 = vadd.f32 %v2410, %v2413
    %vm2415 = vweird.f32 %v2407
    %vm2416 = vweird.f32 %v2410
    %vm2417 = vmor %vm2415, %vm2416
    %v2418 = vsel %vm2417, %v2410, %v2414
    %v2419 = vand.u32 2147483647, %v2407
    %vm2420 = vcmp.eq.f32.partialorder %v2419, 8.507059e+37
    %v2421 = vand.u32 %v2407, 2147483648
    %v2422 = vor.u32 1.1754944e-38, %v2421
    %v2423 = vsel %vm2420, %v2422, %v2418
    %v2424 = vmul.f32 1.0, %v2423
    %v2425 = vrcp.pop %v2408
    %v2426 = vmul.f32 %v2408, %v2425
    %v2427 = vsub.f32 1.0, %v2426
    %v2428 = vmul.f32 %v2425, %v2427
    %v2429 = vadd.f32 %v2425, %v2428
    %vm2430 = vweird.f32 %v2408
    %vm2431 = vweird.f32 %v2425
    %vm2432 = vmor %vm2430, %vm2431
    %v2433 = vsel %vm2432, %v2425, %v2429
    %v2434 = vand.u32 2147483647, %v2408
    %vm2435 = vcmp.eq.f32.partialorder %v2434, 8.507059e+37
    %v2436 = vand.u32 %v2408, 2147483648
    %v2437 = vor.u32 1.1754944e-38, %v2436
    %v2438 = vsel %vm2435, %v2437, %v2433
    %v2439 = vmul.f32 1.0, %v2438
    %v2440 = vrcp.pop %v2409
    %v2441 = vmul.f32 %v2409, %v2440
    %v2442 = vsub.f32 1.0, %v2441
    %v2443 = vmul.f32 %v2440, %v2442
    %v2444 = vadd.f32 %v2440, %v2443
    %vm2445 = vweird.f32 %v2409
    %vm2446 = vweird.f32 %v2440
    %vm2447 = vmor %vm2445, %vm2446
    %v2448 = vsel %vm2447, %v2440, %v2444
    %v2449 = vand.u32 2147483647, %v2409
    %vm2450 = vcmp.eq.f32.partialorder %v2449, 8.507059e+37
    %v2451 = vand.u32 %v2409, 2147483648
    %v2452 = vor.u32 1.1754944e-38, %v2451
    %v2453 = vsel %vm2450, %v2452, %v2448
    %v2454 = vmul.f32 1.0, %v2453
    %v2455 = vtanh.pop %v2397
    %v2456 = vld [vmem:[#allocation4] sm:$0xff]
    %v2457 = vmul.f32 %v2439, %v2456
    %v2458 = vmul.f32 %v2424, %v2455
    %v2459 = vadd.f32 %v2457, %v2458
    %v2460 = vtanh.pop %v2459
    %v2461 = vmul.f32 %v2454, %v2460
    %2462 = vst [vmem:[#allocation4] sm:$0xff] %v2459
    %2463 = vst [vmem:[#allocation3] sm:$0xff] %v2461
    %s2464 = scalar_lea.vmem [#allocation13], 32
    %2465 = vst [vmem:[%s2464] sm:$0xff] %v2461
    %v2466 = vld [vmem:[%s660] sm:$0xff]
    %v2467 = vld [vmem:[%s660 + $0x8] sm:$0xff]
    %v2468 = vld [vmem:[%s660 + $0x10] sm:$0xff]
    %v2469 = vld [vmem:[%s660 + $0x18] sm:$0xff]
    %v2470 = vld [vmem:[#allocation3] sm:$0xff]
    %v2471 = vpack.c.bf16 %v2470, %v2470
    %v2472 = vld [vmem:[#allocation11] sm:$0xff]
    %v2473 = vld [vmem:[#allocation11 + $0x8] sm:$0xff]
    %v2474 = vld [vmem:[#allocation11 + $0x10] sm:$0xff]
    %v2475 = vld [vmem:[#allocation11 + $0x18] sm:$0xff]
    %v2476 = vld [vmem:[#allocation11 + $0x20] sm:$0xff]
    %v2477 = vld [vmem:[#allocation11 + $0x28] sm:$0xff]
    %v2478 = vld [vmem:[#allocation11 + $0x30] sm:$0xff]
    %v2479 = vld [vmem:[#allocation11 + $0x38] sm:$0xff]
    %v2480 = vld [vmem:[#allocation11 + $0x40] sm:$0xff]
    %v2481 = vld [vmem:[#allocation11 + $0x48] sm:$0xff]
    %v2482 = vld [vmem:[#allocation11 + $0x50] sm:$0xff]
    %v2483 = vld [vmem:[#allocation11 + $0x58] sm:$0xff]
    %v2484 = vld [vmem:[#allocation11 + $0x60] sm:$0xff]
    %v2485 = vld [vmem:[#allocation11 + $0x68] sm:$0xff]
    %v2486 = vld [vmem:[#allocation11 + $0x70] sm:$0xff]
    %v2487 = vld [vmem:[#allocation11 + $0x78] sm:$0xff]
    %v2488 = vld [vmem:[#allocation11 + $0x80] sm:$0xff]
    %v2489 = vld [vmem:[#allocation11 + $0x88] sm:$0xff]
    %v2490 = vld [vmem:[#allocation11 + $0x90] sm:$0xff]
    %v2491 = vld [vmem:[#allocation11 + $0x98] sm:$0xff]
    %v2492 = vld [vmem:[#allocation11 + $0xa0] sm:$0xff]
    %v2493 = vld [vmem:[#allocation11 + $0xa8] sm:$0xff]
    %v2494 = vld [vmem:[#allocation11 + $0xb0] sm:$0xff]
    %v2495 = vld [vmem:[#allocation11 + $0xb8] sm:$0xff]
    %v2496 = vld [vmem:[#allocation11 + $0xc0] sm:$0xff]
    %v2497 = vld [vmem:[#allocation11 + $0xc8] sm:$0xff]
    %v2498 = vld [vmem:[#allocation11 + $0xd0] sm:$0xff]
    %v2499 = vld [vmem:[#allocation11 + $0xd8] sm:$0xff]
    %v2500 = vld [vmem:[#allocation11 + $0xe0] sm:$0xff]
    %v2501 = vld [vmem:[#allocation11 + $0xe8] sm:$0xff]
    %v2502 = vld [vmem:[#allocation11 + $0xf0] sm:$0xff]
    %v2503 = vld [vmem:[#allocation11 + $0xf8] sm:$0xff]
    %v2536 = vunpack.c.l.b16 %v2472
    %v2537 = vunpack.c.h.b16 %v2472
    %v2538 = vunpack.c.l.b16 %v2473
    %v2539 = vunpack.c.h.b16 %v2473
    %v2540 = vunpack.c.l.b16 %v2474
    %v2541 = vunpack.c.h.b16 %v2474
    %v2542 = vunpack.c.l.b16 %v2475
    %v2543 = vunpack.c.h.b16 %v2475
    %v2544 = vunpack.c.l.b16 %v2476
    %v2545 = vunpack.c.h.b16 %v2476
    %v2546 = vunpack.c.l.b16 %v2477
    %v2547 = vunpack.c.h.b16 %v2477
    %v2548 = vunpack.c.l.b16 %v2478
    %v2549 = vunpack.c.h.b16 %v2478
    %v2550 = vunpack.c.l.b16 %v2479
    %v2551 = vunpack.c.h.b16 %v2479
    %v2552 = vunpack.c.l.b16 %v2480
    %v2553 = vunpack.c.h.b16 %v2480
    %v2554 = vunpack.c.l.b16 %v2481
    %v2555 = vunpack.c.h.b16 %v2481
    %v2556 = vunpack.c.l.b16 %v2482
    %v2557 = vunpack.c.h.b16 %v2482
    %v2558 = vunpack.c.l.b16 %v2483
    %v2559 = vunpack.c.h.b16 %v2483
    %v2560 = vunpack.c.l.b16 %v2484
    %v2561 = vunpack.c.h.b16 %v2484
    %v2562 = vunpack.c.l.b16 %v2485
    %v2563 = vunpack.c.h.b16 %v2485
    %v2564 = vunpack.c.l.b16 %v2486
    %v2565 = vunpack.c.h.b16 %v2486
    %v2566 = vunpack.c.l.b16 %v2487
    %v2567 = vunpack.c.h.b16 %v2487
    %v2568 = vunpack.c.l.b16 %v2488
    %v2569 = vunpack.c.h.b16 %v2488
    %v2570 = vunpack.c.l.b16 %v2489
    %v2571 = vunpack.c.h.b16 %v2489
    %v2572 = vunpack.c.l.b16 %v2490
    %v2573 = vunpack.c.h.b16 %v2490
    %v2574 = vunpack.c.l.b16 %v2491
    %v2575 = vunpack.c.h.b16 %v2491
    %v2576 = vunpack.c.l.b16 %v2492
    %v2577 = vunpack.c.h.b16 %v2492
    %v2578 = vunpack.c.l.b16 %v2493
    %v2579 = vunpack.c.h.b16 %v2493
    %v2580 = vunpack.c.l.b16 %v2494
    %v2581 = vunpack.c.h.b16 %v2494
    %v2582 = vunpack.c.l.b16 %v2495
    %v2583 = vunpack.c.h.b16 %v2495
    %v2584 = vunpack.c.l.b16 %v2496
    %v2585 = vunpack.c.h.b16 %v2496
    %v2586 = vunpack.c.l.b16 %v2497
    %v2587 = vunpack.c.h.b16 %v2497
    %v2588 = vunpack.c.l.b16 %v2498
    %v2589 = vunpack.c.h.b16 %v2498
    %v2590 = vunpack.c.l.b16 %v2499
    %v2591 = vunpack.c.h.b16 %v2499
    %v2592 = vunpack.c.l.b16 %v2500
    %v2593 = vunpack.c.h.b16 %v2500
    %v2594 = vunpack.c.l.b16 %v2501
    %v2595 = vunpack.c.h.b16 %v2501
    %v2596 = vunpack.c.l.b16 %v2502
    %v2597 = vunpack.c.h.b16 %v2502
    %v2598 = vunpack.c.l.b16 %v2503
    %v2599 = vunpack.c.h.b16 %v2503
    %v2600 = vpack.c.b16 %v2540, %v2536
    %v2601 = vpack.c.b16 %v2541, %v2537
    %v2602 = vpack.c.b16 %v2542, %v2538
    %v2603 = vpack.c.b16 %v2543, %v2539
    %v2604 = vpack.c.b16 %v2548, %v2544
    %v2605 = vpack.c.b16 %v2549, %v2545
    %v2606 = vpack.c.b16 %v2550, %v2546
    %v2607 = vpack.c.b16 %v2551, %v2547
    %v2608 = vpack.c.b16 %v2556, %v2552
    %v2609 = vpack.c.b16 %v2557, %v2553
    %v2610 = vpack.c.b16 %v2558, %v2554
    %v2611 = vpack.c.b16 %v2559, %v2555
    %v2612 = vpack.c.b16 %v2564, %v2560
    %v2613 = vpack.c.b16 %v2565, %v2561
    %v2614 = vpack.c.b16 %v2566, %v2562
    %v2615 = vpack.c.b16 %v2567, %v2563
    %v2616 = vpack.c.b16 %v2572, %v2568
    %v2617 = vpack.c.b16 %v2573, %v2569
    %v2618 = vpack.c.b16 %v2574, %v2570
    %v2619 = vpack.c.b16 %v2575, %v2571
    %v2620 = vpack.c.b16 %v2580, %v2576
    %v2621 = vpack.c.b16 %v2581, %v2577
    %v2622 = vpack.c.b16 %v2582, %v2578
    %v2623 = vpack.c.b16 %v2583, %v2579
    %v2624 = vpack.c.b16 %v2588, %v2584
    %v2625 = vpack.c.b16 %v2589, %v2585
    %v2626 = vpack.c.b16 %v2590, %v2586
    %v2627 = vpack.c.b16 %v2591, %v2587
    %v2628 = vpack.c.b16 %v2596, %v2592
    %v2629 = vpack.c.b16 %v2597, %v2593
    %v2630 = vpack.c.b16 %v2598, %v2594
    %v2631 = vpack.c.b16 %v2599, %v2595
    %2664 = vmatpush.bf16.msra.mxu0 %v2628
    %2665 = vmatpush.bf16.msra.mxu0 %v2624
    %2666 = vmatpush.bf16.msra.mxu0 %v2620
    %2667 = vmatpush.bf16.msra.mxu0 %v2616
    %2668 = vmatpush.bf16.msra.mxu0 %v2612
    %2669 = vmatpush.bf16.msra.mxu0 %v2608
    %2670 = vmatpush.bf16.msra.mxu0 %v2604
    %2671 = vmatpush.bf16.msra.mxu0 %v2600
    %2672 = vmatmul.bf16.gmra.mxu0 %v2471
    %v2673 = vpop.f32.mrf.mxu0
    %v2674 = vadd.f32 0.0, %v2673
    %v2675 = vpop.f32.mrf.mxu0
    %2676 = vdwg.mxu0
    %2677 = vmatpush.bf16.msra.mxu0 %v2629
    %2678 = vmatpush.bf16.msra.mxu0 %v2625
    %2679 = vmatpush.bf16.msra.mxu0 %v2621
    %2680 = vmatpush.bf16.msra.mxu0 %v2617
    %2681 = vmatpush.bf16.msra.mxu0 %v2613
    %2682 = vmatpush.bf16.msra.mxu0 %v2609
    %2683 = vmatpush.bf16.msra.mxu0 %v2605
    %2684 = vmatpush.bf16.msra.mxu0 %v2601
    %2685 = vmatmul.bf16.gmra.mxu0 %v2471
    %v2686 = vpop.f32.mrf.mxu0
    %v2687 = vadd.f32 0.0, %v2686
    %v2688 = vpop.f32.mrf.mxu0
    %2689 = vdwg.mxu0
    %2690 = vmatpush.bf16.msra.mxu0 %v2630
    %2691 = vmatpush.bf16.msra.mxu0 %v2626
    %2692 = vmatpush.bf16.msra.mxu0 %v2622
    %2693 = vmatpush.bf16.msra.mxu0 %v2618
    %2694 = vmatpush.bf16.msra.mxu0 %v2614
    %2695 = vmatpush.bf16.msra.mxu0 %v2610
    %2696 = vmatpush.bf16.msra.mxu0 %v2606
    %2697 = vmatpush.bf16.msra.mxu0 %v2602
    %2698 = vmatmul.bf16.gmra.mxu0 %v2471
    %v2699 = vpop.f32.mrf.mxu0
    %v2700 = vadd.f32 0.0, %v2699
    %v2701 = vpop.f32.mrf.mxu0
    %2702 = vdwg.mxu0
    %2703 = vmatpush.bf16.msra.mxu0 %v2631
    %2704 = vmatpush.bf16.msra.mxu0 %v2627
    %2705 = vmatpush.bf16.msra.mxu0 %v2623
    %2706 = vmatpush.bf16.msra.mxu0 %v2619
    %2707 = vmatpush.bf16.msra.mxu0 %v2615
    %2708 = vmatpush.bf16.msra.mxu0 %v2611
    %2709 = vmatpush.bf16.msra.mxu0 %v2607
    %2710 = vmatpush.bf16.msra.mxu0 %v2603
    %2711 = vmatmul.bf16.gmra.mxu0 %v2471
    %v2712 = vpop.f32.mrf.mxu0
    %v2713 = vadd.f32 0.0, %v2712
    %v2714 = vpop.f32.mrf.mxu0
    %2715 = vdwg.mxu0
    %v2716 = vadd.f32 %v2466, %v2674
    %v2717 = vadd.f32 %v2467, %v2687
    %v2718 = vadd.f32 %v2468, %v2700
    %v2719 = vadd.f32 %v2469, %v2713
    %v2720 = vxor.u32 %v2716, 2147483648
    %v2721 = vxor.u32 %v2717, 2147483648
    %v2722 = vxor.u32 %v2718, 2147483648
    %v2723 = vmul.f32 %v2720, 1.442695
    %v2724 = vpow.pop %v2723
    %v2725 = vmul.f32 %v2721, 1.442695
    %v2726 = vpow.pop %v2725
    %v2727 = vmul.f32 %v2722, 1.442695
    %v2728 = vpow.pop %v2727
    %v2729 = vadd.f32 %v2724, 1.0
    %v2730 = vadd.f32 %v2726, 1.0
    %v2731 = vadd.f32 %v2728, 1.0
    %v2732 = vrcp.pop %v2729
    %v2733 = vmul.f32 %v2729, %v2732
    %v2734 = vsub.f32 1.0, %v2733
    %v2735 = vmul.f32 %v2732, %v2734
    %v2736 = vadd.f32 %v2732, %v2735
    %vm2737 = vweird.f32 %v2729
    %vm2738 = vweird.f32 %v2732
    %vm2739 = vmor %vm2737, %vm2738
    %v2740 = vsel %vm2739, %v2732, %v2736
    %v2741 = vand.u32 2147483647, %v2729
    %vm2742 = vcmp.eq.f32.partialorder %v2741, 8.507059e+37
    %v2743 = vand.u32 %v2729, 2147483648
    %v2744 = vor.u32 1.1754944e-38, %v2743
    %v2745 = vsel %vm2742, %v2744, %v2740
    %v2746 = vmul.f32 1.0, %v2745
    %v2747 = vrcp.pop %v2730
    %v2748 = vmul.f32 %v2730, %v2747
    %v2749 = vsub.f32 1.0, %v2748
    %v2750 = vmul.f32 %v2747, %v2749
    %v2751 = vadd.f32 %v2747, %v2750
    %vm2752 = vweird.f32 %v2730
    %vm2753 = vweird.f32 %v2747
    %vm2754 = vmor %vm2752, %vm2753
    %v2755 = vsel %vm2754, %v2747, %v2751
    %v2756 = vand.u32 2147483647, %v2730
    %vm2757 = vcmp.eq.f32.partialorder %v2756, 8.507059e+37
    %v2758 = vand.u32 %v2730, 2147483648
    %v2759 = vor.u32 1.1754944e-38, %v2758
    %v2760 = vsel %vm2757, %v2759, %v2755
    %v2761 = vmul.f32 1.0, %v2760
    %v2762 = vrcp.pop %v2731
    %v2763 = vmul.f32 %v2731, %v2762
    %v2764 = vsub.f32 1.0, %v2763
    %v2765 = vmul.f32 %v2762, %v2764
    %v2766 = vadd.f32 %v2762, %v2765
    %vm2767 = vweird.f32 %v2731
    %vm2768 = vweird.f32 %v2762
    %vm2769 = vmor %vm2767, %vm2768
    %v2770 = vsel %vm2769, %v2762, %v2766
    %v2771 = vand.u32 2147483647, %v2731
    %vm2772 = vcmp.eq.f32.partialorder %v2771, 8.507059e+37
    %v2773 = vand.u32 %v2731, 2147483648
    %v2774 = vor.u32 1.1754944e-38, %v2773
    %v2775 = vsel %vm2772, %v2774, %v2770
    %v2776 = vmul.f32 1.0, %v2775
    %v2777 = vtanh.pop %v2719
    %v2778 = vld [vmem:[#allocation4] sm:$0xff]
    %v2779 = vmul.f32 %v2761, %v2778
    %v2780 = vmul.f32 %v2746, %v2777
    %v2781 = vadd.f32 %v2779, %v2780
    %v2782 = vtanh.pop %v2781
    %v2783 = vmul.f32 %v2776, %v2782
    %2784 = vst [vmem:[#allocation4] sm:$0xff] %v2781
    %2785 = vst [vmem:[#allocation3] sm:$0xff] %v2783
    %s2786 = scalar_lea.vmem [#allocation13], 40
    %2787 = vst [vmem:[%s2786] sm:$0xff] %v2783
    %v2788 = vld [vmem:[%s756] sm:$0xff]
    %v2789 = vld [vmem:[%s756 + $0x8] sm:$0xff]
    %v2790 = vld [vmem:[%s756 + $0x10] sm:$0xff]
    %v2791 = vld [vmem:[%s756 + $0x18] sm:$0xff]
    %v2792 = vld [vmem:[#allocation3] sm:$0xff]
    %v2793 = vpack.c.bf16 %v2792, %v2792
    %v2794 = vld [vmem:[#allocation11] sm:$0xff]
    %v2795 = vld [vmem:[#allocation11 + $0x8] sm:$0xff]
    %v2796 = vld [vmem:[#allocation11 + $0x10] sm:$0xff]
    %v2797 = vld [vmem:[#allocation11 + $0x18] sm:$0xff]
    %v2798 = vld [vmem:[#allocation11 + $0x20] sm:$0xff]
    %v2799 = vld [vmem:[#allocation11 + $0x28] sm:$0xff]
    %v2800 = vld [vmem:[#allocation11 + $0x30] sm:$0xff]
    %v2801 = vld [vmem:[#allocation11 + $0x38] sm:$0xff]
    %v2802 = vld [vmem:[#allocation11 + $0x40] sm:$0xff]
    %v2803 = vld [vmem:[#allocation11 + $0x48] sm:$0xff]
    %v2804 = vld [vmem:[#allocation11 + $0x50] sm:$0xff]
    %v2805 = vld [vmem:[#allocation11 + $0x58] sm:$0xff]
    %v2806 = vld [vmem:[#allocation11 + $0x60] sm:$0xff]
    %v2807 = vld [vmem:[#allocation11 + $0x68] sm:$0xff]
    %v2808 = vld [vmem:[#allocation11 + $0x70] sm:$0xff]
    %v2809 = vld [vmem:[#allocation11 + $0x78] sm:$0xff]
    %v2810 = vld [vmem:[#allocation11 + $0x80] sm:$0xff]
    %v2811 = vld [vmem:[#allocation11 + $0x88] sm:$0xff]
    %v2812 = vld [vmem:[#allocation11 + $0x90] sm:$0xff]
    %v2813 = vld [vmem:[#allocation11 + $0x98] sm:$0xff]
    %v2814 = vld [vmem:[#allocation11 + $0xa0] sm:$0xff]
    %v2815 = vld [vmem:[#allocation11 + $0xa8] sm:$0xff]
    %v2816 = vld [vmem:[#allocation11 + $0xb0] sm:$0xff]
    %v2817 = vld [vmem:[#allocation11 + $0xb8] sm:$0xff]
    %v2818 = vld [vmem:[#allocation11 + $0xc0] sm:$0xff]
    %v2819 = vld [vmem:[#allocation11 + $0xc8] sm:$0xff]
    %v2820 = vld [vmem:[#allocation11 + $0xd0] sm:$0xff]
    %v2821 = vld [vmem:[#allocation11 + $0xd8] sm:$0xff]
    %v2822 = vld [vmem:[#allocation11 + $0xe0] sm:$0xff]
    %v2823 = vld [vmem:[#allocation11 + $0xe8] sm:$0xff]
    %v2824 = vld [vmem:[#allocation11 + $0xf0] sm:$0xff]
    %v2825 = vld [vmem:[#allocation11 + $0xf8] sm:$0xff]
    %v2858 = vunpack.c.l.b16 %v2794
    %v2859 = vunpack.c.h.b16 %v2794
    %v2860 = vunpack.c.l.b16 %v2795
    %v2861 = vunpack.c.h.b16 %v2795
    %v2862 = vunpack.c.l.b16 %v2796
    %v2863 = vunpack.c.h.b16 %v2796
    %v2864 = vunpack.c.l.b16 %v2797
    %v2865 = vunpack.c.h.b16 %v2797
    %v2866 = vunpack.c.l.b16 %v2798
    %v2867 = vunpack.c.h.b16 %v2798
    %v2868 = vunpack.c.l.b16 %v2799
    %v2869 = vunpack.c.h.b16 %v2799
    %v2870 = vunpack.c.l.b16 %v2800
    %v2871 = vunpack.c.h.b16 %v2800
    %v2872 = vunpack.c.l.b16 %v2801
    %v2873 = vunpack.c.h.b16 %v2801
    %v2874 = vunpack.c.l.b16 %v2802
    %v2875 = vunpack.c.h.b16 %v2802
    %v2876 = vunpack.c.l.b16 %v2803
    %v2877 = vunpack.c.h.b16 %v2803
    %v2878 = vunpack.c.l.b16 %v2804
    %v2879 = vunpack.c.h.b16 %v2804
    %v2880 = vunpack.c.l.b16 %v2805
    %v2881 = vunpack.c.h.b16 %v2805
    %v2882 = vunpack.c.l.b16 %v2806
    %v2883 = vunpack.c.h.b16 %v2806
    %v2884 = vunpack.c.l.b16 %v2807
    %v2885 = vunpack.c.h.b16 %v2807
    %v2886 = vunpack.c.l.b16 %v2808
    %v2887 = vunpack.c.h.b16 %v2808
    %v2888 = vunpack.c.l.b16 %v2809
    %v2889 = vunpack.c.h.b16 %v2809
    %v2890 = vunpack.c.l.b16 %v2810
    %v2891 = vunpack.c.h.b16 %v2810
    %v2892 = vunpack.c.l.b16 %v2811
    %v2893 = vunpack.c.h.b16 %v2811
    %v2894 = vunpack.c.l.b16 %v2812
    %v2895 = vunpack.c.h.b16 %v2812
    %v2896 = vunpack.c.l.b16 %v2813
    %v2897 = vunpack.c.h.b16 %v2813
    %v2898 = vunpack.c.l.b16 %v2814
    %v2899 = vunpack.c.h.b16 %v2814
    %v2900 = vunpack.c.l.b16 %v2815
    %v2901 = vunpack.c.h.b16 %v2815
    %v2902 = vunpack.c.l.b16 %v2816
    %v2903 = vunpack.c.h.b16 %v2816
    %v2904 = vunpack.c.l.b16 %v2817
    %v2905 = vunpack.c.h.b16 %v2817
    %v2906 = vunpack.c.l.b16 %v2818
    %v2907 = vunpack.c.h.b16 %v2818
    %v2908 = vunpack.c.l.b16 %v2819
    %v2909 = vunpack.c.h.b16 %v2819
    %v2910 = vunpack.c.l.b16 %v2820
    %v2911 = vunpack.c.h.b16 %v2820
    %v2912 = vunpack.c.l.b16 %v2821
    %v2913 = vunpack.c.h.b16 %v2821
    %v2914 = vunpack.c.l.b16 %v2822
    %v2915 = vunpack.c.h.b16 %v2822
    %v2916 = vunpack.c.l.b16 %v2823
    %v2917 = vunpack.c.h.b16 %v2823
    %v2918 = vunpack.c.l.b16 %v2824
    %v2919 = vunpack.c.h.b16 %v2824
    %v2920 = vunpack.c.l.b16 %v2825
    %v2921 = vunpack.c.h.b16 %v2825
    %v2922 = vpack.c.b16 %v2862, %v2858
    %v2923 = vpack.c.b16 %v2863, %v2859
    %v2924 = vpack.c.b16 %v2864, %v2860
    %v2925 = vpack.c.b16 %v2865, %v2861
    %v2926 = vpack.c.b16 %v2870, %v2866
    %v2927 = vpack.c.b16 %v2871, %v2867
    %v2928 = vpack.c.b16 %v2872, %v2868
    %v2929 = vpack.c.b16 %v2873, %v2869
    %v2930 = vpack.c.b16 %v2878, %v2874
    %v2931 = vpack.c.b16 %v2879, %v2875
    %v2932 = vpack.c.b16 %v2880, %v2876
    %v2933 = vpack.c.b16 %v2881, %v2877
    %v2934 = vpack.c.b16 %v2886, %v2882
    %v2935 = vpack.c.b16 %v2887, %v2883
    %v2936 = vpack.c.b16 %v2888, %v2884
    %v2937 = vpack.c.b16 %v2889, %v2885
    %v2938 = vpack.c.b16 %v2894, %v2890
    %v2939 = vpack.c.b16 %v2895, %v2891
    %v2940 = vpack.c.b16 %v2896, %v2892
    %v2941 = vpack.c.b16 %v2897, %v2893
    %v2942 = vpack.c.b16 %v2902, %v2898
    %v2943 = vpack.c.b16 %v2903, %v2899
    %v2944 = vpack.c.b16 %v2904, %v2900
    %v2945 = vpack.c.b16 %v2905, %v2901
    %v2946 = vpack.c.b16 %v2910, %v2906
    %v2947 = vpack.c.b16 %v2911, %v2907
    %v2948 = vpack.c.b16 %v2912, %v2908
    %v2949 = vpack.c.b16 %v2913, %v2909
    %v2950 = vpack.c.b16 %v2918, %v2914
    %v2951 = vpack.c.b16 %v2919, %v2915
    %v2952 = vpack.c.b16 %v2920, %v2916
    %v2953 = vpack.c.b16 %v2921, %v2917
    %2986 = vmatpush.bf16.msra.mxu0 %v2950
    %2987 = vmatpush.bf16.msra.mxu0 %v2946
    %2988 = vmatpush.bf16.msra.mxu0 %v2942
    %2989 = vmatpush.bf16.msra.mxu0 %v2938
    %2990 = vmatpush.bf16.msra.mxu0 %v2934
    %2991 = vmatpush.bf16.msra.mxu0 %v2930
    %2992 = vmatpush.bf16.msra.mxu0 %v2926
    %2993 = vmatpush.bf16.msra.mxu0 %v2922
    %2994 = vmatmul.bf16.gmra.mxu0 %v2793
    %v2995 = vpop.f32.mrf.mxu0
    %v2996 = vadd.f32 0.0, %v2995
    %v2997 = vpop.f32.mrf.mxu0
    %2998 = vdwg.mxu0
    %2999 = vmatpush.bf16.msra.mxu0 %v2951
    %3000 = vmatpush.bf16.msra.mxu0 %v2947
    %3001 = vmatpush.bf16.msra.mxu0 %v2943
    %3002 = vmatpush.bf16.msra.mxu0 %v2939
    %3003 = vmatpush.bf16.msra.mxu0 %v2935
    %3004 = vmatpush.bf16.msra.mxu0 %v2931
    %3005 = vmatpush.bf16.msra.mxu0 %v2927
    %3006 = vmatpush.bf16.msra.mxu0 %v2923
    %3007 = vmatmul.bf16.gmra.mxu0 %v2793
    %v3008 = vpop.f32.mrf.mxu0
    %v3009 = vadd.f32 0.0, %v3008
    %v3010 = vpop.f32.mrf.mxu0
    %3011 = vdwg.mxu0
    %3012 = vmatpush.bf16.msra.mxu0 %v2952
    %3013 = vmatpush.bf16.msra.mxu0 %v2948
    %3014 = vmatpush.bf16.msra.mxu0 %v2944
    %3015 = vmatpush.bf16.msra.mxu0 %v2940
    %3016 = vmatpush.bf16.msra.mxu0 %v2936
    %3017 = vmatpush.bf16.msra.mxu0 %v2932
    %3018 = vmatpush.bf16.msra.mxu0 %v2928
    %3019 = vmatpush.bf16.msra.mxu0 %v2924
    %3020 = vmatmul.bf16.gmra.mxu0 %v2793
    %v3021 = vpop.f32.mrf.mxu0
    %v3022 = vadd.f32 0.0, %v3021
    %v3023 = vpop.f32.mrf.mxu0
    %3024 = vdwg.mxu0
    %3025 = vmatpush.bf16.msra.mxu0 %v2953
    %3026 = vmatpush.bf16.msra.mxu0 %v2949
    %3027 = vmatpush.bf16.msra.mxu0 %v2945
    %3028 = vmatpush.bf16.msra.mxu0 %v2941
    %3029 = vmatpush.bf16.msra.mxu0 %v2937
    %3030 = vmatpush.bf16.msra.mxu0 %v2933
    %3031 = vmatpush.bf16.msra.mxu0 %v2929
    %3032 = vmatpush.bf16.msra.mxu0 %v2925
    %3033 = vmatmul.bf16.gmra.mxu0 %v2793
    %v3034 = vpop.f32.mrf.mxu0
    %v3035 = vadd.f32 0.0, %v3034
    %v3036 = vpop.f32.mrf.mxu0
    %3037 = vdwg.mxu0
    %v3038 = vadd.f32 %v2788, %v2996
    %v3039 = vadd.f32 %v2789, %v3009
    %v3040 = vadd.f32 %v2790, %v3022
    %v3041 = vadd.f32 %v2791, %v3035
    %v3042 = vxor.u32 %v3038, 2147483648
    %v3043 = vxor.u32 %v3039, 2147483648
    %v3044 = vxor.u32 %v3040, 2147483648
    %v3045 = vmul.f32 %v3042, 1.442695
    %v3046 = vpow.pop %v3045
    %v3047 = vmul.f32 %v3043, 1.442695
    %v3048 = vpow.pop %v3047
    %v3049 = vmul.f32 %v3044, 1.442695
    %v3050 = vpow.pop %v3049
    %v3051 = vadd.f32 %v3046, 1.0
    %v3052 = vadd.f32 %v3048, 1.0
    %v3053 = vadd.f32 %v3050, 1.0
    %v3054 = vrcp.pop %v3051
    %v3055 = vmul.f32 %v3051, %v3054
    %v3056 = vsub.f32 1.0, %v3055
    %v3057 = vmul.f32 %v3054, %v3056
    %v3058 = vadd.f32 %v3054, %v3057
    %vm3059 = vweird.f32 %v3051
    %vm3060 = vweird.f32 %v3054
    %vm3061 = vmor %vm3059, %vm3060
    %v3062 = vsel %vm3061, %v3054, %v3058
    %v3063 = vand.u32 2147483647, %v3051
    %vm3064 = vcmp.eq.f32.partialorder %v3063, 8.507059e+37
    %v3065 = vand.u32 %v3051, 2147483648
    %v3066 = vor.u32 1.1754944e-38, %v3065
    %v3067 = vsel %vm3064, %v3066, %v3062
    %v3068 = vmul.f32 1.0, %v3067
    %v3069 = vrcp.pop %v3052
    %v3070 = vmul.f32 %v3052, %v3069
    %v3071 = vsub.f32 1.0, %v3070
    %v3072 = vmul.f32 %v3069, %v3071
    %v3073 = vadd.f32 %v3069, %v3072
    %vm3074 = vweird.f32 %v3052
    %vm3075 = vweird.f32 %v3069
    %vm3076 = vmor %vm3074, %vm3075
    %v3077 = vsel %vm3076, %v3069, %v3073
    %v3078 = vand.u32 2147483647, %v3052
    %vm3079 = vcmp.eq.f32.partialorder %v3078, 8.507059e+37
    %v3080 = vand.u32 %v3052, 2147483648
    %v3081 = vor.u32 1.1754944e-38, %v3080
    %v3082 = vsel %vm3079, %v3081, %v3077
    %v3083 = vmul.f32 1.0, %v3082
    %v3084 = vrcp.pop %v3053
    %v3085 = vmul.f32 %v3053, %v3084
    %v3086 = vsub.f32 1.0, %v3085
    %v3087 = vmul.f32 %v3084, %v3086
    %v3088 = vadd.f32 %v3084, %v3087
    %vm3089 = vweird.f32 %v3053
    %vm3090 = vweird.f32 %v3084
    %vm3091 = vmor %vm3089, %vm3090
    %v3092 = vsel %vm3091, %v3084, %v3088
    %v3093 = vand.u32 2147483647, %v3053
    %vm3094 = vcmp.eq.f32.partialorder %v3093, 8.507059e+37
    %v3095 = vand.u32 %v3053, 2147483648
    %v3096 = vor.u32 1.1754944e-38, %v3095
    %v3097 = vsel %vm3094, %v3096, %v3092
    %v3098 = vmul.f32 1.0, %v3097
    %v3099 = vtanh.pop %v3041
    %v3100 = vld [vmem:[#allocation4] sm:$0xff]
    %v3101 = vmul.f32 %v3083, %v3100
    %v3102 = vmul.f32 %v3068, %v3099
    %v3103 = vadd.f32 %v3101, %v3102
    %v3104 = vtanh.pop %v3103
    %v3105 = vmul.f32 %v3098, %v3104
    %3106 = vst [vmem:[#allocation4] sm:$0xff] %v3103
    %3107 = vst [vmem:[#allocation3] sm:$0xff] %v3105
    %s3108 = scalar_lea.vmem [#allocation13], 48
    %3109 = vst [vmem:[%s3108] sm:$0xff] %v3105
    %v3110 = vld [vmem:[%s852] sm:$0xff]
    %v3111 = vld [vmem:[%s852 + $0x8] sm:$0xff]
    %v3112 = vld [vmem:[%s852 + $0x10] sm:$0xff]
    %v3113 = vld [vmem:[%s852 + $0x18] sm:$0xff]
    %v3114 = vld [vmem:[#allocation3] sm:$0xff]
    %v3115 = vpack.c.bf16 %v3114, %v3114
    %v3116 = vld [vmem:[#allocation11] sm:$0xff]
    %v3117 = vld [vmem:[#allocation11 + $0x8] sm:$0xff]
    %v3118 = vld [vmem:[#allocation11 + $0x10] sm:$0xff]
    %v3119 = vld [vmem:[#allocation11 + $0x18] sm:$0xff]
    %v3120 = vld [vmem:[#allocation11 + $0x20] sm:$0xff]
    %v3121 = vld [vmem:[#allocation11 + $0x28] sm:$0xff]
    %v3122 = vld [vmem:[#allocation11 + $0x30] sm:$0xff]
    %v3123 = vld [vmem:[#allocation11 + $0x38] sm:$0xff]
    %v3124 = vld [vmem:[#allocation11 + $0x40] sm:$0xff]
    %v3125 = vld [vmem:[#allocation11 + $0x48] sm:$0xff]
    %v3126 = vld [vmem:[#allocation11 + $0x50] sm:$0xff]
    %v3127 = vld [vmem:[#allocation11 + $0x58] sm:$0xff]
    %v3128 = vld [vmem:[#allocation11 + $0x60] sm:$0xff]
    %v3129 = vld [vmem:[#allocation11 + $0x68] sm:$0xff]
    %v3130 = vld [vmem:[#allocation11 + $0x70] sm:$0xff]
    %v3131 = vld [vmem:[#allocation11 + $0x78] sm:$0xff]
    %v3132 = vld [vmem:[#allocation11 + $0x80] sm:$0xff]
    %v3133 = vld [vmem:[#allocation11 + $0x88] sm:$0xff]
    %v3134 = vld [vmem:[#allocation11 + $0x90] sm:$0xff]
    %v3135 = vld [vmem:[#allocation11 + $0x98] sm:$0xff]
    %v3136 = vld [vmem:[#allocation11 + $0xa0] sm:$0xff]
    %v3137 = vld [vmem:[#allocation11 + $0xa8] sm:$0xff]
    %v3138 = vld [vmem:[#allocation11 + $0xb0] sm:$0xff]
    %v3139 = vld [vmem:[#allocation11 + $0xb8] sm:$0xff]
    %v3140 = vld [vmem:[#allocation11 + $0xc0] sm:$0xff]
    %v3141 = vld [vmem:[#allocation11 + $0xc8] sm:$0xff]
    %v3142 = vld [vmem:[#allocation11 + $0xd0] sm:$0xff]
    %v3143 = vld [vmem:[#allocation11 + $0xd8] sm:$0xff]
    %v3144 = vld [vmem:[#allocation11 + $0xe0] sm:$0xff]
    %v3145 = vld [vmem:[#allocation11 + $0xe8] sm:$0xff]
    %v3146 = vld [vmem:[#allocation11 + $0xf0] sm:$0xff]
    %v3147 = vld [vmem:[#allocation11 + $0xf8] sm:$0xff]
    %v3180 = vunpack.c.l.b16 %v3116
    %v3181 = vunpack.c.h.b16 %v3116
    %v3182 = vunpack.c.l.b16 %v3117
    %v3183 = vunpack.c.h.b16 %v3117
    %v3184 = vunpack.c.l.b16 %v3118
    %v3185 = vunpack.c.h.b16 %v3118
    %v3186 = vunpack.c.l.b16 %v3119
    %v3187 = vunpack.c.h.b16 %v3119
    %v3188 = vunpack.c.l.b16 %v3120
    %v3189 = vunpack.c.h.b16 %v3120
    %v3190 = vunpack.c.l.b16 %v3121
    %v3191 = vunpack.c.h.b16 %v3121
    %v3192 = vunpack.c.l.b16 %v3122
    %v3193 = vunpack.c.h.b16 %v3122
    %v3194 = vunpack.c.l.b16 %v3123
    %v3195 = vunpack.c.h.b16 %v3123
    %v3196 = vunpack.c.l.b16 %v3124
    %v3197 = vunpack.c.h.b16 %v3124
    %v3198 = vunpack.c.l.b16 %v3125
    %v3199 = vunpack.c.h.b16 %v3125
    %v3200 = vunpack.c.l.b16 %v3126
    %v3201 = vunpack.c.h.b16 %v3126
    %v3202 = vunpack.c.l.b16 %v3127
    %v3203 = vunpack.c.h.b16 %v3127
    %v3204 = vunpack.c.l.b16 %v3128
    %v3205 = vunpack.c.h.b16 %v3128
    %v3206 = vunpack.c.l.b16 %v3129
    %v3207 = vunpack.c.h.b16 %v3129
    %v3208 = vunpack.c.l.b16 %v3130
    %v3209 = vunpack.c.h.b16 %v3130
    %v3210 = vunpack.c.l.b16 %v3131
    %v3211 = vunpack.c.h.b16 %v3131
    %v3212 = vunpack.c.l.b16 %v3132
    %v3213 = vunpack.c.h.b16 %v3132
    %v3214 = vunpack.c.l.b16 %v3133
    %v3215 = vunpack.c.h.b16 %v3133
    %v3216 = vunpack.c.l.b16 %v3134
    %v3217 = vunpack.c.h.b16 %v3134
    %v3218 = vunpack.c.l.b16 %v3135
    %v3219 = vunpack.c.h.b16 %v3135
    %v3220 = vunpack.c.l.b16 %v3136
    %v3221 = vunpack.c.h.b16 %v3136
    %v3222 = vunpack.c.l.b16 %v3137
    %v3223 = vunpack.c.h.b16 %v3137
    %v3224 = vunpack.c.l.b16 %v3138
    %v3225 = vunpack.c.h.b16 %v3138
    %v3226 = vunpack.c.l.b16 %v3139
    %v3227 = vunpack.c.h.b16 %v3139
    %v3228 = vunpack.c.l.b16 %v3140
    %v3229 = vunpack.c.h.b16 %v3140
    %v3230 = vunpack.c.l.b16 %v3141
    %v3231 = vunpack.c.h.b16 %v3141
    %v3232 = vunpack.c.l.b16 %v3142
    %v3233 = vunpack.c.h.b16 %v3142
    %v3234 = vunpack.c.l.b16 %v3143
    %v3235 = vunpack.c.h.b16 %v3143
    %v3236 = vunpack.c.l.b16 %v3144
    %v3237 = vunpack.c.h.b16 %v3144
    %v3238 = vunpack.c.l.b16 %v3145
    %v3239 = vunpack.c.h.b16 %v3145
    %v3240 = vunpack.c.l.b16 %v3146
    %v3241 = vunpack.c.h.b16 %v3146
    %v3242 = vunpack.c.l.b16 %v3147
    %v3243 = vunpack.c.h.b16 %v3147
    %v3244 = vpack.c.b16 %v3184, %v3180
    %v3245 = vpack.c.b16 %v3185, %v3181
    %v3246 = vpack.c.b16 %v3186, %v3182
    %v3247 = vpack.c.b16 %v3187, %v3183
    %v3248 = vpack.c.b16 %v3192, %v3188
    %v3249 = vpack.c.b16 %v3193, %v3189
    %v3250 = vpack.c.b16 %v3194, %v3190
    %v3251 = vpack.c.b16 %v3195, %v3191
    %v3252 = vpack.c.b16 %v3200, %v3196
    %v3253 = vpack.c.b16 %v3201, %v3197
    %v3254 = vpack.c.b16 %v3202, %v3198
    %v3255 = vpack.c.b16 %v3203, %v3199
    %v3256 = vpack.c.b16 %v3208, %v3204
    %v3257 = vpack.c.b16 %v3209, %v3205
    %v3258 = vpack.c.b16 %v3210, %v3206
    %v3259 = vpack.c.b16 %v3211, %v3207
    %v3260 = vpack.c.b16 %v3216, %v3212
    %v3261 = vpack.c.b16 %v3217, %v3213
    %v3262 = vpack.c.b16 %v3218, %v3214
    %v3263 = vpack.c.b16 %v3219, %v3215
    %v3264 = vpack.c.b16 %v3224, %v3220
    %v3265 = vpack.c.b16 %v3225, %v3221
    %v3266 = vpack.c.b16 %v3226, %v3222
    %v3267 = vpack.c.b16 %v3227, %v3223
    %v3268 = vpack.c.b16 %v3232, %v3228
    %v3269 = vpack.c.b16 %v3233, %v3229
    %v3270 = vpack.c.b16 %v3234, %v3230
    %v3271 = vpack.c.b16 %v3235, %v3231
    %v3272 = vpack.c.b16 %v3240, %v3236
    %v3273 = vpack.c.b16 %v3241, %v3237
    %v3274 = vpack.c.b16 %v3242, %v3238
    %v3275 = vpack.c.b16 %v3243, %v3239
    %3308 = vmatpush.bf16.msra.mxu0 %v3272
    %3309 = vmatpush.bf16.msra.mxu0 %v3268
    %3310 = vmatpush.bf16.msra.mxu0 %v3264
    %3311 = vmatpush.bf16.msra.mxu0 %v3260
    %3312 = vmatpush.bf16.msra.mxu0 %v3256
    %3313 = vmatpush.bf16.msra.mxu0 %v3252
    %3314 = vmatpush.bf16.msra.mxu0 %v3248
    %3315 = vmatpush.bf16.msra.mxu0 %v3244
    %3316 = vmatmul.bf16.gmra.mxu0 %v3115
    %v3317 = vpop.f32.mrf.mxu0
    %v3318 = vadd.f32 0.0, %v3317
    %v3319 = vpop.f32.mrf.mxu0
    %3320 = vdwg.mxu0
    %3321 = vmatpush.bf16.msra.mxu0 %v3273
    %3322 = vmatpush.bf16.msra.mxu0 %v3269
    %3323 = vmatpush.bf16.msra.mxu0 %v3265
    %3324 = vmatpush.bf16.msra.mxu0 %v3261
    %3325 = vmatpush.bf16.msra.mxu0 %v3257
    %3326 = vmatpush.bf16.msra.mxu0 %v3253
    %3327 = vmatpush.bf16.msra.mxu0 %v3249
    %3328 = vmatpush.bf16.msra.mxu0 %v3245
    %3329 = vmatmul.bf16.gmra.mxu0 %v3115
    %v3330 = vpop.f32.mrf.mxu0
    %v3331 = vadd.f32 0.0, %v3330
    %v3332 = vpop.f32.mrf.mxu0
    %3333 = vdwg.mxu0
    %3334 = vmatpush.bf16.msra.mxu0 %v3274
    %3335 = vmatpush.bf16.msra.mxu0 %v3270
    %3336 = vmatpush.bf16.msra.mxu0 %v3266
    %3337 = vmatpush.bf16.msra.mxu0 %v3262
    %3338 = vmatpush.bf16.msra.mxu0 %v3258
    %3339 = vmatpush.bf16.msra.mxu0 %v3254
    %3340 = vmatpush.bf16.msra.mxu0 %v3250
    %3341 = vmatpush.bf16.msra.mxu0 %v3246
    %3342 = vmatmul.bf16.gmra.mxu0 %v3115
    %v3343 = vpop.f32.mrf.mxu0
    %v3344 = vadd.f32 0.0, %v3343
    %v3345 = vpop.f32.mrf.mxu0
    %3346 = vdwg.mxu0
    %3347 = vmatpush.bf16.msra.mxu0 %v3275
    %3348 = vmatpush.bf16.msra.mxu0 %v3271
    %3349 = vmatpush.bf16.msra.mxu0 %v3267
    %3350 = vmatpush.bf16.msra.mxu0 %v3263
    %3351 = vmatpush.bf16.msra.mxu0 %v3259
    %3352 = vmatpush.bf16.msra.mxu0 %v3255
    %3353 = vmatpush.bf16.msra.mxu0 %v3251
    %3354 = vmatpush.bf16.msra.mxu0 %v3247
    %3355 = vmatmul.bf16.gmra.mxu0 %v3115
    %v3356 = vpop.f32.mrf.mxu0
    %v3357 = vadd.f32 0.0, %v3356
    %v3358 = vpop.f32.mrf.mxu0
    %3359 = vdwg.mxu0
    %v3360 = vadd.f32 %v3110, %v3318
    %v3361 = vadd.f32 %v3111, %v3331
    %v3362 = vadd.f32 %v3112, %v3344
    %v3363 = vadd.f32 %v3113, %v3357
    %v3364 = vxor.u32 %v3360, 2147483648
    %v3365 = vxor.u32 %v3361, 2147483648
    %v3366 = vxor.u32 %v3362, 2147483648
    %v3367 = vmul.f32 %v3364, 1.442695
    %v3368 = vpow.pop %v3367
    %v3369 = vmul.f32 %v3365, 1.442695
    %v3370 = vpow.pop %v3369
    %v3371 = vmul.f32 %v3366, 1.442695
    %v3372 = vpow.pop %v3371
    %v3373 = vadd.f32 %v3368, 1.0
    %v3374 = vadd.f32 %v3370, 1.0
    %v3375 = vadd.f32 %v3372, 1.0
    %v3376 = vrcp.pop %v3373
    %v3377 = vmul.f32 %v3373, %v3376
    %v3378 = vsub.f32 1.0, %v3377
    %v3379 = vmul.f32 %v3376, %v3378
    %v3380 = vadd.f32 %v3376, %v3379
    %vm3381 = vweird.f32 %v3373
    %vm3382 = vweird.f32 %v3376
    %vm3383 = vmor %vm3381, %vm3382
    %v3384 = vsel %vm3383, %v3376, %v3380
    %v3385 = vand.u32 2147483647, %v3373
    %vm3386 = vcmp.eq.f32.partialorder %v3385, 8.507059e+37
    %v3387 = vand.u32 %v3373, 2147483648
    %v3388 = vor.u32 1.1754944e-38, %v3387
    %v3389 = vsel %vm3386, %v3388, %v3384
    %v3390 = vmul.f32 1.0, %v3389
    %v3391 = vrcp.pop %v3374
    %v3392 = vmul.f32 %v3374, %v3391
    %v3393 = vsub.f32 1.0, %v3392
    %v3394 = vmul.f32 %v3391, %v3393
    %v3395 = vadd.f32 %v3391, %v3394
    %vm3396 = vweird.f32 %v3374
    %vm3397 = vweird.f32 %v3391
    %vm3398 = vmor %vm3396, %vm3397
    %v3399 = vsel %vm3398, %v3391, %v3395
    %v3400 = vand.u32 2147483647, %v3374
    %vm3401 = vcmp.eq.f32.partialorder %v3400, 8.507059e+37
    %v3402 = vand.u32 %v3374, 2147483648
    %v3403 = vor.u32 1.1754944e-38, %v3402
    %v3404 = vsel %vm3401, %v3403, %v3399
    %v3405 = vmul.f32 1.0, %v3404
    %v3406 = vrcp.pop %v3375
    %v3407 = vmul.f32 %v3375, %v3406
    %v3408 = vsub.f32 1.0, %v3407
    %v3409 = vmul.f32 %v3406, %v3408
    %v3410 = vadd.f32 %v3406, %v3409
    %vm3411 = vweird.f32 %v3375
    %vm3412 = vweird.f32 %v3406
    %vm3413 = vmor %vm3411, %vm3412
    %v3414 = vsel %vm3413, %v3406, %v3410
    %v3415 = vand.u32 2147483647, %v3375
    %vm3416 = vcmp.eq.f32.partialorder %v3415, 8.507059e+37
    %v3417 = vand.u32 %v3375, 2147483648
    %v3418 = vor.u32 1.1754944e-38, %v3417
    %v3419 = vsel %vm3416, %v3418, %v3414
    %v3420 = vmul.f32 1.0, %v3419
    %v3421 = vtanh.pop %v3363
    %v3422 = vld [vmem:[#allocation4] sm:$0xff]
    %v3423 = vmul.f32 %v3405, %v3422
    %v3424 = vmul.f32 %v3390, %v3421
    %v3425 = vadd.f32 %v3423, %v3424
    %v3426 = vtanh.pop %v3425
    %v3427 = vmul.f32 %v3420, %v3426
    %3428 = vst [vmem:[#allocation4] sm:$0xff] %v3425
    %3429 = vst [vmem:[#allocation3] sm:$0xff] %v3427
    %s3430 = scalar_lea.vmem [#allocation13], 56
    %3431 = vst [vmem:[%s3430] sm:$0xff] %v3427
    // Predicated region
    $region38: #{tpu_custom_call.1} parent=1 // pred_check
      %p3432 = pneg %p84
    $region39: #{tpu_custom_call.1} parent=1 // pred_check_branch
      %3434 = sbr.rel (%p3432) target = $region41
    $region40: #{tpu_custom_call.1} parent=1 // pred_region
      %v3435 = vld [vmem:[#allocation3] sm:$0xff]
      %3436 = vst [vmem:[#allocation14] sm:$0xff] %v3435
      %v3437 = vld [vmem:[#allocation4] sm:$0xff]
      %3438 = vst [vmem:[#allocation16] sm:$0xff] %v3437
    $region41: #{tpu_custom_call.1} parent=1 // pred_fallthru
      _
    // Predicated region
    $region42: #{tpu_custom_call.1} parent=1 // pred_check
      _
    $region43: #{tpu_custom_call.1} parent=1 // pred_check_branch
      %3440 = sbr.rel (0) target = $region45
    $region44: #{tpu_custom_call.1} parent=1 // pred_region
      %3442 = vsyncadd [#allocation7], 0
      %s3443 = sshll.u32 [#allocation13], 4
      %s3444 = int_to_ptr.vmem [resolvable:$true] %s3443
      %s3445 = sshll.u32 %s4, 4
      %s3446 = int_to_ptr.hbm [resolvable:$true] %s3445
      %3451 = dma.vmem_to_hbm [thread:$0]  %s3444, 1024, %s3446, [#allocation7], 128, 128, 8
    $region45: #{tpu_custom_call.1} parent=1 // pred_fallthru
      _
    // Predicated region
    $region46: #{tpu_custom_call.1} parent=1 // pred_check
      _
    $region47: #{tpu_custom_call.1} parent=1 // pred_check_branch
      %3453 = sbr.rel (0) target = $region49
    $region48: #{tpu_custom_call.1} parent=1 // pred_region
      %3455 = vsyncadd [#allocation15], 0
      %s3457 = sshll.u32 [#allocation14], 4
      %s3458 = int_to_ptr.vmem [resolvable:$true] %s3457
      %s3459 = sshll.u32 %s5, 4
      %s3460 = int_to_ptr.hbm [resolvable:$true] %s3459
      %3462 = dma.vmem_to_hbm [thread:$0]  %s3458, 128, %s3460, [#allocation15]
    $region49: #{tpu_custom_call.1} parent=1 // pred_fallthru
      _
    // Predicated region
    $region50: #{tpu_custom_call.1} parent=1 // pred_check
      _
    $region51: #{tpu_custom_call.1} parent=1 // pred_check_branch
      %3464 = sbr.rel (0) target = $region53
    $region52: #{tpu_custom_call.1} parent=1 // pred_region
      %3466 = vsyncadd [#allocation15], 0
      %s3468 = sshll.u32 [#allocation16], 4
      %s3469 = int_to_ptr.vmem [resolvable:$true] %s3468
      %s3470 = sshll.u32 %s6, 4
      %s3471 = int_to_ptr.hbm [resolvable:$true] %s3470
      %3473 = dma.vmem_to_hbm [thread:$0]  %s3469, 128, %s3471, [#allocation15]
    $region53: #{tpu_custom_call.1} parent=1 // pred_fallthru
      _
    // Predicated region
    $region54: #{tpu_custom_call.1} parent=1 // pred_check
      _
    $region55: #{tpu_custom_call.1} parent=1 // pred_check_branch
      %3475 = sbr.rel (0) target = $region57
    $region56: #{tpu_custom_call.1} parent=1 // pred_region
      %3477 = dma.done [#allocation7], 1024
    $region57: #{tpu_custom_call.1} parent=1 // pred_fallthru
      _
    // Predicated region
    $region58: #{tpu_custom_call.1} parent=1 // pred_check
      _
    $region59: #{tpu_custom_call.1} parent=1 // pred_check_branch
      %3479 = sbr.rel (0) target = $region61
    $region60: #{tpu_custom_call.1} parent=1 // pred_region
      %3481 = dma.done [#allocation15], 128
    $region61: #{tpu_custom_call.1} parent=1 // pred_fallthru
      _
    // Predicated region
    $region62: #{tpu_custom_call.1} parent=1 // pred_check
      _
    $region63: #{tpu_custom_call.1} parent=1 // pred_check_branch
      %3483 = sbr.rel (0) target = $region65
    $region64: #{tpu_custom_call.1} parent=1 // pred_region
      %3485 = dma.done [#allocation15], 128
    $region65: #{tpu_custom_call.1} parent=1 // pred_fallthru
      _
    %3486 = vsyncpa [#allocation6], 1
    %3487 = vsyncpa [#allocation9], 1
    %3488 = vsyncpa [#allocation12], 1
    %3489 = vsyncpa [#allocation7], 1
    %3490 = vsyncpa [#allocation15], 1

</llo_original>
